<compile_context>
chip_gen: v7x
topology: tpu7x:2x2x1
jax: 0.10.0
libtpu: 0.0.40
codegen_flags: <defaults>
</compile_context>

<pallas_src>
import functools

import numpy as np
import jax
import jax.numpy as jnp
from jax.experimental import pallas as pl
from jax.experimental.pallas import tpu as pltpu


def attention_conv_kernel(q_ref, k_ref, pos_ref, mask_ref,
                          wq_ref, wkv_ref,
                          w1_ref, b1_ref, w2_ref, b2_ref, wo_ref, bo_ref,
                          o_ref, *, H, W):
    C, L = q_ref.shape
    HW = H * W
    NB = L // HW                      # batch segments fused into this block

    q = q_ref[...]                    # (C, L) f32
    k = k_ref[...]
    pos = pos_ref[...]

    # Hoisted 3x3 zero-pad validity masks (0/1 f32), one per tap, broadcast
    # once over channels and reused by all three 3x3 convolutions.
    mask_rows = mask_ref[...]                                   # (9, L) f32
    tap_masks = [jnp.broadcast_to(mask_rows[t:t + 1], (C, L)) for t in range(9)]

    # 1x1 convolutions == channel-mixing matmuls (bf16 operands, f32 acc).
    # wkv = [wk ; wv @ wk]: one matmul on k yields both k_fc(k) and v_fc(k_fc(k)).
    qp = jnp.dot(wq_ref[...], q.astype(jnp.bfloat16),
                 preferred_element_type=jnp.float32)            # (C, L)
    kv = jnp.dot(wkv_ref[...], k.astype(jnp.bfloat16),
                 preferred_element_type=jnp.float32)            # (2C, L)
    kp = kv[:C]
    v = kv[C:]

    def conv3x3(x, w_ref, b_ref):
        # x: (C, L) f32;  w_ref: (C, 9C) bf16, tap-major (t = ky*3 + kx).
        cols = []
        for t in range(9):
            oy = t // 3 - 1
            ox = t % 3 - 1
            s = oy * W + ox                 # flattened-index shift of this tap
            sh = x if s == 0 else pltpu.roll(x, shift=(-s) % L, axis=1)
            cols.append(sh * tap_masks[t])  # zero lanes that cross image edges
        stacked = jnp.concatenate(cols, axis=0).astype(jnp.bfloat16)   # (9C, L)
        y = jnp.dot(w_ref[...], stacked, preferred_element_type=jnp.float32)
        return y + b_ref[...]               # bias (C, 1) broadcasts over lanes

    attn = kp - qp + pos
    attn = conv3x3(attn, w1_ref, b1_ref)
    attn = jnp.maximum(attn, 0.0)
    attn = conv3x3(attn, w2_ref, b2_ref)

    # softmax over each image's flattened spatial dim (per batch segment)
    segs = []
    for b in range(NB):
        seg = attn[:, b * HW:(b + 1) * HW]
        m = jnp.max(seg, axis=-1, keepdims=True)
        e = jnp.exp(seg - m)
        ssum = jnp.sum(e, axis=-1, keepdims=True)
        segs.append(e * pl.reciprocal(ssum, approx=True))
    attn = segs[0] if NB == 1 else jnp.concatenate(segs, axis=1)

    # TODO(synk): nn.Dropout is eval-mode identity (torch RNG dropout not reproduced).
    x = (v + pos) * attn
    out = conv3x3(x, wo_ref, bo_ref)
    o_ref[...] = out.astype(o_ref.dtype)


def _default_num_batch_blocks(n):
    # v7x has 2 TensorCores per chip -> keep the per-batch parallel grid so
    # each core takes one batch element.  Single-TC v5e/v6e -> fuse all batch
    # elements into one grid step (wider lanes, no per-step overhead).
    try:
        kind = jax.devices()[0].device_kind.lower()
    except Exception:
        kind = ""
    if "v7" in kind or "7x" in kind:
        return n
    return 1


def attention_conv_forward(q, k, pos, params, num_batch_blocks=None):
    n, c, H, W = q.shape
    HW = H * W
    L = n * HW
    if num_batch_blocks is None:
        num_batch_blocks = _default_num_batch_blocks(n)
    assert n % num_batch_blocks == 0
    Lb = L // num_batch_blocks
    assert Lb % HW == 0

    def cm(x):  # NCHW -> channel-major (c, n*HW), f32
        return x.reshape(n, c, HW).transpose(1, 0, 2).reshape(c, L).astype(jnp.float32)

    q2, k2, p2 = cm(q), cm(k), cm(pos)

    # --- all weight layout work done host/XLA-side; kernel body is pure compute ---
    wq = params["wq"][:, :, 0, 0].astype(jnp.bfloat16)                       # (c, c)
    wk1 = params["wk"][:, :, 0, 0].astype(jnp.float32)
    wv1 = params["wv"][:, :, 0, 0].astype(jnp.float32)
    wkv = jnp.concatenate([wk1, wv1 @ wk1], axis=0).astype(jnp.bfloat16)     # (2c, c)

    def im2col_w(w):  # (o, i, 3, 3) -> (o, 9*i), tap-major t = ky*3 + kx
        return jnp.transpose(w, (0, 2, 3, 1)).reshape(c, 9 * c).astype(jnp.bfloat16)

    w1, b1 = im2col_w(params["w1"]), params["b1"].reshape(c, 1).astype(jnp.float32)
    w2, b2 = im2col_w(params["w2"]), params["b2"].reshape(c, 1).astype(jnp.float32)
    wo, bo = im2col_w(params["wo"]), params["bo"].reshape(c, 1).astype(jnp.float32)

    # 3x3 zero-pad validity masks, one (0/1) row per tap, precomputed on host.
    ll = np.arange(L) % HW
    yy, xx = ll // W, ll % W
    rows = []
    for t in range(9):
        oy, ox = t // 3 - 1, t % 3 - 1
        rows.append((yy + oy >= 0) & (yy + oy < H) & (xx + ox >= 0) & (xx + ox < W))
    mask9 = jnp.asarray(np.stack(rows).astype(np.float32))                   # (9, L)

    act_spec = pl.BlockSpec((c, Lb), lambda b: (0, b))
    mask_spec = pl.BlockSpec((9, Lb), lambda b: (0, b))

    def wspec(shape):
        return pl.BlockSpec(shape, lambda b: (0, 0))

    out = pl.pallas_call(
        functools.partial(attention_conv_kernel, H=H, W=W),
        out_shape=jax.ShapeDtypeStruct((c, L), jnp.float32),
        grid=(num_batch_blocks,),
        in_specs=[act_spec, act_spec, act_spec, mask_spec,
                  wspec((c, c)), wspec((2 * c, c)),
                  wspec((c, 9 * c)), wspec((c, 1)),
                  wspec((c, 9 * c)), wspec((c, 1)),
                  wspec((c, 9 * c)), wspec((c, 1))],
        out_specs=act_spec,
        compiler_params=pltpu.CompilerParams(dimension_semantics=("parallel",)),
    )(q2, k2, p2, mask9, wq, wkv, w1, b1, w2, b2, wo, bo)

    return out.reshape(c, n, HW).transpose(1, 0, 2).reshape(n, c, H, W)


def attention_conv_reference(q, k, pos, params):
    """Pure-JAX f32 reference mirroring the PyTorch forward (eval mode)."""
    def conv1x1(x, w):
        return jnp.einsum('oi,nihw->nohw', w[:, :, 0, 0], x)

    def conv3x3(x, w, b):
        y = jax.lax.conv_general_dilated(
            x, w, window_strides=(1, 1), padding=((1, 1), (1, 1)),
            dimension_numbers=('NCHW', 'OIHW', 'NCHW'))
        return y + b[None, :, None, None]

    qp = conv1x1(q, params["wq"])
    kp = conv1x1(k, params["wk"])
    v = conv1x1(kp, params["wv"])
    attn = kp - qp + pos
    attn = conv3x3(attn, params["w1"], params["b1"])
    attn = jnp.maximum(attn, 0.0)
    attn = conv3x3(attn, params["w2"], params["b2"])
    n, c, h, w = attn.shape
    attn = jax.nn.softmax(attn.reshape(n, c, h * w), axis=-1).reshape(n, c, h, w)
    x = (v + pos) * attn
    return conv3x3(x, params["wo"], params["bo"])


if __name__ == "__main__":
    key = jax.random.PRNGKey(0)
    ks = jax.random.split(key, 12)
    n, dim, H, W = 2, 32, 16, 16            # dp_rate irrelevant in eval mode
    wscale = 0.05
    params = {
        "wq": wscale * jax.random.normal(ks[0], (dim, dim, 1, 1), jnp.float32),
        "wk": wscale * jax.random.normal(ks[1], (dim, dim, 1, 1), jnp.float32),
        "wv": wscale * jax.random.normal(ks[2], (dim, dim, 1, 1), jnp.float32),
        "w1": wscale * jax.random.normal(ks[3], (dim, dim, 3, 3), jnp.float32),
        "b1": wscale * jax.random.normal(ks[4], (dim,), jnp.float32),
        "w2": wscale * jax.random.normal(ks[5], (dim, dim, 3, 3), jnp.float32),
        "b2": wscale * jax.random.normal(ks[6], (dim,), jnp.float32),
        "wo": wscale * jax.random.normal(ks[7], (dim, dim, 3, 3), jnp.float32),
        "bo": wscale * jax.random.normal(ks[8], (dim,), jnp.float32),
    }
    q = jax.random.normal(ks[9], (n, dim, H, W), jnp.float32)
    k = jax.random.normal(ks[10], (n, dim, H, W), jnp.float32)
    pos = jax.random.normal(ks[11], (n, dim, H, W), jnp.float32)

    out = attention_conv_forward(q, k, pos, params)
    out = jax.block_until_ready(out)

    ref = attention_conv_reference(q, k, pos, params)
    np.testing.assert_allclose(np.asarray(out), np.asarray(ref),
                               rtol=3e-2, atol=2e-3)
    print("KERNEL_OK")
</pallas_src>

<mosaic_0001>
module attributes {stable_mosaic.version = 11 : i64} {
  func.func @attention_conv_kernel(%arg0: i32, %arg1: memref<32x512xf32, #tpu.memory_space<vmem>>, %arg2: memref<32x512xf32, #tpu.memory_space<vmem>>, %arg3: memref<32x512xf32, #tpu.memory_space<vmem>>, %arg4: memref<9x512xf32, #tpu.memory_space<vmem>>, %arg5: memref<32x32xbf16, #tpu.memory_space<vmem>>, %arg6: memref<64x32xbf16, #tpu.memory_space<vmem>>, %arg7: memref<32x288xbf16, #tpu.memory_space<vmem>>, %arg8: memref<32x1xf32, #tpu.memory_space<vmem>>, %arg9: memref<32x288xbf16, #tpu.memory_space<vmem>>, %arg10: memref<32x1xf32, #tpu.memory_space<vmem>>, %arg11: memref<32x288xbf16, #tpu.memory_space<vmem>>, %arg12: memref<32x1xf32, #tpu.memory_space<vmem>>, %arg13: memref<32x512xf32, #tpu.memory_space<vmem>>) attributes {dimension_semantics = [#tpu.dimension_semantics<parallel>], iteration_bounds = array<i64: 1>, scalar_prefetch = 0 : i64, scratch_operands = 0 : i64, tpu.core_type = #tpu.core_type<tc>, window_params = [{transform_indices = @transform_0, window_bounds = array<i64: 32, 512>}, {transform_indices = @transform_1, window_bounds = array<i64: 32, 512>}, {transform_indices = @transform_2, window_bounds = array<i64: 32, 512>}, {transform_indices = @transform_3, window_bounds = array<i64: 9, 512>}, {pipeline_mode = #tpu.pipeline_mode<synchronous>, transform_indices = @transform_4, window_bounds = array<i64: 32, 32>}, {pipeline_mode = #tpu.pipeline_mode<synchronous>, transform_indices = @transform_5, window_bounds = array<i64: 64, 32>}, {pipeline_mode = #tpu.pipeline_mode<synchronous>, transform_indices = @transform_6, window_bounds = array<i64: 32, 288>}, {pipeline_mode = #tpu.pipeline_mode<synchronous>, transform_indices = @transform_7, window_bounds = array<i64: 32, 1>}, {pipeline_mode = #tpu.pipeline_mode<synchronous>, transform_indices = @transform_8, window_bounds = array<i64: 32, 288>}, {pipeline_mode = #tpu.pipeline_mode<synchronous>, transform_indices = @transform_9, window_bounds = array<i64: 32, 1>}, {pipeline_mode = #tpu.pipeline_mode<synchronous>, transform_indices = @transform_10, window_bounds = array<i64: 32, 288>}, {pipeline_mode = #tpu.pipeline_mode<synchronous>, transform_indices = @transform_11, window_bounds = array<i64: 32, 1>}, {transform_indices = @transform_12, window_bounds = array<i64: 32, 512>}]} {
    %c0 = arith.constant 0 : index
    %c0_0 = arith.constant 0 : index
    %0 = vector.load %arg1[%c0, %c0_0] : memref<32x512xf32, #tpu.memory_space<vmem>>, vector<32x512xf32>
    %c0_1 = arith.constant 0 : index
    %c0_2 = arith.constant 0 : index
    %1 = vector.load %arg2[%c0_1, %c0_2] : memref<32x512xf32, #tpu.memory_space<vmem>>, vector<32x512xf32>
    %c0_3 = arith.constant 0 : index
    %c0_4 = arith.constant 0 : index
    %2 = vector.load %arg3[%c0_3, %c0_4] : memref<32x512xf32, #tpu.memory_space<vmem>>, vector<32x512xf32>
    %c0_5 = arith.constant 0 : index
    %c0_6 = arith.constant 0 : index
    %3 = vector.load %arg4[%c0_5, %c0_6] : memref<9x512xf32, #tpu.memory_space<vmem>>, vector<9x512xf32>
    %4 = vector.extract_strided_slice %3 {offsets = [0, 0], sizes = [1, 512], strides = [1, 1]} : vector<9x512xf32> to vector<1x512xf32>
    %5 = vector.shape_cast %4 : vector<1x512xf32> to vector<1x512xf32>
    %6 = vector.broadcast %5 : vector<1x512xf32> to vector<32x512xf32>
    %7 = vector.extract_strided_slice %3 {offsets = [1, 0], sizes = [1, 512], strides = [1, 1]} : vector<9x512xf32> to vector<1x512xf32>
    %8 = vector.shape_cast %7 : vector<1x512xf32> to vector<1x512xf32>
    %9 = vector.broadcast %8 : vector<1x512xf32> to vector<32x512xf32>
    %10 = vector.extract_strided_slice %3 {offsets = [2, 0], sizes = [1, 512], strides = [1, 1]} : vector<9x512xf32> to vector<1x512xf32>
    %11 = vector.shape_cast %10 : vector<1x512xf32> to vector<1x512xf32>
    %12 = vector.broadcast %11 : vector<1x512xf32> to vector<32x512xf32>
    %13 = vector.extract_strided_slice %3 {offsets = [3, 0], sizes = [1, 512], strides = [1, 1]} : vector<9x512xf32> to vector<1x512xf32>
    %14 = vector.shape_cast %13 : vector<1x512xf32> to vector<1x512xf32>
    %15 = vector.broadcast %14 : vector<1x512xf32> to vector<32x512xf32>
    %16 = vector.extract_strided_slice %3 {offsets = [4, 0], sizes = [1, 512], strides = [1, 1]} : vector<9x512xf32> to vector<1x512xf32>
    %17 = vector.shape_cast %16 : vector<1x512xf32> to vector<1x512xf32>
    %18 = vector.broadcast %17 : vector<1x512xf32> to vector<32x512xf32>
    %19 = vector.extract_strided_slice %3 {offsets = [5, 0], sizes = [1, 512], strides = [1, 1]} : vector<9x512xf32> to vector<1x512xf32>
    %20 = vector.shape_cast %19 : vector<1x512xf32> to vector<1x512xf32>
    %21 = vector.broadcast %20 : vector<1x512xf32> to vector<32x512xf32>
    %22 = vector.extract_strided_slice %3 {offsets = [6, 0], sizes = [1, 512], strides = [1, 1]} : vector<9x512xf32> to vector<1x512xf32>
    %23 = vector.shape_cast %22 : vector<1x512xf32> to vector<1x512xf32>
    %24 = vector.broadcast %23 : vector<1x512xf32> to vector<32x512xf32>
    %25 = vector.extract_strided_slice %3 {offsets = [7, 0], sizes = [1, 512], strides = [1, 1]} : vector<9x512xf32> to vector<1x512xf32>
    %26 = vector.shape_cast %25 : vector<1x512xf32> to vector<1x512xf32>
    %27 = vector.broadcast %26 : vector<1x512xf32> to vector<32x512xf32>
    %28 = vector.extract_strided_slice %3 {offsets = [8, 0], sizes = [1, 512], strides = [1, 1]} : vector<9x512xf32> to vector<1x512xf32>
    %29 = vector.shape_cast %28 : vector<1x512xf32> to vector<1x512xf32>
    %30 = vector.broadcast %29 : vector<1x512xf32> to vector<32x512xf32>
    %c0_7 = arith.constant 0 : index
    %c0_8 = arith.constant 0 : index
    %31 = vector.load %arg5[%c0_7, %c0_8] : memref<32x32xbf16, #tpu.memory_space<vmem>>, vector<32x32xbf16>
    %32 = arith.truncf %0 : vector<32x512xf32> to vector<32x512xbf16>
    %cst = arith.constant dense<0.000000e+00> : vector<32x512xf32>
    %33 = tpu.matmul %31, %32, %cst {dimension_numbers = #tpu.dot_dimension_numbers<[1], [0], [0], [1], [0, 0, 1, 1], [], []>} : vector<32x32xbf16>, vector<32x512xbf16>, vector<32x512xf32> -> vector<32x512xf32>
    %c0_9 = arith.constant 0 : index
    %c0_10 = arith.constant 0 : index
    %34 = vector.load %arg6[%c0_9, %c0_10] : memref<64x32xbf16, #tpu.memory_space<vmem>>, vector<64x32xbf16>
    %35 = arith.truncf %1 : vector<32x512xf32> to vector<32x512xbf16>
    %cst_11 = arith.constant dense<0.000000e+00> : vector<64x512xf32>
    %36 = tpu.matmul %34, %35, %cst_11 {dimension_numbers = #tpu.dot_dimension_numbers<[1], [0], [0], [1], [0, 0, 1, 1], [], []>} : vector<64x32xbf16>, vector<32x512xbf16>, vector<64x512xf32> -> vector<64x512xf32>
    %37 = vector.extract_strided_slice %36 {offsets = [0, 0], sizes = [32, 512], strides = [1, 1]} : vector<64x512xf32> to vector<32x512xf32>
    %38 = vector.extract_strided_slice %36 {offsets = [32, 0], sizes = [32, 512], strides = [1, 1]} : vector<64x512xf32> to vector<32x512xf32>
    %39 = arith.subf %37, %33 : vector<32x512xf32>
    %40 = arith.addf %39, %2 : vector<32x512xf32>
    %c17_i32 = arith.constant 17 : i32
    %41 = tpu.dynamic_rotate %40 by %c17_i32 dim 1 : vector<32x512xf32>, i32 -> vector<32x512xf32>
    %42 = arith.mulf %41, %6 : vector<32x512xf32>
    %c16_i32 = arith.constant 16 : i32
    %43 = tpu.dynamic_rotate %40 by %c16_i32 dim 1 : vector<32x512xf32>, i32 -> vector<32x512xf32>
    %44 = arith.mulf %43, %9 : vector<32x512xf32>
    %c15_i32 = arith.constant 15 : i32
    %45 = tpu.dynamic_rotate %40 by %c15_i32 dim 1 : vector<32x512xf32>, i32 -> vector<32x512xf32>
    %46 = arith.mulf %45, %12 : vector<32x512xf32>
    %c1_i32 = arith.constant 1 : i32
    %47 = tpu.dynamic_rotate %40 by %c1_i32 dim 1 : vector<32x512xf32>, i32 -> vector<32x512xf32>
    %48 = arith.mulf %47, %15 : vector<32x512xf32>
    %49 = arith.mulf %40, %18 : vector<32x512xf32>
    %c511_i32 = arith.constant 511 : i32
    %50 = tpu.dynamic_rotate %40 by %c511_i32 dim 1 : vector<32x512xf32>, i32 -> vector<32x512xf32>
    %51 = arith.mulf %50, %21 : vector<32x512xf32>
    %c497_i32 = arith.constant 497 : i32
    %52 = tpu.dynamic_rotate %40 by %c497_i32 dim 1 : vector<32x512xf32>, i32 -> vector<32x512xf32>
    %53 = arith.mulf %52, %24 : vector<32x512xf32>
    %c496_i32 = arith.constant 496 : i32
    %54 = tpu.dynamic_rotate %40 by %c496_i32 dim 1 : vector<32x512xf32>, i32 -> vector<32x512xf32>
    %55 = arith.mulf %54, %27 : vector<32x512xf32>
    %c495_i32 = arith.constant 495 : i32
    %56 = tpu.dynamic_rotate %40 by %c495_i32 dim 1 : vector<32x512xf32>, i32 -> vector<32x512xf32>
    %57 = arith.mulf %56, %30 : vector<32x512xf32>
    %58 = tpu.concatenate %42, %44, %46, %48, %49, %51, %53, %55, %57 in 0 : vector<32x512xf32>, vector<32x512xf32>, vector<32x512xf32>, vector<32x512xf32>, vector<32x512xf32>, vector<32x512xf32>, vector<32x512xf32>, vector<32x512xf32>, vector<32x512xf32> -> vector<288x512xf32>
    %59 = arith.truncf %58 : vector<288x512xf32> to vector<288x512xbf16>
    %c0_12 = arith.constant 0 : index
    %c0_13 = arith.constant 0 : index
    %60 = vector.load %arg7[%c0_12, %c0_13] : memref<32x288xbf16, #tpu.memory_space<vmem>>, vector<32x288xbf16>
    %cst_14 = arith.constant dense<0.000000e+00> : vector<32x512xf32>
    %61 = tpu.matmul %60, %59, %cst_14 {dimension_numbers = #tpu.dot_dimension_numbers<[1], [0], [0], [1], [0, 0, 1, 1], [], []>} : vector<32x288xbf16>, vector<288x512xbf16>, vector<32x512xf32> -> vector<32x512xf32>
    %c0_15 = arith.constant 0 : index
    %c0_16 = arith.constant 0 : index
    %62 = vector.load %arg8[%c0_15, %c0_16] : memref<32x1xf32, #tpu.memory_space<vmem>>, vector<32x1xf32>
    %63 = vector.broadcast %62 : vector<32x1xf32> to vector<32x512xf32>
    %64 = arith.addf %61, %63 : vector<32x512xf32>
    %cst_17 = arith.constant 0.000000e+00 : f32
    %65 = vector.broadcast %cst_17 : f32 to vector<32x512xf32>
    %66 = arith.maximumf %64, %65 : vector<32x512xf32>
    %c17_i32_18 = arith.constant 17 : i32
    %67 = tpu.dynamic_rotate %66 by %c17_i32_18 dim 1 : vector<32x512xf32>, i32 -> vector<32x512xf32>
    %68 = arith.mulf %67, %6 : vector<32x512xf32>
    %c16_i32_19 = arith.constant 16 : i32
    %69 = tpu.dynamic_rotate %66 by %c16_i32_19 dim 1 : vector<32x512xf32>, i32 -> vector<32x512xf32>
    %70 = arith.mulf %69, %9 : vector<32x512xf32>
    %c15_i32_20 = arith.constant 15 : i32
    %71 = tpu.dynamic_rotate %66 by %c15_i32_20 dim 1 : vector<32x512xf32>, i32 -> vector<32x512xf32>
    %72 = arith.mulf %71, %12 : vector<32x512xf32>
    %c1_i32_21 = arith.constant 1 : i32
    %73 = tpu.dynamic_rotate %66 by %c1_i32_21 dim 1 : vector<32x512xf32>, i32 -> vector<32x512xf32>
    %74 = arith.mulf %73, %15 : vector<32x512xf32>
    %75 = arith.mulf %66, %18 : vector<32x512xf32>
    %c511_i32_22 = arith.constant 511 : i32
    %76 = tpu.dynamic_rotate %66 by %c511_i32_22 dim 1 : vector<32x512xf32>, i32 -> vector<32x512xf32>
    %77 = arith.mulf %76, %21 : vector<32x512xf32>
    %c497_i32_23 = arith.constant 497 : i32
    %78 = tpu.dynamic_rotate %66 by %c497_i32_23 dim 1 : vector<32x512xf32>, i32 -> vector<32x512xf32>
    %79 = arith.mulf %78, %24 : vector<32x512xf32>
    %c496_i32_24 = arith.constant 496 : i32
    %80 = tpu.dynamic_rotate %66 by %c496_i32_24 dim 1 : vector<32x512xf32>, i32 -> vector<32x512xf32>
    %81 = arith.mulf %80, %27 : vector<32x512xf32>
    %c495_i32_25 = arith.constant 495 : i32
    %82 = tpu.dynamic_rotate %66 by %c495_i32_25 dim 1 : vector<32x512xf32>, i32 -> vector<32x512xf32>
    %83 = arith.mulf %82, %30 : vector<32x512xf32>
    %84 = tpu.concatenate %68, %70, %72, %74, %75, %77, %79, %81, %83 in 0 : vector<32x512xf32>, vector<32x512xf32>, vector<32x512xf32>, vector<32x512xf32>, vector<32x512xf32>, vector<32x512xf32>, vector<32x512xf32>, vector<32x512xf32>, vector<32x512xf32> -> vector<288x512xf32>
    %85 = arith.truncf %84 : vector<288x512xf32> to vector<288x512xbf16>
    %c0_26 = arith.constant 0 : index
    %c0_27 = arith.constant 0 : index
    %86 = vector.load %arg9[%c0_26, %c0_27] : memref<32x288xbf16, #tpu.memory_space<vmem>>, vector<32x288xbf16>
    %cst_28 = arith.constant dense<0.000000e+00> : vector<32x512xf32>
    %87 = tpu.matmul %86, %85, %cst_28 {dimension_numbers = #tpu.dot_dimension_numbers<[1], [0], [0], [1], [0, 0, 1, 1], [], []>} : vector<32x288xbf16>, vector<288x512xbf16>, vector<32x512xf32> -> vector<32x512xf32>
    %c0_29 = arith.constant 0 : index
    %c0_30 = arith.constant 0 : index
    %88 = vector.load %arg10[%c0_29, %c0_30] : memref<32x1xf32, #tpu.memory_space<vmem>>, vector<32x1xf32>
    %89 = vector.broadcast %88 : vector<32x1xf32> to vector<32x512xf32>
    %90 = arith.addf %87, %89 : vector<32x512xf32>
    %91 = vector.extract_strided_slice %90 {offsets = [0, 0], sizes = [32, 256], strides = [1, 1]} : vector<32x512xf32> to vector<32x256xf32>
    %cst_31 = arith.constant dense<0xFF800000> : vector<32xf32>
    %92 = vector.multi_reduction <maximumf>, %91, %cst_31 [1] : vector<32x256xf32> to vector<32xf32>
    %93 = vector.shape_cast %92 : vector<32xf32> to vector<32x1xf32>
    %94 = vector.broadcast %93 : vector<32x1xf32> to vector<32x256xf32>
    %95 = arith.subf %91, %94 : vector<32x256xf32>
    %96 = math.exp %95 : vector<32x256xf32>
    %cst_32 = arith.constant dense<0.000000e+00> : vector<32xf32>
    %97 = vector.multi_reduction <add>, %96, %cst_32 [1] : vector<32x256xf32> to vector<32xf32>
    %98 = vector.shape_cast %97 : vector<32xf32> to vector<32x1xf32>
    %99 = tpu.reciprocal %98 {approx = true} : vector<32x1xf32> -> vector<32x1xf32>
    %100 = vector.broadcast %99 : vector<32x1xf32> to vector<32x256xf32>
    %101 = arith.mulf %96, %100 : vector<32x256xf32>
    %102 = vector.extract_strided_slice %90 {offsets = [0, 256], sizes = [32, 256], strides = [1, 1]} : vector<32x512xf32> to vector<32x256xf32>
    %cst_33 = arith.constant dense<0xFF800000> : vector<32xf32>
    %103 = vector.multi_reduction <maximumf>, %102, %cst_33 [1] : vector<32x256xf32> to vector<32xf32>
    %104 = vector.shape_cast %103 : vector<32xf32> to vector<32x1xf32>
    %105 = vector.broadcast %104 : vector<32x1xf32> to vector<32x256xf32>
    %106 = arith.subf %102, %105 : vector<32x256xf32>
    %107 = math.exp %106 : vector<32x256xf32>
    %cst_34 = arith.constant dense<0.000000e+00> : vector<32xf32>
    %108 = vector.multi_reduction <add>, %107, %cst_34 [1] : vector<32x256xf32> to vector<32xf32>
    %109 = vector.shape_cast %108 : vector<32xf32> to vector<32x1xf32>
    %110 = tpu.reciprocal %109 {approx = true} : vector<32x1xf32> -> vector<32x1xf32>
    %111 = vector.broadcast %110 : vector<32x1xf32> to vector<32x256xf32>
    %112 = arith.mulf %107, %111 : vector<32x256xf32>
    %113 = tpu.concatenate %101, %112 in 1 : vector<32x256xf32>, vector<32x256xf32> -> vector<32x512xf32>
    %114 = arith.addf %38, %2 : vector<32x512xf32>
    %115 = arith.mulf %114, %113 : vector<32x512xf32>
    %c17_i32_35 = arith.constant 17 : i32
    %116 = tpu.dynamic_rotate %115 by %c17_i32_35 dim 1 : vector<32x512xf32>, i32 -> vector<32x512xf32>
    %117 = arith.mulf %116, %6 : vector<32x512xf32>
    %c16_i32_36 = arith.constant 16 : i32
    %118 = tpu.dynamic_rotate %115 by %c16_i32_36 dim 1 : vector<32x512xf32>, i32 -> vector<32x512xf32>
    %119 = arith.mulf %118, %9 : vector<32x512xf32>
    %c15_i32_37 = arith.constant 15 : i32
    %120 = tpu.dynamic_rotate %115 by %c15_i32_37 dim 1 : vector<32x512xf32>, i32 -> vector<32x512xf32>
    %121 = arith.mulf %120, %12 : vector<32x512xf32>
    %c1_i32_38 = arith.constant 1 : i32
    %122 = tpu.dynamic_rotate %115 by %c1_i32_38 dim 1 : vector<32x512xf32>, i32 -> vector<32x512xf32>
    %123 = arith.mulf %122, %15 : vector<32x512xf32>
    %124 = arith.mulf %115, %18 : vector<32x512xf32>
    %c511_i32_39 = arith.constant 511 : i32
    %125 = tpu.dynamic_rotate %115 by %c511_i32_39 dim 1 : vector<32x512xf32>, i32 -> vector<32x512xf32>
    %126 = arith.mulf %125, %21 : vector<32x512xf32>
    %c497_i32_40 = arith.constant 497 : i32
    %127 = tpu.dynamic_rotate %115 by %c497_i32_40 dim 1 : vector<32x512xf32>, i32 -> vector<32x512xf32>
    %128 = arith.mulf %127, %24 : vector<32x512xf32>
    %c496_i32_41 = arith.constant 496 : i32
    %129 = tpu.dynamic_rotate %115 by %c496_i32_41 dim 1 : vector<32x512xf32>, i32 -> vector<32x512xf32>
    %130 = arith.mulf %129, %27 : vector<32x512xf32>
    %c495_i32_42 = arith.constant 495 : i32
    %131 = tpu.dynamic_rotate %115 by %c495_i32_42 dim 1 : vector<32x512xf32>, i32 -> vector<32x512xf32>
    %132 = arith.mulf %131, %30 : vector<32x512xf32>
    %133 = tpu.concatenate %117, %119, %121, %123, %124, %126, %128, %130, %132 in 0 : vector<32x512xf32>, vector<32x512xf32>, vector<32x512xf32>, vector<32x512xf32>, vector<32x512xf32>, vector<32x512xf32>, vector<32x512xf32>, vector<32x512xf32>, vector<32x512xf32> -> vector<288x512xf32>
    %134 = arith.truncf %133 : vector<288x512xf32> to vector<288x512xbf16>
    %c0_43 = arith.constant 0 : index
    %c0_44 = arith.constant 0 : index
    %135 = vector.load %arg11[%c0_43, %c0_44] : memref<32x288xbf16, #tpu.memory_space<vmem>>, vector<32x288xbf16>
    %cst_45 = arith.constant dense<0.000000e+00> : vector<32x512xf32>
    %136 = tpu.matmul %135, %134, %cst_45 {dimension_numbers = #tpu.dot_dimension_numbers<[1], [0], [0], [1], [0, 0, 1, 1], [], []>} : vector<32x288xbf16>, vector<288x512xbf16>, vector<32x512xf32> -> vector<32x512xf32>
    %c0_46 = arith.constant 0 : index
    %c0_47 = arith.constant 0 : index
    %137 = vector.load %arg12[%c0_46, %c0_47] : memref<32x1xf32, #tpu.memory_space<vmem>>, vector<32x1xf32>
    %138 = vector.broadcast %137 : vector<32x1xf32> to vector<32x512xf32>
    %139 = arith.addf %136, %138 : vector<32x512xf32>
    %c0_48 = arith.constant 0 : index
    %c0_49 = arith.constant 0 : index
    %140 = vector.load %arg13[%c0_48, %c0_49] : memref<32x512xf32, #tpu.memory_space<vmem>>, vector<32x512xf32>
    tpu.vector_store %arg13[%c0_48, %c0_49], %139 {strides = array<i32>} : memref<32x512xf32, #tpu.memory_space<vmem>>, vector<32x512xf32>,
    return
  }
  func.func @transform_0(%arg0: i32) -> (i32, i32) {
    %c0_i32 = arith.constant 0 : i32
    %c0_i32_0 = arith.constant 0 : i32
    return %c0_i32, %arg0 : i32, i32
  }
  func.func @transform_1(%arg0: i32) -> (i32, i32) {
    %c0_i32 = arith.constant 0 : i32
    %c0_i32_0 = arith.constant 0 : i32
    return %c0_i32, %arg0 : i32, i32
  }
  func.func @transform_2(%arg0: i32) -> (i32, i32) {
    %c0_i32 = arith.constant 0 : i32
    %c0_i32_0 = arith.constant 0 : i32
    return %c0_i32, %arg0 : i32, i32
  }
  func.func @transform_3(%arg0: i32) -> (i32, i32) {
    %c0_i32 = arith.constant 0 : i32
    %c0_i32_0 = arith.constant 0 : i32
    return %c0_i32, %arg0 : i32, i32
  }
  func.func @transform_4(%arg0: i32) -> (i32, i32) {
    %c0_i32 = arith.constant 0 : i32
    %c0_i32_0 = arith.constant 0 : i32
    %c0_i32_1 = arith.constant 0 : i32
    return %c0_i32, %c0_i32_0 : i32, i32
  }
  func.func @transform_5(%arg0: i32) -> (i32, i32) {
    %c0_i32 = arith.constant 0 : i32
    %c0_i32_0 = arith.constant 0 : i32
    %c0_i32_1 = arith.constant 0 : i32
    return %c0_i32, %c0_i32_0 : i32, i32
  }
  func.func @transform_6(%arg0: i32) -> (i32, i32) {
    %c0_i32 = arith.constant 0 : i32
    %c0_i32_0 = arith.constant 0 : i32
    %c0_i32_1 = arith.constant 0 : i32
    return %c0_i32, %c0_i32_0 : i32, i32
  }
  func.func @transform_7(%arg0: i32) -> (i32, i32) {
    %c0_i32 = arith.constant 0 : i32
    %c0_i32_0 = arith.constant 0 : i32
    %c0_i32_1 = arith.constant 0 : i32
    return %c0_i32, %c0_i32_0 : i32, i32
  }
  func.func @transform_8(%arg0: i32) -> (i32, i32) {
    %c0_i32 = arith.constant 0 : i32
    %c0_i32_0 = arith.constant 0 : i32
    %c0_i32_1 = arith.constant 0 : i32
    return %c0_i32, %c0_i32_0 : i32, i32
  }
  func.func @transform_9(%arg0: i32) -> (i32, i32) {
    %c0_i32 = arith.constant 0 : i32
    %c0_i32_0 = arith.constant 0 : i32
    %c0_i32_1 = arith.constant 0 : i32
    return %c0_i32, %c0_i32_0 : i32, i32
  }
  func.func @transform_10(%arg0: i32) -> (i32, i32) {
    %c0_i32 = arith.constant 0 : i32
    %c0_i32_0 = arith.constant 0 : i32
    %c0_i32_1 = arith.constant 0 : i32
    return %c0_i32, %c0_i32_0 : i32, i32
  }
  func.func @transform_11(%arg0: i32) -> (i32, i32) {
    %c0_i32 = arith.constant 0 : i32
    %c0_i32_0 = arith.constant 0 : i32
    %c0_i32_1 = arith.constant 0 : i32
    return %c0_i32, %c0_i32_0 : i32, i32
  }
  func.func @transform_12(%arg0: i32) -> (i32, i32) {
    %c0_i32 = arith.constant 0 : i32
    %c0_i32_0 = arith.constant 0 : i32
    return %c0_i32, %arg0 : i32, i32
  }
}

</mosaic_0001>

<llo_original>
// kernel: tpu_custom_call.1
$region0: #{tpu_custom_call.1}
  #allocation0 [shape = 'u32[]', space=smem, size = 0x4, offset = 0x4, fixed_abs, tag = 'smem constant byte address 0x4 - core index']
  #allocation1 [shape = 'u32[144,128]{1,0:T(1,128)}', space=vmem, size = 0x12000, scoped, tag = 'internal scratch']
  %s0 = inlined_call_operand.vmem [shape: f32[32,512], index: 0, kind: input, shape index: {}]
  %s1 = inlined_call_operand.hbm [shape: f32[32,512], index: 1, kind: input, shape index: {}]
  %s2 = inlined_call_operand.hbm [shape: f32[32,512], index: 2, kind: input, shape index: {}]
  %s3 = inlined_call_operand.hbm [shape: f32[9,512], index: 3, kind: input, shape index: {}]
  %s4 = inlined_call_operand.hbm [shape: bf16[32,32], index: 4, kind: input, shape index: {}]
  %s5 = inlined_call_operand.vmem [shape: bf16[64,32], index: 5, kind: input, shape index: {}]
  %s6 = inlined_call_operand.hbm [shape: bf16[32,288], index: 6, kind: input, shape index: {}]
  %s7 = inlined_call_operand.vmem [shape: f32[32,1], index: 7, kind: input, shape index: {}]
  %s8 = inlined_call_operand.vmem [shape: bf16[32,288], index: 8, kind: input, shape index: {}]
  %s9 = inlined_call_operand.vmem [shape: f32[32,1], index: 9, kind: input, shape index: {}]
  %s10 = inlined_call_operand.hbm [shape: bf16[32,288], index: 10, kind: input, shape index: {}]
  %s11 = inlined_call_operand.vmem [shape: f32[32,1], index: 11, kind: input, shape index: {}]
  %s12 = inlined_call_operand.hbm [shape: f32[32,512], index: 12, kind: output, shape index: {}]
  %s13 = sld [smem:[#allocation0]]
  $region82: #{tpu_custom_call.1} parent=0
    _
  %s15 = ssub.s32 1, %s13
  %s16 = scalar_select 0, %s15, %s13
  $region1: #{tpu_custom_call.1} parent=0
    #allocation2 [shape = 'u8[65536]{0}', space=vmem, size = 0x10000, scoped, tag = 'input window, operand 1, single buffered']
    #allocation3 [shape = 's32[1]{0}', space=sflag, size = 0x4, scoped, tag = 'scoped memory for tpu_custom_call.1']
    #allocation4 [shape = 's32[1]{0}', space=sflag, size = 0x4, scoped, tag = 'scoped memory for tpu_custom_call.1']
    #allocation5 [shape = 'u8[65536]{0}', space=vmem, size = 0x10000, scoped, tag = 'input window, operand 2, single buffered']
    #allocation6 [shape = 's32[1]{0}', space=sflag, size = 0x4, scoped, tag = 'scoped memory for tpu_custom_call.1']
    #allocation7 [shape = 'u8[32768]{0}', space=vmem, size = 0x8000, scoped, tag = 'input window, operand 3, single buffered']
    #allocation8 [shape = 'u8[8192]{0}', space=vmem, size = 0x2000, scoped, tag = 'input window, operand 4, single buffered']
    #allocation9 [shape = 's32[1]{0}', space=sflag, size = 0x4, scoped, tag = 'scoped memory for tpu_custom_call.1']
    #allocation10 [shape = 'u8[24576]{0}', space=vmem, size = 0x6000, scoped, tag = 'input window, operand 6, single buffered']
    #allocation11 [shape = 'u8[24576]{0}', space=vmem, size = 0x6000, scoped, tag = 'input window, operand 10, single buffered']
    #allocation12 [shape = 's32[1]{0}', space=sflag, size = 0x4, scoped, tag = 'scoped memory for tpu_custom_call.1']
    #allocation13 [shape = 'u8[65536]{0}', space=vmem, size = 0x10000, scoped, tag = 'output window, operand 0, single buffered']
    %17 = vsyncpa [#allocation3], 0
    %18 = vsyncpa [#allocation6], 0
    %19 = vsyncpa [#allocation9], 0
    %20 = vsyncpa [#allocation12], 0
    %21 = vsyncpa [#allocation4], 0
    // Predicated region
    $region2: #{tpu_custom_call.1} parent=1 // pred_check
      _
    $region3: #{tpu_custom_call.1} parent=1 // pred_check_branch
      %23 = sbr.rel (0) target = $region5
    $region4: #{tpu_custom_call.1} parent=1 // pred_region
      _
    $region5: #{tpu_custom_call.1} parent=1 // pred_fallthru
      _
    // Predicated region
    $region6: #{tpu_custom_call.1} parent=1 // pred_check
      _
    $region7: #{tpu_custom_call.1} parent=1 // pred_check_branch
      %25 = sbr.rel (0) target = $region9
    $region8: #{tpu_custom_call.1} parent=1 // pred_region
      %s27 = ssub.s32 2048, 2048
      %28 = vsyncadd [#allocation3], %s27
      %s29 = sshll.u32 [#allocation2], 4
      %s30 = int_to_ptr.vmem [resolvable:$true] %s29
      %35 = dma.hbm_to_vmem [thread:$0]  %s1, 2048, %s30, [#allocation3], 512, 512, 32
    $region9: #{tpu_custom_call.1} parent=1 // pred_fallthru
      _
    // Predicated region
    $region10: #{tpu_custom_call.1} parent=1 // pred_check
      _
    $region11: #{tpu_custom_call.1} parent=1 // pred_check_branch
      %37 = sbr.rel (0) target = $region13
    $region12: #{tpu_custom_call.1} parent=1 // pred_region
      %s39 = ssub.s32 2048, 2048
      %40 = vsyncadd [#allocation6], %s39
      %s41 = sshll.u32 [#allocation5], 4
      %s42 = int_to_ptr.vmem [resolvable:$true] %s41
      %47 = dma.hbm_to_vmem [thread:$0]  %s2, 2048, %s42, [#allocation6], 512, 512, 32
    $region13: #{tpu_custom_call.1} parent=1 // pred_fallthru
      _
    // Predicated region
    $region14: #{tpu_custom_call.1} parent=1 // pred_check
      _
    $region15: #{tpu_custom_call.1} parent=1 // pred_check_branch
      %49 = sbr.rel (0) target = $region17
    $region16: #{tpu_custom_call.1} parent=1 // pred_region
      %s51 = ssub.s32 1024, 1024
      %52 = vsyncadd [#allocation6], %s51
      %s53 = sshll.u32 [#allocation7], 4
      %s54 = int_to_ptr.vmem [resolvable:$true] %s53
      %59 = dma.hbm_to_vmem [thread:$0]  %s3, 1024, %s54, [#allocation6], 512, 512, 32
    $region17: #{tpu_custom_call.1} parent=1 // pred_fallthru
      _
    // Predicated region
    $region18: #{tpu_custom_call.1} parent=1 // pred_check
      _
    $region19: #{tpu_custom_call.1} parent=1 // pred_check_branch
      %61 = sbr.rel (0) target = $region21
    $region20: #{tpu_custom_call.1} parent=1 // pred_region
      %s63 = ssub.s32 256, 256
      %64 = vsyncadd [#allocation9], %s63
      %s65 = sshll.u32 [#allocation8], 4
      %s66 = int_to_ptr.vmem [resolvable:$true] %s65
      %71 = dma.hbm_to_vmem [thread:$0]  %s4, 256, %s66, [#allocation9], 64, 64, 4
    $region21: #{tpu_custom_call.1} parent=1 // pred_fallthru
      _
    // Predicated region
    $region22: #{tpu_custom_call.1} parent=1 // pred_check
      _
    $region23: #{tpu_custom_call.1} parent=1 // pred_check_branch
      %73 = sbr.rel (0) target = $region25
    $region24: #{tpu_custom_call.1} parent=1 // pred_region
      _
    $region25: #{tpu_custom_call.1} parent=1 // pred_fallthru
      _
    // Predicated region
    $region26: #{tpu_custom_call.1} parent=1 // pred_check
      _
    $region27: #{tpu_custom_call.1} parent=1 // pred_check_branch
      %75 = sbr.rel (0) target = $region29
    $region28: #{tpu_custom_call.1} parent=1 // pred_region
      %s77 = ssub.s32 768, 768
      %78 = vsyncadd [#allocation9], %s77
      %s79 = sshll.u32 [#allocation10], 4
      %s80 = int_to_ptr.vmem [resolvable:$true] %s79
      %85 = dma.hbm_to_vmem [thread:$0]  %s6, 768, %s80, [#allocation9], 192, 192, 12
    $region29: #{tpu_custom_call.1} parent=1 // pred_fallthru
      _
    // Predicated region
    $region30: #{tpu_custom_call.1} parent=1 // pred_check
      _
    $region31: #{tpu_custom_call.1} parent=1 // pred_check_branch
      %87 = sbr.rel (0) target = $region33
    $region32: #{tpu_custom_call.1} parent=1 // pred_region
      _
    $region33: #{tpu_custom_call.1} parent=1 // pred_fallthru
      _
    // Predicated region
    $region34: #{tpu_custom_call.1} parent=1 // pred_check
      _
    $region35: #{tpu_custom_call.1} parent=1 // pred_check_branch
      %89 = sbr.rel (0) target = $region37
    $region36: #{tpu_custom_call.1} parent=1 // pred_region
      _
    $region37: #{tpu_custom_call.1} parent=1 // pred_fallthru
      _
    // Predicated region
    $region38: #{tpu_custom_call.1} parent=1 // pred_check
      _
    $region39: #{tpu_custom_call.1} parent=1 // pred_check_branch
      %91 = sbr.rel (0) target = $region41
    $region40: #{tpu_custom_call.1} parent=1 // pred_region
      _
    $region41: #{tpu_custom_call.1} parent=1 // pred_fallthru
      _
    // Predicated region
    $region42: #{tpu_custom_call.1} parent=1 // pred_check
      _
    $region43: #{tpu_custom_call.1} parent=1 // pred_check_branch
      %93 = sbr.rel (0) target = $region45
    $region44: #{tpu_custom_call.1} parent=1 // pred_region
      %s95 = ssub.s32 768, 768
      %96 = vsyncadd [#allocation12], %s95
      %s97 = sshll.u32 [#allocation11], 4
      %s98 = int_to_ptr.vmem [resolvable:$true] %s97
      %103 = dma.hbm_to_vmem [thread:$0]  %s10, 768, %s98, [#allocation12], 192, 192, 12
    $region45: #{tpu_custom_call.1} parent=1 // pred_fallthru
      _
    // Predicated region
    $region46: #{tpu_custom_call.1} parent=1 // pred_check
      _
    $region47: #{tpu_custom_call.1} parent=1 // pred_check_branch
      %105 = sbr.rel (0) target = $region49
    $region48: #{tpu_custom_call.1} parent=1 // pred_region
      _
    $region49: #{tpu_custom_call.1} parent=1 // pred_fallthru
      _
    // Predicated region
    $region50: #{tpu_custom_call.1} parent=1 // pred_check
      _
    $region51: #{tpu_custom_call.1} parent=1 // pred_check_branch
      %107 = sbr.rel (0) target = $region53
    $region52: #{tpu_custom_call.1} parent=1 // pred_region
      %108 = dma.done [#allocation3], 2048
    $region53: #{tpu_custom_call.1} parent=1 // pred_fallthru
      _
    // Predicated region
    $region54: #{tpu_custom_call.1} parent=1 // pred_check
      _
    $region55: #{tpu_custom_call.1} parent=1 // pred_check_branch
      %110 = sbr.rel (0) target = $region57
    $region56: #{tpu_custom_call.1} parent=1 // pred_region
      %111 = dma.done [#allocation6], 2048
    $region57: #{tpu_custom_call.1} parent=1 // pred_fallthru
      _
    // Predicated region
    $region58: #{tpu_custom_call.1} parent=1 // pred_check
      _
    $region59: #{tpu_custom_call.1} parent=1 // pred_check_branch
      %113 = sbr.rel (0) target = $region61
    $region60: #{tpu_custom_call.1} parent=1 // pred_region
      %114 = dma.done [#allocation6], 1024
    $region61: #{tpu_custom_call.1} parent=1 // pred_fallthru
      _
    // Predicated region
    $region62: #{tpu_custom_call.1} parent=1 // pred_check
      _
    $region63: #{tpu_custom_call.1} parent=1 // pred_check_branch
      %116 = sbr.rel (0) target = $region65
    $region64: #{tpu_custom_call.1} parent=1 // pred_region
      %117 = dma.done [#allocation9], 256
    $region65: #{tpu_custom_call.1} parent=1 // pred_fallthru
      _
    // Predicated region
    $region66: #{tpu_custom_call.1} parent=1 // pred_check
      _
    $region67: #{tpu_custom_call.1} parent=1 // pred_check_branch
      %119 = sbr.rel (0) target = $region69
    $region68: #{tpu_custom_call.1} parent=1 // pred_region
      %120 = dma.done [#allocation9], 768
    $region69: #{tpu_custom_call.1} parent=1 // pred_fallthru
      _
    // Predicated region
    $region70: #{tpu_custom_call.1} parent=1 // pred_check
      _
    $region71: #{tpu_custom_call.1} parent=1 // pred_check_branch
      %122 = sbr.rel (0) target = $region73
    $region72: #{tpu_custom_call.1} parent=1 // pred_region
      %123 = dma.done [#allocation12], 768
    $region73: #{tpu_custom_call.1} parent=1 // pred_fallthru
      _
    %v125 = vld [vmem:[%s0] sm:$0xff]
    %v126 = vld [vmem:[%s0 + $0x8] sm:$0xff]
    %v127 = vld [vmem:[%s0 + $0x10] sm:$0xff]
    %v128 = vld [vmem:[%s0 + $0x18] sm:$0xff]
    %v129 = vld [vmem:[%s0 + $0x20] sm:$0xff]
    %v130 = vld [vmem:[%s0 + $0x28] sm:$0xff]
    %v131 = vld [vmem:[%s0 + $0x30] sm:$0xff]
    %v132 = vld [vmem:[%s0 + $0x38] sm:$0xff]
    %v133 = vld [vmem:[%s0 + $0x40] sm:$0xff]
    %v134 = vld [vmem:[%s0 + $0x48] sm:$0xff]
    %v135 = vld [vmem:[%s0 + $0x50] sm:$0xff]
    %v136 = vld [vmem:[%s0 + $0x58] sm:$0xff]
    %v137 = vld [vmem:[%s0 + $0x60] sm:$0xff]
    %v138 = vld [vmem:[%s0 + $0x68] sm:$0xff]
    %v139 = vld [vmem:[%s0 + $0x70] sm:$0xff]
    %v140 = vld [vmem:[%s0 + $0x78] sm:$0xff]
    %v141 = vld [vmem:[#allocation2] sm:$0xff]
    %v142 = vld [vmem:[#allocation2 + $0x8] sm:$0xff]
    %v143 = vld [vmem:[#allocation2 + $0x10] sm:$0xff]
    %v144 = vld [vmem:[#allocation2 + $0x18] sm:$0xff]
    %v145 = vld [vmem:[#allocation2 + $0x20] sm:$0xff]
    %v146 = vld [vmem:[#allocation2 + $0x28] sm:$0xff]
    %v147 = vld [vmem:[#allocation2 + $0x30] sm:$0xff]
    %v148 = vld [vmem:[#allocation2 + $0x38] sm:$0xff]
    %v149 = vld [vmem:[#allocation2 + $0x40] sm:$0xff]
    %v150 = vld [vmem:[#allocation2 + $0x48] sm:$0xff]
    %v151 = vld [vmem:[#allocation2 + $0x50] sm:$0xff]
    %v152 = vld [vmem:[#allocation2 + $0x58] sm:$0xff]
    %v153 = vld [vmem:[#allocation2 + $0x60] sm:$0xff]
    %v154 = vld [vmem:[#allocation2 + $0x68] sm:$0xff]
    %v155 = vld [vmem:[#allocation2 + $0x70] sm:$0xff]
    %v156 = vld [vmem:[#allocation2 + $0x78] sm:$0xff]
    %v157 = vld [vmem:[#allocation5] sm:$0xff]
    %v158 = vld [vmem:[#allocation5 + $0x8] sm:$0xff]
    %v159 = vld [vmem:[#allocation5 + $0x10] sm:$0xff]
    %v160 = vld [vmem:[#allocation5 + $0x18] sm:$0xff]
    %v161 = vld [vmem:[#allocation5 + $0x20] sm:$0xff]
    %v162 = vld [vmem:[#allocation5 + $0x28] sm:$0xff]
    %v163 = vld [vmem:[#allocation5 + $0x30] sm:$0xff]
    %v164 = vld [vmem:[#allocation5 + $0x38] sm:$0xff]
    %v165 = vld [vmem:[#allocation5 + $0x40] sm:$0xff]
    %v166 = vld [vmem:[#allocation5 + $0x48] sm:$0xff]
    %v167 = vld [vmem:[#allocation5 + $0x50] sm:$0xff]
    %v168 = vld [vmem:[#allocation5 + $0x58] sm:$0xff]
    %v169 = vld [vmem:[#allocation5 + $0x60] sm:$0xff]
    %v170 = vld [vmem:[#allocation5 + $0x68] sm:$0xff]
    %v171 = vld [vmem:[#allocation5 + $0x70] sm:$0xff]
    %v172 = vld [vmem:[#allocation5 + $0x78] sm:$0xff]
    %v173 = vld [vmem:[#allocation7] sm:$0xff]
    %v174 = vld [vmem:[#allocation7 + $0x8] sm:$0xff]
    %v175 = vld [vmem:[#allocation7 + $0x10] sm:$0xff]
    %v176 = vld [vmem:[#allocation7 + $0x18] sm:$0xff]
    %v177 = vld [vmem:[#allocation7 + $0x20] sm:$0x1]
    %v178 = vld [vmem:[#allocation7 + $0x28] sm:$0x1]
    %v179 = vld [vmem:[#allocation7 + $0x30] sm:$0x1]
    %v180 = vld [vmem:[#allocation7 + $0x38] sm:$0x1]
    %v181 = vlaneseq
    %v182 = vshrl.u32 %v181, 7
    %v183 = vsub.s32 0, %v182
    %v184 = vrot.slane %v173, %v183
    %v185 = vlaneseq
    %v186 = vshrl.u32 %v185, 7
    %v187 = vsub.s32 0, %v186
    %v188 = vrot.slane %v174, %v187
    %v189 = vlaneseq
    %v190 = vshrl.u32 %v189, 7
    %v191 = vsub.s32 0, %v190
    %v192 = vrot.slane %v175, %v191
    %v193 = vlaneseq
    %v194 = vshrl.u32 %v193, 7
    %v195 = vsub.s32 0, %v194
    %v196 = vrot.slane %v176, %v195
    %v197 = vlaneseq
    %v198 = vshrl.u32 %v197, 7
    %v199 = vsub.s32 1, %v198
    %v200 = vrot.slane %v173, %v199
    %v201 = vlaneseq
    %v202 = vshrl.u32 %v201, 7
    %v203 = vsub.s32 1, %v202
    %v204 = vrot.slane %v174, %v203
    %v205 = vlaneseq
    %v206 = vshrl.u32 %v205, 7
    %v207 = vsub.s32 1, %v206
    %v208 = vrot.slane %v175, %v207
    %v209 = vlaneseq
    %v210 = vshrl.u32 %v209, 7
    %v211 = vsub.s32 1, %v210
    %v212 = vrot.slane %v176, %v211
    %v213 = vlaneseq
    %v214 = vshrl.u32 %v213, 7
    %v215 = vsub.s32 2, %v214
    %v216 = vrot.slane %v173, %v215
    %v217 = vlaneseq
    %v218 = vshrl.u32 %v217, 7
    %v219 = vsub.s32 2, %v218
    %v220 = vrot.slane %v174, %v219
    %v221 = vlaneseq
    %v222 = vshrl.u32 %v221, 7
    %v223 = vsub.s32 2, %v222
    %v224 = vrot.slane %v175, %v223
    %v225 = vlaneseq
    %v226 = vshrl.u32 %v225, 7
    %v227 = vsub.s32 2, %v226
    %v228 = vrot.slane %v176, %v227
    %v229 = vlaneseq
    %v230 = vshrl.u32 %v229, 7
    %v231 = vsub.s32 3, %v230
    %v232 = vrot.slane %v173, %v231
    %v233 = vlaneseq
    %v234 = vshrl.u32 %v233, 7
    %v235 = vsub.s32 3, %v234
    %v236 = vrot.slane %v174, %v235
    %v237 = vlaneseq
    %v238 = vshrl.u32 %v237, 7
    %v239 = vsub.s32 3, %v238
    %v240 = vrot.slane %v175, %v239
    %v241 = vlaneseq
    %v242 = vshrl.u32 %v241, 7
    %v243 = vsub.s32 3, %v242
    %v244 = vrot.slane %v176, %v243
    %v245 = vlaneseq
    %v246 = vshrl.u32 %v245, 7
    %v247 = vsub.s32 4, %v246
    %v248 = vrot.slane %v173, %v247
    %v249 = vlaneseq
    %v250 = vshrl.u32 %v249, 7
    %v251 = vsub.s32 4, %v250
    %v252 = vrot.slane %v174, %v251
    %v253 = vlaneseq
    %v254 = vshrl.u32 %v253, 7
    %v255 = vsub.s32 4, %v254
    %v256 = vrot.slane %v175, %v255
    %v257 = vlaneseq
    %v258 = vshrl.u32 %v257, 7
    %v259 = vsub.s32 4, %v258
    %v260 = vrot.slane %v176, %v259
    %v261 = vlaneseq
    %v262 = vshrl.u32 %v261, 7
    %v263 = vsub.s32 5, %v262
    %v264 = vrot.slane %v173, %v263
    %v265 = vlaneseq
    %v266 = vshrl.u32 %v265, 7
    %v267 = vsub.s32 5, %v266
    %v268 = vrot.slane %v174, %v267
    %v269 = vlaneseq
    %v270 = vshrl.u32 %v269, 7
    %v271 = vsub.s32 5, %v270
    %v272 = vrot.slane %v175, %v271
    %v273 = vlaneseq
    %v274 = vshrl.u32 %v273, 7
    %v275 = vsub.s32 5, %v274
    %v276 = vrot.slane %v176, %v275
    %v277 = vlaneseq
    %v278 = vshrl.u32 %v277, 7
    %v279 = vsub.s32 6, %v278
    %v280 = vrot.slane %v173, %v279
    %v281 = vlaneseq
    %v282 = vshrl.u32 %v281, 7
    %v283 = vsub.s32 6, %v282
    %v284 = vrot.slane %v174, %v283
    %v285 = vlaneseq
    %v286 = vshrl.u32 %v285, 7
    %v287 = vsub.s32 6, %v286
    %v288 = vrot.slane %v175, %v287
    %v289 = vlaneseq
    %v290 = vshrl.u32 %v289, 7
    %v291 = vsub.s32 6, %v290
    %v292 = vrot.slane %v176, %v291
    %v293 = vlaneseq
    %v294 = vshrl.u32 %v293, 7
    %v295 = vsub.s32 7, %v294
    %v296 = vrot.slane %v173, %v295
    %v297 = vlaneseq
    %v298 = vshrl.u32 %v297, 7
    %v299 = vsub.s32 7, %v298
    %v300 = vrot.slane %v174, %v299
    %v301 = vlaneseq
    %v302 = vshrl.u32 %v301, 7
    %v303 = vsub.s32 7, %v302
    %v304 = vrot.slane %v175, %v303
    %v305 = vlaneseq
    %v306 = vshrl.u32 %v305, 7
    %v307 = vsub.s32 7, %v306
    %v308 = vrot.slane %v176, %v307
    %v309 = vlaneseq
    %v310 = vshrl.u32 %v309, 7
    %v311 = vsub.s32 0, %v310
    %v312 = vrot.slane %v177, %v311
    %v313 = vlaneseq
    %v314 = vshrl.u32 %v313, 7
    %v315 = vsub.s32 0, %v314
    %v316 = vrot.slane %v178, %v315
    %v317 = vlaneseq
    %v318 = vshrl.u32 %v317, 7
    %v319 = vsub.s32 0, %v318
    %v320 = vrot.slane %v179, %v319
    %v321 = vlaneseq
    %v322 = vshrl.u32 %v321, 7
    %v323 = vsub.s32 0, %v322
    %v324 = vrot.slane %v180, %v323
    %v325 = vld [vmem:[#allocation8] sm:$0xf]
    %v326 = vld [vmem:[#allocation8 + $0x4] sm:$0xf]
    %v327 = vld [vmem:[#allocation8 + $0x8] sm:$0xf]
    %v328 = vld [vmem:[#allocation8 + $0xc] sm:$0xf]
    %v329 = vpack.c.bf16 %v129, %v125
    %v330 = vpack.c.bf16 %v130, %v126
    %v331 = vpack.c.bf16 %v131, %v127
    %v332 = vpack.c.bf16 %v132, %v128
    %v333 = vpack.c.bf16 %v137, %v133
    %v334 = vpack.c.bf16 %v138, %v134
    %v335 = vpack.c.bf16 %v139, %v135
    %v336 = vpack.c.bf16 %v140, %v136
    %v341 = vunpack.c.l.b16 %v325
    %v342 = vunpack.c.l.b16 %v326
    %v343 = vunpack.c.l.b16 %v327
    %v344 = vunpack.c.l.b16 %v328
    %v345 = vpack.c.b16 %v342, %v341
    %v346 = vpack.c.b16 %v344, %v343
    %vm347 = vcmask 261120
    %v349 = vsel %vm347, %v345, 0
    %v352 = vsel %vm347, %v346, 0
    %354 = vmatprep.subr.bf16.mxu0 %v330
    %355 = vmatpush1.bf16.msra.mxu0 %v329
    %356 = vmatprep.subr.bf16.mxu0 %v334
    %357 = vmatpush1.bf16.msra.mxu0 %v333
    %358 = vmatprep.subr.bf16.mxu0 0
    %359 = vmatpush1.bf16.msra.mxu0 0
    %360 = vmatprep.subr.bf16.mxu0 0
    %361 = vmatpush1.bf16.msra.mxu0 0
    %362 = vmatprep.subr.bf16.mxu0 0
    %363 = vmatpush1.bf16.msra.mxu0 0
    %364 = vmatprep.subr.bf16.mxu0 0
    %365 = vmatpush1.bf16.msra.mxu0 0
    %366 = vmatprep.subr.bf16.mxu0 0
    %367 = vmatpush1.bf16.msra.mxu0 0
    %368 = vmatprep.subr.bf16.mxu0 0
    %369 = vmatpush1.bf16.msra.mxu0 0
    %370 = vmatprep.subr.bf16.mxu0 0
    %371 = vmatpush1.bf16.msra.mxu0 0
    %372 = vmatprep.subr.bf16.mxu0 0
    %373 = vmatpush1.bf16.msra.mxu0 0
    %374 = vmatprep.subr.bf16.mxu0 0
    %375 = vmatpush1.bf16.msra.mxu0 0
    %376 = vmatprep.subr.bf16.mxu0 0
    %377 = vmatpush1.bf16.msra.mxu0 0
    %378 = vmatprep.subr.bf16.mxu0 0
    %379 = vmatpush1.bf16.msra.mxu0 0
    %380 = vmatprep.subr.bf16.mxu0 0
    %381 = vmatpush1.bf16.msra.mxu0 0
    %382 = vmatprep.subr.bf16.mxu0 0
    %383 = vmatpush1.bf16.msra.mxu0 0
    %384 = vmatprep.subr.bf16.mxu0 0
    %385 = vmatpush1.bf16.msra.mxu0 0
    %386 = vmatprep.mubr.bf16.mxu0 0
    %387 = vmatmul.mubr.bf16.gmra.mrb[0].mxu0 %v349
    %v388 = vpop.f32.mrb[0].mxu0
    %v389 = vadd.f32 0.0, %v388
    %v390 = vpop.f32.mrb[0].mxu0
    %v391 = vadd.f32 0.0, %v390
    %v392 = vpop.f32.mrb[0].mxu0
    %v393 = vadd.f32 0.0, %v392
    %v394 = vpop.f32.mrb[0].mxu0
    %v395 = vadd.f32 0.0, %v394
    %396 = vmatprep.mubr.bf16.mxu0 0
    %397 = vmatmul.mubr.bf16.gmra.mrb[0].mxu0 %v352
    %v398 = vpop.f32.mrb[0].mxu0
    %v399 = vadd.f32 0.0, %v398
    %v400 = vpop.f32.mrb[0].mxu0
    %v401 = vadd.f32 0.0, %v400
    %v402 = vpop.f32.mrb[0].mxu0
    %v403 = vadd.f32 0.0, %v402
    %v404 = vpop.f32.mrb[0].mxu0
    %v405 = vadd.f32 0.0, %v404
    %406 = vdwg.mxu0
    %407 = vmatprep.subr.bf16.mxu0 %v332
    %408 = vmatpush1.bf16.msra.mxu0 %v331
    %409 = vmatprep.subr.bf16.mxu0 %v336
    %410 = vmatpush1.bf16.msra.mxu0 %v335
    %411 = vmatprep.subr.bf16.mxu0 0
    %412 = vmatpush1.bf16.msra.mxu0 0
    %413 = vmatprep.subr.bf16.mxu0 0
    %414 = vmatpush1.bf16.msra.mxu0 0
    %415 = vmatprep.subr.bf16.mxu0 0
    %416 = vmatpush1.bf16.msra.mxu0 0
    %417 = vmatprep.subr.bf16.mxu0 0
    %418 = vmatpush1.bf16.msra.mxu0 0
    %419 = vmatprep.subr.bf16.mxu0 0
    %420 = vmatpush1.bf16.msra.mxu0 0
    %421 = vmatprep.subr.bf16.mxu0 0
    %422 = vmatpush1.bf16.msra.mxu0 0
    %423 = vmatprep.subr.bf16.mxu0 0
    %424 = vmatpush1.bf16.msra.mxu0 0
    %425 = vmatprep.subr.bf16.mxu0 0
    %426 = vmatpush1.bf16.msra.mxu0 0
    %427 = vmatprep.subr.bf16.mxu0 0
    %428 = vmatpush1.bf16.msra.mxu0 0
    %429 = vmatprep.subr.bf16.mxu0 0
    %430 = vmatpush1.bf16.msra.mxu0 0
    %431 = vmatprep.subr.bf16.mxu0 0
    %432 = vmatpush1.bf16.msra.mxu0 0
    %433 = vmatprep.subr.bf16.mxu0 0
    %434 = vmatpush1.bf16.msra.mxu0 0
    %435 = vmatprep.subr.bf16.mxu0 0
    %436 = vmatpush1.bf16.msra.mxu0 0
    %437 = vmatprep.subr.bf16.mxu0 0
    %438 = vmatpush1.bf16.msra.mxu0 0
    %439 = vmatprep.mubr.bf16.mxu0 0
    %440 = vmatmul.mubr.bf16.gmra.mrb[0].mxu0 %v349
    %v441 = vpop.f32.mrb[0].mxu0
    %v442 = vadd.f32 0.0, %v441
    %v443 = vpop.f32.mrb[0].mxu0
    %v444 = vadd.f32 0.0, %v443
    %v445 = vpop.f32.mrb[0].mxu0
    %v446 = vadd.f32 0.0, %v445
    %v447 = vpop.f32.mrb[0].mxu0
    %v448 = vadd.f32 0.0, %v447
    %449 = vmatprep.mubr.bf16.mxu0 0
    %450 = vmatmul.mubr.bf16.gmra.mrb[0].mxu0 %v352
    %v451 = vpop.f32.mrb[0].mxu0
    %v452 = vadd.f32 0.0, %v451
    %v453 = vpop.f32.mrb[0].mxu0
    %v454 = vadd.f32 0.0, %v453
    %v455 = vpop.f32.mrb[0].mxu0
    %v456 = vadd.f32 0.0, %v455
    %v457 = vpop.f32.mrb[0].mxu0
    %v458 = vadd.f32 0.0, %v457
    %459 = vdwg.mxu0
    %v460 = vld [vmem:[%s5] sm:$0xf]
    %v461 = vld [vmem:[%s5 + $0x4] sm:$0xf]
    %v462 = vld [vmem:[%s5 + $0x8] sm:$0xf]
    %v463 = vld [vmem:[%s5 + $0xc] sm:$0xf]
    %v464 = vld [vmem:[%s5 + $0x10] sm:$0xf]
    %v465 = vld [vmem:[%s5 + $0x14] sm:$0xf]
    %v466 = vld [vmem:[%s5 + $0x18] sm:$0xf]
    %v467 = vld [vmem:[%s5 + $0x1c] sm:$0xf]
    %v468 = vpack.c.bf16 %v145, %v141
    %v469 = vpack.c.bf16 %v146, %v142
    %v470 = vpack.c.bf16 %v147, %v143
    %v471 = vpack.c.bf16 %v148, %v144
    %v472 = vpack.c.bf16 %v153, %v149
    %v473 = vpack.c.bf16 %v154, %v150
    %v474 = vpack.c.bf16 %v155, %v151
    %v475 = vpack.c.bf16 %v156, %v152
    %v484 = vunpack.c.l.b16 %v460
    %v485 = vunpack.c.l.b16 %v461
    %v486 = vunpack.c.l.b16 %v462
    %v487 = vunpack.c.l.b16 %v463
    %v488 = vunpack.c.l.b16 %v464
    %v489 = vunpack.c.l.b16 %v465
    %v490 = vunpack.c.l.b16 %v466
    %v491 = vunpack.c.l.b16 %v467
    %v492 = vpack.c.b16 %v485, %v484
    %v493 = vpack.c.b16 %v487, %v486
    %v494 = vpack.c.b16 %v489, %v488
    %v495 = vpack.c.b16 %v491, %v490
    %v497 = vsel %vm347, %v492, 0
    %v500 = vsel %vm347, %v493, 0
    %v503 = vsel %vm347, %v494, 0
    %v506 = vsel %vm347, %v495, 0
    %508 = vmatprep.subr.bf16.mxu0 %v469
    %509 = vmatpush1.bf16.msra.mxu0 %v468
    %510 = vmatprep.subr.bf16.mxu0 %v473
    %511 = vmatpush1.bf16.msra.mxu0 %v472
    %512 = vmatprep.subr.bf16.mxu0 0
    %513 = vmatpush1.bf16.msra.mxu0 0
    %514 = vmatprep.subr.bf16.mxu0 0
    %515 = vmatpush1.bf16.msra.mxu0 0
    %516 = vmatprep.subr.bf16.mxu0 0
    %517 = vmatpush1.bf16.msra.mxu0 0
    %518 = vmatprep.subr.bf16.mxu0 0
    %519 = vmatpush1.bf16.msra.mxu0 0
    %520 = vmatprep.subr.bf16.mxu0 0
    %521 = vmatpush1.bf16.msra.mxu0 0
    %522 = vmatprep.subr.bf16.mxu0 0
    %523 = vmatpush1.bf16.msra.mxu0 0
    %524 = vmatprep.subr.bf16.mxu0 0
    %525 = vmatpush1.bf16.msra.mxu0 0
    %526 = vmatprep.subr.bf16.mxu0 0
    %527 = vmatpush1.bf16.msra.mxu0 0
    %528 = vmatprep.subr.bf16.mxu0 0
    %529 = vmatpush1.bf16.msra.mxu0 0
    %530 = vmatprep.subr.bf16.mxu0 0
    %531 = vmatpush1.bf16.msra.mxu0 0
    %532 = vmatprep.subr.bf16.mxu0 0
    %533 = vmatpush1.bf16.msra.mxu0 0
    %534 = vmatprep.subr.bf16.mxu0 0
    %535 = vmatpush1.bf16.msra.mxu0 0
    %536 = vmatprep.subr.bf16.mxu0 0
    %537 = vmatpush1.bf16.msra.mxu0 0
    %538 = vmatprep.subr.bf16.mxu0 0
    %539 = vmatpush1.bf16.msra.mxu0 0
    %540 = vmatprep.mubr.bf16.mxu0 0
    %541 = vmatmul.mubr.bf16.gmra.mrb[0].mxu0 %v497
    %v542 = vpop.f32.mrb[0].mxu0
    %v543 = vadd.f32 0.0, %v542
    %v544 = vpop.f32.mrb[0].mxu0
    %v545 = vadd.f32 0.0, %v544
    %v546 = vpop.f32.mrb[0].mxu0
    %v547 = vadd.f32 0.0, %v546
    %v548 = vpop.f32.mrb[0].mxu0
    %v549 = vadd.f32 0.0, %v548
    %550 = vmatprep.mubr.bf16.mxu0 0
    %551 = vmatmul.mubr.bf16.gmra.mrb[0].mxu0 %v500
    %v552 = vpop.f32.mrb[0].mxu0
    %v553 = vadd.f32 0.0, %v552
    %v554 = vpop.f32.mrb[0].mxu0
    %v555 = vadd.f32 0.0, %v554
    %v556 = vpop.f32.mrb[0].mxu0
    %v557 = vadd.f32 0.0, %v556
    %v558 = vpop.f32.mrb[0].mxu0
    %v559 = vadd.f32 0.0, %v558
    %560 = vmatprep.mubr.bf16.mxu0 0
    %561 = vmatmul.mubr.bf16.gmra.mrb[0].mxu0 %v503
    %v562 = vpop.f32.mrb[0].mxu0
    %v563 = vadd.f32 0.0, %v562
    %v564 = vpop.f32.mrb[0].mxu0
    %v565 = vadd.f32 0.0, %v564
    %v566 = vpop.f32.mrb[0].mxu0
    %v567 = vadd.f32 0.0, %v566
    %v568 = vpop.f32.mrb[0].mxu0
    %v569 = vadd.f32 0.0, %v568
    %570 = vmatprep.mubr.bf16.mxu0 0
    %571 = vmatmul.mubr.bf16.gmra.mrb[0].mxu0 %v506
    %v572 = vpop.f32.mrb[0].mxu0
    %v573 = vadd.f32 0.0, %v572
    %v574 = vpop.f32.mrb[0].mxu0
    %v575 = vadd.f32 0.0, %v574
    %v576 = vpop.f32.mrb[0].mxu0
    %v577 = vadd.f32 0.0, %v576
    %v578 = vpop.f32.mrb[0].mxu0
    %v579 = vadd.f32 0.0, %v578
    %580 = vdwg.mxu0
    %581 = vmatprep.subr.bf16.mxu0 %v471
    %582 = vmatpush1.bf16.msra.mxu0 %v470
    %583 = vmatprep.subr.bf16.mxu0 %v475
    %584 = vmatpush1.bf16.msra.mxu0 %v474
    %585 = vmatprep.subr.bf16.mxu0 0
    %586 = vmatpush1.bf16.msra.mxu0 0
    %587 = vmatprep.subr.bf16.mxu0 0
    %588 = vmatpush1.bf16.msra.mxu0 0
    %589 = vmatprep.subr.bf16.mxu0 0
    %590 = vmatpush1.bf16.msra.mxu0 0
    %591 = vmatprep.subr.bf16.mxu0 0
    %592 = vmatpush1.bf16.msra.mxu0 0
    %593 = vmatprep.subr.bf16.mxu0 0
    %594 = vmatpush1.bf16.msra.mxu0 0
    %595 = vmatprep.subr.bf16.mxu0 0
    %596 = vmatpush1.bf16.msra.mxu0 0
    %597 = vmatprep.subr.bf16.mxu0 0
    %598 = vmatpush1.bf16.msra.mxu0 0
    %599 = vmatprep.subr.bf16.mxu0 0
    %600 = vmatpush1.bf16.msra.mxu0 0
    %601 = vmatprep.subr.bf16.mxu0 0
    %602 = vmatpush1.bf16.msra.mxu0 0
    %603 = vmatprep.subr.bf16.mxu0 0
    %604 = vmatpush1.bf16.msra.mxu0 0
    %605 = vmatprep.subr.bf16.mxu0 0
    %606 = vmatpush1.bf16.msra.mxu0 0
    %607 = vmatprep.subr.bf16.mxu0 0
    %608 = vmatpush1.bf16.msra.mxu0 0
    %609 = vmatprep.subr.bf16.mxu0 0
    %610 = vmatpush1.bf16.msra.mxu0 0
    %611 = vmatprep.subr.bf16.mxu0 0
    %612 = vmatpush1.bf16.msra.mxu0 0
    %613 = vmatprep.mubr.bf16.mxu0 0
    %614 = vmatmul.mubr.bf16.gmra.mrb[0].mxu0 %v497
    %v615 = vpop.f32.mrb[0].mxu0
    %v616 = vadd.f32 0.0, %v615
    %v617 = vpop.f32.mrb[0].mxu0
    %v618 = vadd.f32 0.0, %v617
    %v619 = vpop.f32.mrb[0].mxu0
    %v620 = vadd.f32 0.0, %v619
    %v621 = vpop.f32.mrb[0].mxu0
    %v622 = vadd.f32 0.0, %v621
    %623 = vmatprep.mubr.bf16.mxu0 0
    %624 = vmatmul.mubr.bf16.gmra.mrb[0].mxu0 %v500
    %v625 = vpop.f32.mrb[0].mxu0
    %v626 = vadd.f32 0.0, %v625
    %v627 = vpop.f32.mrb[0].mxu0
    %v628 = vadd.f32 0.0, %v627
    %v629 = vpop.f32.mrb[0].mxu0
    %v630 = vadd.f32 0.0, %v629
    %v631 = vpop.f32.mrb[0].mxu0
    %v632 = vadd.f32 0.0, %v631
    %633 = vmatprep.mubr.bf16.mxu0 0
    %634 = vmatmul.mubr.bf16.gmra.mrb[0].mxu0 %v503
    %v635 = vpop.f32.mrb[0].mxu0
    %v636 = vadd.f32 0.0, %v635
    %v637 = vpop.f32.mrb[0].mxu0
    %v638 = vadd.f32 0.0, %v637
    %v639 = vpop.f32.mrb[0].mxu0
    %v640 = vadd.f32 0.0, %v639
    %v641 = vpop.f32.mrb[0].mxu0
    %v642 = vadd.f32 0.0, %v641
    %643 = vmatprep.mubr.bf16.mxu0 0
    %644 = vmatmul.mubr.bf16.gmra.mrb[0].mxu0 %v506
    %v645 = vpop.f32.mrb[0].mxu0
    %v646 = vadd.f32 0.0, %v645
    %v647 = vpop.f32.mrb[0].mxu0
    %v648 = vadd.f32 0.0, %v647
    %v649 = vpop.f32.mrb[0].mxu0
    %v650 = vadd.f32 0.0, %v649
    %v651 = vpop.f32.mrb[0].mxu0
    %v652 = vadd.f32 0.0, %v651
    %653 = vdwg.mxu0
    %v654 = vsub.f32 %v543, %v389
    %v655 = vsub.f32 %v545, %v391
    %v656 = vsub.f32 %v616, %v442
    %v657 = vsub.f32 %v618, %v444
    %v658 = vsub.f32 %v547, %v393
    %v659 = vsub.f32 %v549, %v395
    %v660 = vsub.f32 %v620, %v446
    %v661 = vsub.f32 %v622, %v448
    %v662 = vsub.f32 %v553, %v399
    %v663 = vsub.f32 %v555, %v401
    %v664 = vsub.f32 %v626, %v452
    %v665 = vsub.f32 %v628, %v454
    %v666 = vsub.f32 %v557, %v403
    %v667 = vsub.f32 %v559, %v405
    %v668 = vsub.f32 %v630, %v456
    %v669 = vsub.f32 %v632, %v458
    %v670 = vadd.f32 %v654, %v157
    %v671 = vadd.f32 %v655, %v158
    %v672 = vadd.f32 %v656, %v159
    %v673 = vadd.f32 %v657, %v160
    %v674 = vadd.f32 %v658, %v161
    %v675 = vadd.f32 %v659, %v162
    %v676 = vadd.f32 %v660, %v163
    %v677 = vadd.f32 %v661, %v164
    %v678 = vadd.f32 %v662, %v165
    %v679 = vadd.f32 %v663, %v166
    %v680 = vadd.f32 %v664, %v167
    %v681 = vadd.f32 %v665, %v168
    %v682 = vadd.f32 %v666, %v169
    %v683 = vadd.f32 %v667, %v170
    %v684 = vadd.f32 %v668, %v171
    %v685 = vadd.f32 %v669, %v172
    %686 = vrot.lane.b32.xlu0 %v670, 17
    %v687 = vpop.permute.xlu0 %686
    %688 = vrot.lane.b32.xlu0 %v674, 17
    %v689 = vpop.permute.xlu0 %688
    %690 = vrot.lane.b32.xlu0 %v678, 17
    %v691 = vpop.permute.xlu0 %690
    %692 = vrot.lane.b32.xlu0 %v682, 17
    %v693 = vpop.permute.xlu0 %692
    %694 = vrot.lane.b32.xlu0 %v671, 17
    %v695 = vpop.permute.xlu0 %694
    %696 = vrot.lane.b32.xlu0 %v675, 17
    %v697 = vpop.permute.xlu0 %696
    %698 = vrot.lane.b32.xlu0 %v679, 17
    %v699 = vpop.permute.xlu0 %698
    %700 = vrot.lane.b32.xlu0 %v683, 17
    %v701 = vpop.permute.xlu0 %700
    %702 = vrot.lane.b32.xlu0 %v672, 17
    %v703 = vpop.permute.xlu0 %702
    %704 = vrot.lane.b32.xlu0 %v676, 17
    %v705 = vpop.permute.xlu0 %704
    %706 = vrot.lane.b32.xlu0 %v680, 17
    %v707 = vpop.permute.xlu0 %706
    %708 = vrot.lane.b32.xlu0 %v684, 17
    %v709 = vpop.permute.xlu0 %708
    %710 = vrot.lane.b32.xlu0 %v673, 17
    %v711 = vpop.permute.xlu0 %710
    %712 = vrot.lane.b32.xlu0 %v677, 17
    %v713 = vpop.permute.xlu0 %712
    %714 = vrot.lane.b32.xlu0 %v681, 17
    %v715 = vpop.permute.xlu0 %714
    %716 = vrot.lane.b32.xlu0 %v685, 17
    %v717 = vpop.permute.xlu0 %716
    %v718 = vlaneseq
    %v719 = vand.u32 %v718, 127
    %vm720 = vcmp.lt.s32.totalorder %v719, 17
    %v721 = vsel %vm720, %v703, %v711
    %v722 = vsel %vm720, %v705, %v713
    %v723 = vsel %vm720, %v707, %v715
    %v724 = vsel %vm720, %v709, %v717
    %v725 = vsel %vm720, %v695, %v703
    %v726 = vsel %vm720, %v697, %v705
    %v727 = vsel %vm720, %v699, %v707
    %v728 = vsel %vm720, %v701, %v709
    %v729 = vsel %vm720, %v687, %v695
    %v730 = vsel %vm720, %v689, %v697
    %v731 = vsel %vm720, %v691, %v699
    %v732 = vsel %vm720, %v693, %v701
    %v733 = vsel %vm720, %v711, %v687
    %v734 = vsel %vm720, %v713, %v689
    %v735 = vsel %vm720, %v715, %v691
    %v736 = vsel %vm720, %v717, %v693
    %v737 = vmul.f32 %v733, %v184
    %v738 = vmul.f32 %v729, %v188
    %v739 = vmul.f32 %v725, %v192
    %v740 = vmul.f32 %v721, %v196
    %v741 = vmul.f32 %v734, %v184
    %v742 = vmul.f32 %v730, %v188
    %v743 = vmul.f32 %v726, %v192
    %v744 = vmul.f32 %v722, %v196
    %v745 = vmul.f32 %v735, %v184
    %v746 = vmul.f32 %v731, %v188
    %v747 = vmul.f32 %v727, %v192
    %v748 = vmul.f32 %v723, %v196
    %v749 = vmul.f32 %v736, %v184
    %v750 = vmul.f32 %v732, %v188
    %v751 = vmul.f32 %v728, %v192
    %v752 = vmul.f32 %v724, %v196
    %753 = vrot.lane.b32.xlu0 %v670, 16
    %v754 = vpop.permute.xlu0 %753
    %755 = vrot.lane.b32.xlu0 %v674, 16
    %v756 = vpop.permute.xlu0 %755
    %757 = vrot.lane.b32.xlu0 %v678, 16
    %v758 = vpop.permute.xlu0 %757
    %759 = vrot.lane.b32.xlu0 %v682, 16
    %v760 = vpop.permute.xlu0 %759
    %761 = vrot.lane.b32.xlu0 %v671, 16
    %v762 = vpop.permute.xlu0 %761
    %763 = vrot.lane.b32.xlu0 %v675, 16
    %v764 = vpop.permute.xlu0 %763
    %765 = vrot.lane.b32.xlu0 %v679, 16
    %v766 = vpop.permute.xlu0 %765
    %767 = vrot.lane.b32.xlu0 %v683, 16
    %v768 = vpop.permute.xlu0 %767
    %769 = vrot.lane.b32.xlu0 %v672, 16
    %v770 = vpop.permute.xlu0 %769
    %771 = vrot.lane.b32.xlu0 %v676, 16
    %v772 = vpop.permute.xlu0 %771
    %773 = vrot.lane.b32.xlu0 %v680, 16
    %v774 = vpop.permute.xlu0 %773
    %775 = vrot.lane.b32.xlu0 %v684, 16
    %v776 = vpop.permute.xlu0 %775
    %777 = vrot.lane.b32.xlu0 %v673, 16
    %v778 = vpop.permute.xlu0 %777
    %779 = vrot.lane.b32.xlu0 %v677, 16
    %v780 = vpop.permute.xlu0 %779
    %781 = vrot.lane.b32.xlu0 %v681, 16
    %v782 = vpop.permute.xlu0 %781
    %783 = vrot.lane.b32.xlu0 %v685, 16
    %v784 = vpop.permute.xlu0 %783
    %vm785 = vcmp.lt.s32.totalorder %v719, 16
    %v786 = vsel %vm785, %v770, %v778
    %v787 = vsel %vm785, %v772, %v780
    %v788 = vsel %vm785, %v774, %v782
    %v789 = vsel %vm785, %v776, %v784
    %v790 = vsel %vm785, %v762, %v770
    %v791 = vsel %vm785, %v764, %v772
    %v792 = vsel %vm785, %v766, %v774
    %v793 = vsel %vm785, %v768, %v776
    %v794 = vsel %vm785, %v754, %v762
    %v795 = vsel %vm785, %v756, %v764
    %v796 = vsel %vm785, %v758, %v766
    %v797 = vsel %vm785, %v760, %v768
    %v798 = vsel %vm785, %v778, %v754
    %v799 = vsel %vm785, %v780, %v756
    %v800 = vsel %vm785, %v782, %v758
    %v801 = vsel %vm785, %v784, %v760
    %v802 = vmul.f32 %v798, %v200
    %v803 = vmul.f32 %v794, %v204
    %v804 = vmul.f32 %v790, %v208
    %v805 = vmul.f32 %v786, %v212
    %v806 = vmul.f32 %v799, %v200
    %v807 = vmul.f32 %v795, %v204
    %v808 = vmul.f32 %v791, %v208
    %v809 = vmul.f32 %v787, %v212
    %v810 = vmul.f32 %v800, %v200
    %v811 = vmul.f32 %v796, %v204
    %v812 = vmul.f32 %v792, %v208
    %v813 = vmul.f32 %v788, %v212
    %v814 = vmul.f32 %v801, %v200
    %v815 = vmul.f32 %v797, %v204
    %v816 = vmul.f32 %v793, %v208
    %v817 = vmul.f32 %v789, %v212
    %818 = vrot.lane.b32.xlu0 %v670, 15
    %v819 = vpop.permute.xlu0 %818
    %820 = vrot.lane.b32.xlu0 %v674, 15
    %v821 = vpop.permute.xlu0 %820
    %822 = vrot.lane.b32.xlu0 %v678, 15
    %v823 = vpop.permute.xlu0 %822
    %824 = vrot.lane.b32.xlu0 %v682, 15
    %v825 = vpop.permute.xlu0 %824
    %826 = vrot.lane.b32.xlu0 %v671, 15
    %v827 = vpop.permute.xlu0 %826
    %828 = vrot.lane.b32.xlu0 %v675, 15
    %v829 = vpop.permute.xlu0 %828
    %830 = vrot.lane.b32.xlu0 %v679, 15
    %v831 = vpop.permute.xlu0 %830
    %832 = vrot.lane.b32.xlu0 %v683, 15
    %v833 = vpop.permute.xlu0 %832
    %834 = vrot.lane.b32.xlu0 %v672, 15
    %v835 = vpop.permute.xlu0 %834
    %836 = vrot.lane.b32.xlu0 %v676, 15
    %v837 = vpop.permute.xlu0 %836
    %838 = vrot.lane.b32.xlu0 %v680, 15
    %v839 = vpop.permute.xlu0 %838
    %840 = vrot.lane.b32.xlu0 %v684, 15
    %v841 = vpop.permute.xlu0 %840
    %842 = vrot.lane.b32.xlu0 %v673, 15
    %v843 = vpop.permute.xlu0 %842
    %844 = vrot.lane.b32.xlu0 %v677, 15
    %v845 = vpop.permute.xlu0 %844
    %846 = vrot.lane.b32.xlu0 %v681, 15
    %v847 = vpop.permute.xlu0 %846
    %848 = vrot.lane.b32.xlu0 %v685, 15
    %v849 = vpop.permute.xlu0 %848
    %vm850 = vcmp.lt.s32.totalorder %v719, 15
    %v851 = vsel %vm850, %v835, %v843
    %v852 = vsel %vm850, %v837, %v845
    %v853 = vsel %vm850, %v839, %v847
    %v854 = vsel %vm850, %v841, %v849
    %v855 = vsel %vm850, %v827, %v835
    %v856 = vsel %vm850, %v829, %v837
    %v857 = vsel %vm850, %v831, %v839
    %v858 = vsel %vm850, %v833, %v841
    %v859 = vsel %vm850, %v819, %v827
    %v860 = vsel %vm850, %v821, %v829
    %v861 = vsel %vm850, %v823, %v831
    %v862 = vsel %vm850, %v825, %v833
    %v863 = vsel %vm850, %v843, %v819
    %v864 = vsel %vm850, %v845, %v821
    %v865 = vsel %vm850, %v847, %v823
    %v866 = vsel %vm850, %v849, %v825
    %v867 = vmul.f32 %v863, %v216
    %v868 = vmul.f32 %v859, %v220
    %v869 = vmul.f32 %v855, %v224
    %v870 = vmul.f32 %v851, %v228
    %v871 = vmul.f32 %v864, %v216
    %v872 = vmul.f32 %v860, %v220
    %v873 = vmul.f32 %v856, %v224
    %v874 = vmul.f32 %v852, %v228
    %v875 = vmul.f32 %v865, %v216
    %v876 = vmul.f32 %v861, %v220
    %v877 = vmul.f32 %v857, %v224
    %v878 = vmul.f32 %v853, %v228
    %v879 = vmul.f32 %v866, %v216
    %v880 = vmul.f32 %v862, %v220
    %v881 = vmul.f32 %v858, %v224
    %v882 = vmul.f32 %v854, %v228
    %883 = vrot.lane.b32.xlu0 %v670, 1
    %v884 = vpop.permute.xlu0 %883
    %885 = vrot.lane.b32.xlu0 %v674, 1
    %v886 = vpop.permute.xlu0 %885
    %887 = vrot.lane.b32.xlu0 %v678, 1
    %v888 = vpop.permute.xlu0 %887
    %889 = vrot.lane.b32.xlu0 %v682, 1
    %v890 = vpop.permute.xlu0 %889
    %891 = vrot.lane.b32.xlu0 %v671, 1
    %v892 = vpop.permute.xlu0 %891
    %893 = vrot.lane.b32.xlu0 %v675, 1
    %v894 = vpop.permute.xlu0 %893
    %895 = vrot.lane.b32.xlu0 %v679, 1
    %v896 = vpop.permute.xlu0 %895
    %897 = vrot.lane.b32.xlu0 %v683, 1
    %v898 = vpop.permute.xlu0 %897
    %899 = vrot.lane.b32.xlu0 %v672, 1
    %v900 = vpop.permute.xlu0 %899
    %901 = vrot.lane.b32.xlu0 %v676, 1
    %v902 = vpop.permute.xlu0 %901
    %903 = vrot.lane.b32.xlu0 %v680, 1
    %v904 = vpop.permute.xlu0 %903
    %905 = vrot.lane.b32.xlu0 %v684, 1
    %v906 = vpop.permute.xlu0 %905
    %907 = vrot.lane.b32.xlu0 %v673, 1
    %v908 = vpop.permute.xlu0 %907
    %909 = vrot.lane.b32.xlu0 %v677, 1
    %v910 = vpop.permute.xlu0 %909
    %911 = vrot.lane.b32.xlu0 %v681, 1
    %v912 = vpop.permute.xlu0 %911
    %913 = vrot.lane.b32.xlu0 %v685, 1
    %v914 = vpop.permute.xlu0 %913
    %vm915 = vcmp.lt.s32.totalorder %v719, 1
    %v916 = vsel %vm915, %v900, %v908
    %v917 = vsel %vm915, %v902, %v910
    %v918 = vsel %vm915, %v904, %v912
    %v919 = vsel %vm915, %v906, %v914
    %v920 = vsel %vm915, %v892, %v900
    %v921 = vsel %vm915, %v894, %v902
    %v922 = vsel %vm915, %v896, %v904
    %v923 = vsel %vm915, %v898, %v906
    %v924 = vsel %vm915, %v884, %v892
    %v925 = vsel %vm915, %v886, %v894
    %v926 = vsel %vm915, %v888, %v896
    %v927 = vsel %vm915, %v890, %v898
    %v928 = vsel %vm915, %v908, %v884
    %v929 = vsel %vm915, %v910, %v886
    %v930 = vsel %vm915, %v912, %v888
    %v931 = vsel %vm915, %v914, %v890
    %v932 = vmul.f32 %v928, %v232
    %v933 = vmul.f32 %v924, %v236
    %v934 = vmul.f32 %v920, %v240
    %v935 = vmul.f32 %v916, %v244
    %v936 = vmul.f32 %v929, %v232
    %v937 = vmul.f32 %v925, %v236
    %v938 = vmul.f32 %v921, %v240
    %v939 = vmul.f32 %v917, %v244
    %v940 = vmul.f32 %v930, %v232
    %v941 = vmul.f32 %v926, %v236
    %v942 = vmul.f32 %v922, %v240
    %v943 = vmul.f32 %v918, %v244
    %v944 = vmul.f32 %v931, %v232
    %v945 = vmul.f32 %v927, %v236
    %v946 = vmul.f32 %v923, %v240
    %v947 = vmul.f32 %v919, %v244
    %v948 = vmul.f32 %v670, %v248
    %v949 = vmul.f32 %v671, %v252
    %v950 = vmul.f32 %v672, %v256
    %v951 = vmul.f32 %v673, %v260
    %v952 = vmul.f32 %v674, %v248
    %v953 = vmul.f32 %v675, %v252
    %v954 = vmul.f32 %v676, %v256
    %v955 = vmul.f32 %v677, %v260
    %v956 = vmul.f32 %v678, %v248
    %v957 = vmul.f32 %v679, %v252
    %v958 = vmul.f32 %v680, %v256
    %v959 = vmul.f32 %v681, %v260
    %v960 = vmul.f32 %v682, %v248
    %v961 = vmul.f32 %v683, %v252
    %v962 = vmul.f32 %v684, %v256
    %v963 = vmul.f32 %v685, %v260
    %964 = vrot.lane.b32.xlu0 %v670, 127
    %v965 = vpop.permute.xlu0 %964
    %966 = vrot.lane.b32.xlu0 %v674, 127
    %v967 = vpop.permute.xlu0 %966
    %968 = vrot.lane.b32.xlu0 %v678, 127
    %v969 = vpop.permute.xlu0 %968
    %970 = vrot.lane.b32.xlu0 %v682, 127
    %v971 = vpop.permute.xlu0 %970
    %972 = vrot.lane.b32.xlu0 %v671, 127
    %v973 = vpop.permute.xlu0 %972
    %974 = vrot.lane.b32.xlu0 %v675, 127
    %v975 = vpop.permute.xlu0 %974
    %976 = vrot.lane.b32.xlu0 %v679, 127
    %v977 = vpop.permute.xlu0 %976
    %978 = vrot.lane.b32.xlu0 %v683, 127
    %v979 = vpop.permute.xlu0 %978
    %980 = vrot.lane.b32.xlu0 %v672, 127
    %v981 = vpop.permute.xlu0 %980
    %982 = vrot.lane.b32.xlu0 %v676, 127
    %v983 = vpop.permute.xlu0 %982
    %984 = vrot.lane.b32.xlu0 %v680, 127
    %v985 = vpop.permute.xlu0 %984
    %986 = vrot.lane.b32.xlu0 %v684, 127
    %v987 = vpop.permute.xlu0 %986
    %988 = vrot.lane.b32.xlu0 %v673, 127
    %v989 = vpop.permute.xlu0 %988
    %990 = vrot.lane.b32.xlu0 %v677, 127
    %v991 = vpop.permute.xlu0 %990
    %992 = vrot.lane.b32.xlu0 %v681, 127
    %v993 = vpop.permute.xlu0 %992
    %994 = vrot.lane.b32.xlu0 %v685, 127
    %v995 = vpop.permute.xlu0 %994
    %vm996 = vcmp.lt.s32.totalorder %v719, 127
    %v997 = vsel %vm996, %v981, %v989
    %v998 = vsel %vm996, %v983, %v991
    %v999 = vsel %vm996, %v985, %v993
    %v1000 = vsel %vm996, %v987, %v995
    %v1001 = vsel %vm996, %v973, %v981
    %v1002 = vsel %vm996, %v975, %v983
    %v1003 = vsel %vm996, %v977, %v985
    %v1004 = vsel %vm996, %v979, %v987
    %v1005 = vsel %vm996, %v965, %v973
    %v1006 = vsel %vm996, %v967, %v975
    %v1007 = vsel %vm996, %v969, %v977
    %v1008 = vsel %vm996, %v971, %v979
    %v1009 = vsel %vm996, %v989, %v965
    %v1010 = vsel %vm996, %v991, %v967
    %v1011 = vsel %vm996, %v993, %v969
    %v1012 = vsel %vm996, %v995, %v971
    %v1013 = vmul.f32 %v1005, %v264
    %v1014 = vmul.f32 %v1001, %v268
    %v1015 = vmul.f32 %v997, %v272
    %v1016 = vmul.f32 %v1009, %v276
    %v1017 = vmul.f32 %v1006, %v264
    %v1018 = vmul.f32 %v1002, %v268
    %v1019 = vmul.f32 %v998, %v272
    %v1020 = vmul.f32 %v1010, %v276
    %v1021 = vmul.f32 %v1007, %v264
    %v1022 = vmul.f32 %v1003, %v268
    %v1023 = vmul.f32 %v999, %v272
    %v1024 = vmul.f32 %v1011, %v276
    %v1025 = vmul.f32 %v1008, %v264
    %v1026 = vmul.f32 %v1004, %v268
    %v1027 = vmul.f32 %v1000, %v272
    %v1028 = vmul.f32 %v1012, %v276
    %1029 = vrot.lane.b32.xlu0 %v670, 113
    %v1030 = vpop.permute.xlu0 %1029
    %1031 = vrot.lane.b32.xlu0 %v674, 113
    %v1032 = vpop.permute.xlu0 %1031
    %1033 = vrot.lane.b32.xlu0 %v678, 113
    %v1034 = vpop.permute.xlu0 %1033
    %1035 = vrot.lane.b32.xlu0 %v682, 113
    %v1036 = vpop.permute.xlu0 %1035
    %1037 = vrot.lane.b32.xlu0 %v671, 113
    %v1038 = vpop.permute.xlu0 %1037
    %1039 = vrot.lane.b32.xlu0 %v675, 113
    %v1040 = vpop.permute.xlu0 %1039
    %1041 = vrot.lane.b32.xlu0 %v679, 113
    %v1042 = vpop.permute.xlu0 %1041
    %1043 = vrot.lane.b32.xlu0 %v683, 113
    %v1044 = vpop.permute.xlu0 %1043
    %1045 = vrot.lane.b32.xlu0 %v672, 113
    %v1046 = vpop.permute.xlu0 %1045
    %1047 = vrot.lane.b32.xlu0 %v676, 113
    %v1048 = vpop.permute.xlu0 %1047
    %1049 = vrot.lane.b32.xlu0 %v680, 113
    %v1050 = vpop.permute.xlu0 %1049
    %1051 = vrot.lane.b32.xlu0 %v684, 113
    %v1052 = vpop.permute.xlu0 %1051
    %1053 = vrot.lane.b32.xlu0 %v673, 113
    %v1054 = vpop.permute.xlu0 %1053
    %1055 = vrot.lane.b32.xlu0 %v677, 113
    %v1056 = vpop.permute.xlu0 %1055
    %1057 = vrot.lane.b32.xlu0 %v681, 113
    %v1058 = vpop.permute.xlu0 %1057
    %1059 = vrot.lane.b32.xlu0 %v685, 113
    %v1060 = vpop.permute.xlu0 %1059
    %vm1061 = vcmp.lt.s32.totalorder %v719, 113
    %v1062 = vsel %vm1061, %v1046, %v1054
    %v1063 = vsel %vm1061, %v1048, %v1056
    %v1064 = vsel %vm1061, %v1050, %v1058
    %v1065 = vsel %vm1061, %v1052, %v1060
    %v1066 = vsel %vm1061, %v1038, %v1046
    %v1067 = vsel %vm1061, %v1040, %v1048
    %v1068 = vsel %vm1061, %v1042, %v1050
    %v1069 = vsel %vm1061, %v1044, %v1052
    %v1070 = vsel %vm1061, %v1030, %v1038
    %v1071 = vsel %vm1061, %v1032, %v1040
    %v1072 = vsel %vm1061, %v1034, %v1042
    %v1073 = vsel %vm1061, %v1036, %v1044
    %v1074 = vsel %vm1061, %v1054, %v1030
    %v1075 = vsel %vm1061, %v1056, %v1032
    %v1076 = vsel %vm1061, %v1058, %v1034
    %v1077 = vsel %vm1061, %v1060, %v1036
    %v1078 = vmul.f32 %v1070, %v280
    %v1079 = vmul.f32 %v1066, %v284
    %v1080 = vmul.f32 %v1062, %v288
    %v1081 = vmul.f32 %v1074, %v292
    %v1082 = vmul.f32 %v1071, %v280
    %v1083 = vmul.f32 %v1067, %v284
    %v1084 = vmul.f32 %v1063, %v288
    %v1085 = vmul.f32 %v1075, %v292
    %v1086 = vmul.f32 %v1072, %v280
    %v1087 = vmul.f32 %v1068, %v284
    %v1088 = vmul.f32 %v1064, %v288
    %v1089 = vmul.f32 %v1076, %v292
    %v1090 = vmul.f32 %v1073, %v280
    %v1091 = vmul.f32 %v1069, %v284
    %v1092 = vmul.f32 %v1065, %v288
    %v1093 = vmul.f32 %v1077, %v292
    %1094 = vrot.lane.b32.xlu0 %v670, 112
    %v1095 = vpop.permute.xlu0 %1094
    %1096 = vrot.lane.b32.xlu0 %v674, 112
    %v1097 = vpop.permute.xlu0 %1096
    %1098 = vrot.lane.b32.xlu0 %v678, 112
    %v1099 = vpop.permute.xlu0 %1098
    %1100 = vrot.lane.b32.xlu0 %v682, 112
    %v1101 = vpop.permute.xlu0 %1100
    %1102 = vrot.lane.b32.xlu0 %v671, 112
    %v1103 = vpop.permute.xlu0 %1102
    %1104 = vrot.lane.b32.xlu0 %v675, 112
    %v1105 = vpop.permute.xlu0 %1104
    %1106 = vrot.lane.b32.xlu0 %v679, 112
    %v1107 = vpop.permute.xlu0 %1106
    %1108 = vrot.lane.b32.xlu0 %v683, 112
    %v1109 = vpop.permute.xlu0 %1108
    %1110 = vrot.lane.b32.xlu0 %v672, 112
    %v1111 = vpop.permute.xlu0 %1110
    %1112 = vrot.lane.b32.xlu0 %v676, 112
    %v1113 = vpop.permute.xlu0 %1112
    %1114 = vrot.lane.b32.xlu0 %v680, 112
    %v1115 = vpop.permute.xlu0 %1114
    %1116 = vrot.lane.b32.xlu0 %v684, 112
    %v1117 = vpop.permute.xlu0 %1116
    %1118 = vrot.lane.b32.xlu0 %v673, 112
    %v1119 = vpop.permute.xlu0 %1118
    %1120 = vrot.lane.b32.xlu0 %v677, 112
    %v1121 = vpop.permute.xlu0 %1120
    %1122 = vrot.lane.b32.xlu0 %v681, 112
    %v1123 = vpop.permute.xlu0 %1122
    %1124 = vrot.lane.b32.xlu0 %v685, 112
    %v1125 = vpop.permute.xlu0 %1124
    %vm1126 = vcmp.lt.s32.totalorder %v719, 112
    %v1127 = vsel %vm1126, %v1111, %v1119
    %v1128 = vsel %vm1126, %v1113, %v1121
    %v1129 = vsel %vm1126, %v1115, %v1123
    %v1130 = vsel %vm1126, %v1117, %v1125
    %v1131 = vsel %vm1126, %v1103, %v1111
    %v1132 = vsel %vm1126, %v1105, %v1113
    %v1133 = vsel %vm1126, %v1107, %v1115
    %v1134 = vsel %vm1126, %v1109, %v1117
    %v1135 = vsel %vm1126, %v1095, %v1103
    %v1136 = vsel %vm1126, %v1097, %v1105
    %v1137 = vsel %vm1126, %v1099, %v1107
    %v1138 = vsel %vm1126, %v1101, %v1109
    %v1139 = vsel %vm1126, %v1119, %v1095
    %v1140 = vsel %vm1126, %v1121, %v1097
    %v1141 = vsel %vm1126, %v1123, %v1099
    %v1142 = vsel %vm1126, %v1125, %v1101
    %v1143 = vmul.f32 %v1135, %v296
    %v1144 = vmul.f32 %v1131, %v300
    %v1145 = vmul.f32 %v1127, %v304
    %v1146 = vmul.f32 %v1139, %v308
    %v1147 = vmul.f32 %v1136, %v296
    %v1148 = vmul.f32 %v1132, %v300
    %v1149 = vmul.f32 %v1128, %v304
    %v1150 = vmul.f32 %v1140, %v308
    %v1151 = vmul.f32 %v1137, %v296
    %v1152 = vmul.f32 %v1133, %v300
    %v1153 = vmul.f32 %v1129, %v304
    %v1154 = vmul.f32 %v1141, %v308
    %v1155 = vmul.f32 %v1138, %v296
    %v1156 = vmul.f32 %v1134, %v300
    %v1157 = vmul.f32 %v1130, %v304
    %v1158 = vmul.f32 %v1142, %v308
    %1159 = vrot.lane.b32.xlu0 %v670, 111
    %v1160 = vpop.permute.xlu0 %1159
    %1161 = vrot.lane.b32.xlu0 %v674, 111
    %v1162 = vpop.permute.xlu0 %1161
    %1163 = vrot.lane.b32.xlu0 %v678, 111
    %v1164 = vpop.permute.xlu0 %1163
    %1165 = vrot.lane.b32.xlu0 %v682, 111
    %v1166 = vpop.permute.xlu0 %1165
    %1167 = vrot.lane.b32.xlu0 %v671, 111
    %v1168 = vpop.permute.xlu0 %1167
    %1169 = vrot.lane.b32.xlu0 %v675, 111
    %v1170 = vpop.permute.xlu0 %1169
    %1171 = vrot.lane.b32.xlu0 %v679, 111
    %v1172 = vpop.permute.xlu0 %1171
    %1173 = vrot.lane.b32.xlu0 %v683, 111
    %v1174 = vpop.permute.xlu0 %1173
    %1175 = vrot.lane.b32.xlu0 %v672, 111
    %v1176 = vpop.permute.xlu0 %1175
    %1177 = vrot.lane.b32.xlu0 %v676, 111
    %v1178 = vpop.permute.xlu0 %1177
    %1179 = vrot.lane.b32.xlu0 %v680, 111
    %v1180 = vpop.permute.xlu0 %1179
    %1181 = vrot.lane.b32.xlu0 %v684, 111
    %v1182 = vpop.permute.xlu0 %1181
    %1183 = vrot.lane.b32.xlu0 %v673, 111
    %v1184 = vpop.permute.xlu0 %1183
    %1185 = vrot.lane.b32.xlu0 %v677, 111
    %v1186 = vpop.permute.xlu0 %1185
    %1187 = vrot.lane.b32.xlu0 %v681, 111
    %v1188 = vpop.permute.xlu0 %1187
    %1189 = vrot.lane.b32.xlu0 %v685, 111
    %v1190 = vpop.permute.xlu0 %1189
    %vm1191 = vcmp.lt.s32.totalorder %v719, 111
    %v1192 = vsel %vm1191, %v1176, %v1184
    %v1193 = vsel %vm1191, %v1178, %v1186
    %v1194 = vsel %vm1191, %v1180, %v1188
    %v1195 = vsel %vm1191, %v1182, %v1190
    %v1196 = vsel %vm1191, %v1168, %v1176
    %v1197 = vsel %vm1191, %v1170, %v1178
    %v1198 = vsel %vm1191, %v1172, %v1180
    %v1199 = vsel %vm1191, %v1174, %v1182
    %v1200 = vsel %vm1191, %v1160, %v1168
    %v1201 = vsel %vm1191, %v1162, %v1170
    %v1202 = vsel %vm1191, %v1164, %v1172
    %v1203 = vsel %vm1191, %v1166, %v1174
    %v1204 = vsel %vm1191, %v1184, %v1160
    %v1205 = vsel %vm1191, %v1186, %v1162
    %v1206 = vsel %vm1191, %v1188, %v1164
    %v1207 = vsel %vm1191, %v1190, %v1166
    %v1208 = vmul.f32 %v1200, %v312
    %v1209 = vmul.f32 %v1196, %v316
    %v1210 = vmul.f32 %v1192, %v320
    %v1211 = vmul.f32 %v1204, %v324
    %v1212 = vmul.f32 %v1201, %v312
    %v1213 = vmul.f32 %v1197, %v316
    %v1214 = vmul.f32 %v1193, %v320
    %v1215 = vmul.f32 %v1205, %v324
    %v1216 = vmul.f32 %v1202, %v312
    %v1217 = vmul.f32 %v1198, %v316
    %v1218 = vmul.f32 %v1194, %v320
    %v1219 = vmul.f32 %v1206, %v324
    %v1220 = vmul.f32 %v1203, %v312
    %v1221 = vmul.f32 %v1199, %v316
    %v1222 = vmul.f32 %v1195, %v320
    %v1223 = vmul.f32 %v1207, %v324
    %v1224 = vpack.c.bf16 %v741, %v737
    %v1225 = vpack.c.bf16 %v742, %v738
    %v1226 = vpack.c.bf16 %v743, %v739
    %v1227 = vpack.c.bf16 %v744, %v740
    %v1228 = vpack.c.bf16 %v749, %v745
    %v1229 = vpack.c.bf16 %v750, %v746
    %v1230 = vpack.c.bf16 %v751, %v747
    %v1231 = vpack.c.bf16 %v752, %v748
    %v1232 = vpack.c.bf16 %v806, %v802
    %v1233 = vpack.c.bf16 %v807, %v803
    %v1234 = vpack.c.bf16 %v808, %v804
    %v1235 = vpack.c.bf16 %v809, %v805
    %v1236 = vpack.c.bf16 %v814, %v810
    %v1237 = vpack.c.bf16 %v815, %v811
    %v1238 = vpack.c.bf16 %v816, %v812
    %v1239 = vpack.c.bf16 %v817, %v813
    %v1240 = vpack.c.bf16 %v871, %v867
    %v1241 = vpack.c.bf16 %v872, %v868
    %v1242 = vpack.c.bf16 %v873, %v869
    %v1243 = vpack.c.bf16 %v874, %v870
    %v1244 = vpack.c.bf16 %v879, %v875
    %v1245 = vpack.c.bf16 %v880, %v876
    %v1246 = vpack.c.bf16 %v881, %v877
    %v1247 = vpack.c.bf16 %v882, %v878
    %v1248 = vpack.c.bf16 %v936, %v932
    %v1249 = vpack.c.bf16 %v937, %v933
    %v1250 = vpack.c.bf16 %v938, %v934
    %v1251 = vpack.c.bf16 %v939, %v935
    %v1252 = vpack.c.bf16 %v944, %v940
    %v1253 = vpack.c.bf16 %v945, %v941
    %v1254 = vpack.c.bf16 %v946, %v942
    %v1255 = vpack.c.bf16 %v947, %v943
    %v1256 = vpack.c.bf16 %v952, %v948
    %v1257 = vpack.c.bf16 %v953, %v949
    %v1258 = vpack.c.bf16 %v954, %v950
    %v1259 = vpack.c.bf16 %v955, %v951
    %v1260 = vpack.c.bf16 %v960, %v956
    %v1261 = vpack.c.bf16 %v961, %v957
    %v1262 = vpack.c.bf16 %v962, %v958
    %v1263 = vpack.c.bf16 %v963, %v959
    %v1264 = vpack.c.bf16 %v1017, %v1013
    %v1265 = vpack.c.bf16 %v1018, %v1014
    %v1266 = vpack.c.bf16 %v1019, %v1015
    %v1267 = vpack.c.bf16 %v1020, %v1016
    %v1268 = vpack.c.bf16 %v1025, %v1021
    %v1269 = vpack.c.bf16 %v1026, %v1022
    %v1270 = vpack.c.bf16 %v1027, %v1023
    %v1271 = vpack.c.bf16 %v1028, %v1024
    %v1272 = vpack.c.bf16 %v1082, %v1078
    %v1273 = vpack.c.bf16 %v1083, %v1079
    %v1274 = vpack.c.bf16 %v1084, %v1080
    %v1275 = vpack.c.bf16 %v1085, %v1081
    %v1276 = vpack.c.bf16 %v1090, %v1086
    %v1277 = vpack.c.bf16 %v1091, %v1087
    %v1278 = vpack.c.bf16 %v1092, %v1088
    %v1279 = vpack.c.bf16 %v1093, %v1089
    %v1280 = vpack.c.bf16 %v1147, %v1143
    %v1281 = vpack.c.bf16 %v1148, %v1144
    %v1282 = vpack.c.bf16 %v1149, %v1145
    %v1283 = vpack.c.bf16 %v1150, %v1146
    %v1284 = vpack.c.bf16 %v1155, %v1151
    %v1285 = vpack.c.bf16 %v1156, %v1152
    %v1286 = vpack.c.bf16 %v1157, %v1153
    %v1287 = vpack.c.bf16 %v1158, %v1154
    %v1288 = vpack.c.bf16 %v1212, %v1208
    %v1289 = vpack.c.bf16 %v1213, %v1209
    %v1290 = vpack.c.bf16 %v1214, %v1210
    %v1291 = vpack.c.bf16 %v1215, %v1211
    %v1292 = vpack.c.bf16 %v1220, %v1216
    %v1293 = vpack.c.bf16 %v1221, %v1217
    %v1294 = vpack.c.bf16 %v1222, %v1218
    %v1295 = vpack.c.bf16 %v1223, %v1219
    %v1296 = vld [vmem:[#allocation10] sm:$0xff]
    %v1297 = vld [vmem:[#allocation10 + $0x8] sm:$0xf]
    %v1298 = vld [vmem:[#allocation10 + $0xc] sm:$0xff]
    %v1299 = vld [vmem:[#allocation10 + $0x14] sm:$0xf]
    %v1300 = vld [vmem:[#allocation10 + $0x18] sm:$0xff]
    %v1301 = vld [vmem:[#allocation10 + $0x20] sm:$0xf]
    %v1302 = vld [vmem:[#allocation10 + $0x24] sm:$0xff]
    %v1303 = vld [vmem:[#allocation10 + $0x2c] sm:$0xf]
    %v1304 = vld [vmem:[%s7] sm:$0xff]
    %v1305 = vld [vmem:[%s7 + $0x8] sm:$0xff]
    %v1306 = vld [vmem:[%s7 + $0x10] sm:$0xff]
    %v1307 = vld [vmem:[%s7 + $0x18] sm:$0xff]
    %1309 = vset.pattern.permute.xlu0 0
    %1310 = vperm.xlu0 %1309, %v1304
    %v1311 = vpop.permute.xlu0 %1310
    %1314 = vset.pattern.permute.xlu0 0
    %1315 = vperm.xlu0 %1314, %v1305
    %v1316 = vpop.permute.xlu0 %1315
    %1319 = vset.pattern.permute.xlu0 0
    %1320 = vperm.xlu0 %1319, %v1306
    %v1321 = vpop.permute.xlu0 %1320
    %1324 = vset.pattern.permute.xlu0 0
    %1325 = vperm.xlu0 %1324, %v1307
    %v1326 = vpop.permute.xlu0 %1325
    %v1336 = vunpack.c.l.b16 %v1296
    %v1337 = vunpack.c.h.b16 %v1296
    %v1338 = vunpack.c.l.b16 %v1297
    %v1339 = vunpack.c.l.b16 %v1298
    %v1340 = vunpack.c.h.b16 %v1298
    %v1341 = vunpack.c.l.b16 %v1299
    %v1342 = vunpack.c.l.b16 %v1300
    %v1343 = vunpack.c.h.b16 %v1300
    %v1344 = vunpack.c.l.b16 %v1301
    %v1345 = vunpack.c.l.b16 %v1302
    %v1346 = vunpack.c.h.b16 %v1302
    %v1347 = vunpack.c.l.b16 %v1303
    %v1348 = vpack.c.b16 %v1339, %v1336
    %v1349 = vpack.c.b16 %v1340, %v1337
    %v1350 = vpack.c.b16 %v1341, %v1338
    %v1351 = vpack.c.b16 %v1345, %v1342
    %v1352 = vpack.c.b16 %v1346, %v1343
    %v1353 = vpack.c.b16 %v1347, %v1344
    %v1359 = vsel %vm347, %v1350, 0
    %v1362 = vsel %vm347, %v1353, 0
    %1364 = vmatprep.subr.bf16.mxu0 %v1225
    %1365 = vmatpush1.bf16.msra.mxu0 %v1224
    %1366 = vmatprep.subr.bf16.mxu0 %v1229
    %1367 = vmatpush1.bf16.msra.mxu0 %v1228
    %1368 = vmatprep.subr.bf16.mxu0 %v1233
    %1369 = vmatpush1.bf16.msra.mxu0 %v1232
    %1370 = vmatprep.subr.bf16.mxu0 %v1237
    %1371 = vmatpush1.bf16.msra.mxu0 %v1236
    %1372 = vmatprep.subr.bf16.mxu0 %v1241
    %1373 = vmatpush1.bf16.msra.mxu0 %v1240
    %1374 = vmatprep.subr.bf16.mxu0 %v1245
    %1375 = vmatpush1.bf16.msra.mxu0 %v1244
    %1376 = vmatprep.subr.bf16.mxu0 %v1249
    %1377 = vmatpush1.bf16.msra.mxu0 %v1248
    %1378 = vmatprep.subr.bf16.mxu0 %v1253
    %1379 = vmatpush1.bf16.msra.mxu0 %v1252
    %1380 = vmatprep.subr.bf16.mxu0 %v1257
    %1381 = vmatpush1.bf16.msra.mxu0 %v1256
    %1382 = vmatprep.subr.bf16.mxu0 %v1261
    %1383 = vmatpush1.bf16.msra.mxu0 %v1260
    %1384 = vmatprep.subr.bf16.mxu0 %v1265
    %1385 = vmatpush1.bf16.msra.mxu0 %v1264
    %1386 = vmatprep.subr.bf16.mxu0 %v1269
    %1387 = vmatpush1.bf16.msra.mxu0 %v1268
    %1388 = vmatprep.subr.bf16.mxu0 %v1273
    %1389 = vmatpush1.bf16.msra.mxu0 %v1272
    %1390 = vmatprep.subr.bf16.mxu0 %v1277
    %1391 = vmatpush1.bf16.msra.mxu0 %v1276
    %1392 = vmatprep.subr.bf16.mxu0 %v1281
    %1393 = vmatpush1.bf16.msra.mxu0 %v1280
    %1394 = vmatprep.subr.bf16.mxu0 %v1285
    %1395 = vmatpush1.bf16.msra.mxu0 %v1284
    %1396 = vmatprep.mubr.bf16.mxu0 %v1349
    %1397 = vmatmul.mubr.bf16.gmra.mrb[0].mxu0 %v1348
    %v1398 = vpop.f32.mrb[0].mxu0
    %v1399 = vadd.f32 %v1311, %v1398
    %v1400 = vpop.f32.mrb[0].mxu0
    %v1401 = vadd.f32 %v1311, %v1400
    %v1402 = vpop.f32.mrb[0].mxu0
    %v1403 = vadd.f32 %v1316, %v1402
    %v1404 = vpop.f32.mrb[0].mxu0
    %v1405 = vadd.f32 %v1316, %v1404
    %1406 = vmatprep.mubr.bf16.mxu0 %v1352
    %1407 = vmatmul.mubr.bf16.gmra.mrb[0].mxu0 %v1351
    %v1408 = vpop.f32.mrb[0].mxu0
    %v1409 = vadd.f32 %v1321, %v1408
    %v1410 = vpop.f32.mrb[0].mxu0
    %v1411 = vadd.f32 %v1321, %v1410
    %v1412 = vpop.f32.mrb[0].mxu0
    %v1413 = vadd.f32 %v1326, %v1412
    %v1414 = vpop.f32.mrb[0].mxu0
    %v1415 = vadd.f32 %v1326, %v1414
    %1416 = vdwg.mxu0
    %1417 = vmatprep.subr.bf16.mxu0 %v1289
    %1418 = vmatpush1.bf16.msra.mxu0 %v1288
    %1419 = vmatprep.subr.bf16.mxu0 %v1293
    %1420 = vmatpush1.bf16.msra.mxu0 %v1292
    %1421 = vmatprep.subr.bf16.mxu0 0
    %1422 = vmatpush1.bf16.msra.mxu0 0
    %1423 = vmatprep.subr.bf16.mxu0 0
    %1424 = vmatpush1.bf16.msra.mxu0 0
    %1425 = vmatprep.subr.bf16.mxu0 0
    %1426 = vmatpush1.bf16.msra.mxu0 0
    %1427 = vmatprep.subr.bf16.mxu0 0
    %1428 = vmatpush1.bf16.msra.mxu0 0
    %1429 = vmatprep.subr.bf16.mxu0 0
    %1430 = vmatpush1.bf16.msra.mxu0 0
    %1431 = vmatprep.subr.bf16.mxu0 0
    %1432 = vmatpush1.bf16.msra.mxu0 0
    %1433 = vmatprep.subr.bf16.mxu0 0
    %1434 = vmatpush1.bf16.msra.mxu0 0
    %1435 = vmatprep.subr.bf16.mxu0 0
    %1436 = vmatpush1.bf16.msra.mxu0 0
    %1437 = vmatprep.subr.bf16.mxu0 0
    %1438 = vmatpush1.bf16.msra.mxu0 0
    %1439 = vmatprep.subr.bf16.mxu0 0
    %1440 = vmatpush1.bf16.msra.mxu0 0
    %1441 = vmatprep.subr.bf16.mxu0 0
    %1442 = vmatpush1.bf16.msra.mxu0 0
    %1443 = vmatprep.subr.bf16.mxu0 0
    %1444 = vmatpush1.bf16.msra.mxu0 0
    %1445 = vmatprep.subr.bf16.mxu0 0
    %1446 = vmatpush1.bf16.msra.mxu0 0
    %1447 = vmatprep.subr.bf16.mxu0 0
    %1448 = vmatpush1.bf16.msra.mxu0 0
    %1449 = vmatprep.mubr.bf16.mxu0 0
    %1450 = vmatmul.mubr.bf16.gmra.mrb[0].mxu0 %v1359
    %v1451 = vpop.f32.mrb[0].mxu0
    %v1452 = vadd.f32 %v1399, %v1451
    %v1453 = vpop.f32.mrb[0].mxu0
    %v1454 = vadd.f32 %v1401, %v1453
    %v1455 = vpop.f32.mrb[0].mxu0
    %v1456 = vadd.f32 %v1403, %v1455
    %v1457 = vpop.f32.mrb[0].mxu0
    %v1458 = vadd.f32 %v1405, %v1457
    %1459 = vmatprep.mubr.bf16.mxu0 0
    %1460 = vmatmul.mubr.bf16.gmra.mrb[0].mxu0 %v1362
    %v1461 = vpop.f32.mrb[0].mxu0
    %v1462 = vadd.f32 %v1409, %v1461
    %v1463 = vpop.f32.mrb[0].mxu0
    %v1464 = vadd.f32 %v1411, %v1463
    %v1465 = vpop.f32.mrb[0].mxu0
    %v1466 = vadd.f32 %v1413, %v1465
    %v1467 = vpop.f32.mrb[0].mxu0
    %v1468 = vadd.f32 %v1415, %v1467
    %1469 = vdwg.mxu0
    %1470 = vmatprep.subr.bf16.mxu0 %v1227
    %1471 = vmatpush1.bf16.msra.mxu0 %v1226
    %1472 = vmatprep.subr.bf16.mxu0 %v1231
    %1473 = vmatpush1.bf16.msra.mxu0 %v1230
    %1474 = vmatprep.subr.bf16.mxu0 %v1235
    %1475 = vmatpush1.bf16.msra.mxu0 %v1234
    %1476 = vmatprep.subr.bf16.mxu0 %v1239
    %1477 = vmatpush1.bf16.msra.mxu0 %v1238
    %1478 = vmatprep.subr.bf16.mxu0 %v1243
    %1479 = vmatpush1.bf16.msra.mxu0 %v1242
    %1480 = vmatprep.subr.bf16.mxu0 %v1247
    %1481 = vmatpush1.bf16.msra.mxu0 %v1246
    %1482 = vmatprep.subr.bf16.mxu0 %v1251
    %1483 = vmatpush1.bf16.msra.mxu0 %v1250
    %1484 = vmatprep.subr.bf16.mxu0 %v1255
    %1485 = vmatpush1.bf16.msra.mxu0 %v1254
    %1486 = vmatprep.subr.bf16.mxu0 %v1259
    %1487 = vmatpush1.bf16.msra.mxu0 %v1258
    %1488 = vmatprep.subr.bf16.mxu0 %v1263
    %1489 = vmatpush1.bf16.msra.mxu0 %v1262
    %1490 = vmatprep.subr.bf16.mxu0 %v1267
    %1491 = vmatpush1.bf16.msra.mxu0 %v1266
    %1492 = vmatprep.subr.bf16.mxu0 %v1271
    %1493 = vmatpush1.bf16.msra.mxu0 %v1270
    %1494 = vmatprep.subr.bf16.mxu0 %v1275
    %1495 = vmatpush1.bf16.msra.mxu0 %v1274
    %1496 = vmatprep.subr.bf16.mxu0 %v1279
    %1497 = vmatpush1.bf16.msra.mxu0 %v1278
    %1498 = vmatprep.subr.bf16.mxu0 %v1283
    %1499 = vmatpush1.bf16.msra.mxu0 %v1282
    %1500 = vmatprep.subr.bf16.mxu0 %v1287
    %1501 = vmatpush1.bf16.msra.mxu0 %v1286
    %1502 = vmatprep.mubr.bf16.mxu0 %v1349
    %1503 = vmatmul.mubr.bf16.gmra.mrb[0].mxu0 %v1348
    %v1504 = vpop.f32.mrb[0].mxu0
    %v1505 = vadd.f32 %v1311, %v1504
    %v1506 = vpop.f32.mrb[0].mxu0
    %v1507 = vadd.f32 %v1311, %v1506
    %v1508 = vpop.f32.mrb[0].mxu0
    %v1509 = vadd.f32 %v1316, %v1508
    %v1510 = vpop.f32.mrb[0].mxu0
    %v1511 = vadd.f32 %v1316, %v1510
    %1512 = vmatprep.mubr.bf16.mxu0 %v1352
    %1513 = vmatmul.mubr.bf16.gmra.mrb[0].mxu0 %v1351
    %v1514 = vpop.f32.mrb[0].mxu0
    %v1515 = vadd.f32 %v1321, %v1514
    %v1516 = vpop.f32.mrb[0].mxu0
    %v1517 = vadd.f32 %v1321, %v1516
    %v1518 = vpop.f32.mrb[0].mxu0
    %v1519 = vadd.f32 %v1326, %v1518
    %v1520 = vpop.f32.mrb[0].mxu0
    %v1521 = vadd.f32 %v1326, %v1520
    %1522 = vdwg.mxu0
    %1523 = vmatprep.subr.bf16.mxu0 %v1291
    %1524 = vmatpush1.bf16.msra.mxu0 %v1290
    %1525 = vmatprep.subr.bf16.mxu0 %v1295
    %1526 = vmatpush1.bf16.msra.mxu0 %v1294
    %1527 = vmatprep.subr.bf16.mxu0 0
    %1528 = vmatpush1.bf16.msra.mxu0 0
    %1529 = vmatprep.subr.bf16.mxu0 0
    %1530 = vmatpush1.bf16.msra.mxu0 0
    %1531 = vmatprep.subr.bf16.mxu0 0
    %1532 = vmatpush1.bf16.msra.mxu0 0
    %1533 = vmatprep.subr.bf16.mxu0 0
    %1534 = vmatpush1.bf16.msra.mxu0 0
    %1535 = vmatprep.subr.bf16.mxu0 0
    %1536 = vmatpush1.bf16.msra.mxu0 0
    %1537 = vmatprep.subr.bf16.mxu0 0
    %1538 = vmatpush1.bf16.msra.mxu0 0
    %1539 = vmatprep.subr.bf16.mxu0 0
    %1540 = vmatpush1.bf16.msra.mxu0 0
    %1541 = vmatprep.subr.bf16.mxu0 0
    %1542 = vmatpush1.bf16.msra.mxu0 0
    %1543 = vmatprep.subr.bf16.mxu0 0
    %1544 = vmatpush1.bf16.msra.mxu0 0
    %1545 = vmatprep.subr.bf16.mxu0 0
    %1546 = vmatpush1.bf16.msra.mxu0 0
    %1547 = vmatprep.subr.bf16.mxu0 0
    %1548 = vmatpush1.bf16.msra.mxu0 0
    %1549 = vmatprep.subr.bf16.mxu0 0
    %1550 = vmatpush1.bf16.msra.mxu0 0
    %1551 = vmatprep.subr.bf16.mxu0 0
    %1552 = vmatpush1.bf16.msra.mxu0 0
    %1553 = vmatprep.subr.bf16.mxu0 0
    %1554 = vmatpush1.bf16.msra.mxu0 0
    %1555 = vmatprep.mubr.bf16.mxu0 0
    %1556 = vmatmul.mubr.bf16.gmra.mrb[0].mxu0 %v1359
    %v1557 = vpop.f32.mrb[0].mxu0
    %v1558 = vadd.f32 %v1505, %v1557
    %v1559 = vpop.f32.mrb[0].mxu0
    %v1560 = vadd.f32 %v1507, %v1559
    %v1561 = vpop.f32.mrb[0].mxu0
    %v1562 = vadd.f32 %v1509, %v1561
    %v1563 = vpop.f32.mrb[0].mxu0
    %v1564 = vadd.f32 %v1511, %v1563
    %1565 = vmatprep.mubr.bf16.mxu0 0
    %1566 = vmatmul.mubr.bf16.gmra.mrb[0].mxu0 %v1362
    %v1567 = vpop.f32.mrb[0].mxu0
    %v1568 = vadd.f32 %v1515, %v1567
    %v1569 = vpop.f32.mrb[0].mxu0
    %v1570 = vadd.f32 %v1517, %v1569
    %v1571 = vpop.f32.mrb[0].mxu0
    %v1572 = vadd.f32 %v1519, %v1571
    %v1573 = vpop.f32.mrb[0].mxu0
    %v1574 = vadd.f32 %v1521, %v1573
    %1575 = vdwg.mxu0
    %v1576 = vmax.f32 %v1452, 0.0
    %v1577 = vmax.f32 %v1454, 0.0
    %v1578 = vmax.f32 %v1558, 0.0
    %v1579 = vmax.f32 %v1560, 0.0
    %v1580 = vmax.f32 %v1456, 0.0
    %v1581 = vmax.f32 %v1458, 0.0
    %v1582 = vmax.f32 %v1562, 0.0
    %v1583 = vmax.f32 %v1564, 0.0
    %v1584 = vmax.f32 %v1462, 0.0
    %v1585 = vmax.f32 %v1464, 0.0
    %v1586 = vmax.f32 %v1568, 0.0
    %v1587 = vmax.f32 %v1570, 0.0
    %v1588 = vmax.f32 %v1466, 0.0
    %v1589 = vmax.f32 %v1468, 0.0
    %v1590 = vmax.f32 %v1572, 0.0
    %v1591 = vmax.f32 %v1574, 0.0
    %1592 = vrot.lane.b32.xlu0 %v1576, 17
    %v1593 = vpop.permute.xlu0 %1592
    %1594 = vrot.lane.b32.xlu0 %v1580, 17
    %v1595 = vpop.permute.xlu0 %1594
    %1596 = vrot.lane.b32.xlu0 %v1584, 17
    %v1597 = vpop.permute.xlu0 %1596
    %1598 = vrot.lane.b32.xlu0 %v1588, 17
    %v1599 = vpop.permute.xlu0 %1598
    %1600 = vrot.lane.b32.xlu0 %v1577, 17
    %v1601 = vpop.permute.xlu0 %1600
    %1602 = vrot.lane.b32.xlu0 %v1581, 17
    %v1603 = vpop.permute.xlu0 %1602
    %1604 = vrot.lane.b32.xlu0 %v1585, 17
    %v1605 = vpop.permute.xlu0 %1604
    %1606 = vrot.lane.b32.xlu0 %v1589, 17
    %v1607 = vpop.permute.xlu0 %1606
    %1608 = vrot.lane.b32.xlu0 %v1578, 17
    %v1609 = vpop.permute.xlu0 %1608
    %1610 = vrot.lane.b32.xlu0 %v1582, 17
    %v1611 = vpop.permute.xlu0 %1610
    %1612 = vrot.lane.b32.xlu0 %v1586, 17
    %v1613 = vpop.permute.xlu0 %1612
    %1614 = vrot.lane.b32.xlu0 %v1590, 17
    %v1615 = vpop.permute.xlu0 %1614
    %1616 = vrot.lane.b32.xlu0 %v1579, 17
    %v1617 = vpop.permute.xlu0 %1616
    %1618 = vrot.lane.b32.xlu0 %v1583, 17
    %v1619 = vpop.permute.xlu0 %1618
    %1620 = vrot.lane.b32.xlu0 %v1587, 17
    %v1621 = vpop.permute.xlu0 %1620
    %1622 = vrot.lane.b32.xlu0 %v1591, 17
    %v1623 = vpop.permute.xlu0 %1622
    %v1624 = vsel %vm720, %v1609, %v1617
    %v1625 = vsel %vm720, %v1611, %v1619
    %v1626 = vsel %vm720, %v1613, %v1621
    %v1627 = vsel %vm720, %v1615, %v1623
    %v1628 = vsel %vm720, %v1601, %v1609
    %v1629 = vsel %vm720, %v1603, %v1611
    %v1630 = vsel %vm720, %v1605, %v1613
    %v1631 = vsel %vm720, %v1607, %v1615
    %v1632 = vsel %vm720, %v1593, %v1601
    %v1633 = vsel %vm720, %v1595, %v1603
    %v1634 = vsel %vm720, %v1597, %v1605
    %v1635 = vsel %vm720, %v1599, %v1607
    %v1636 = vsel %vm720, %v1617, %v1593
    %v1637 = vsel %vm720, %v1619, %v1595
    %v1638 = vsel %vm720, %v1621, %v1597
    %v1639 = vsel %vm720, %v1623, %v1599
    %v1640 = vmul.f32 %v1636, %v184
    %v1641 = vmul.f32 %v1632, %v188
    %v1642 = vmul.f32 %v1628, %v192
    %v1643 = vmul.f32 %v1624, %v196
    %v1644 = vmul.f32 %v1637, %v184
    %v1645 = vmul.f32 %v1633, %v188
    %v1646 = vmul.f32 %v1629, %v192
    %v1647 = vmul.f32 %v1625, %v196
    %v1648 = vmul.f32 %v1638, %v184
    %v1649 = vmul.f32 %v1634, %v188
    %v1650 = vmul.f32 %v1630, %v192
    %v1651 = vmul.f32 %v1626, %v196
    %v1652 = vmul.f32 %v1639, %v184
    %v1653 = vmul.f32 %v1635, %v188
    %v1654 = vmul.f32 %v1631, %v192
    %v1655 = vmul.f32 %v1627, %v196
    %1656 = vrot.lane.b32.xlu0 %v1576, 16
    %v1657 = vpop.permute.xlu0 %1656
    %1658 = vrot.lane.b32.xlu0 %v1580, 16
    %v1659 = vpop.permute.xlu0 %1658
    %1660 = vrot.lane.b32.xlu0 %v1584, 16
    %v1661 = vpop.permute.xlu0 %1660
    %1662 = vrot.lane.b32.xlu0 %v1588, 16
    %v1663 = vpop.permute.xlu0 %1662
    %1664 = vrot.lane.b32.xlu0 %v1577, 16
    %v1665 = vpop.permute.xlu0 %1664
    %1666 = vrot.lane.b32.xlu0 %v1581, 16
    %v1667 = vpop.permute.xlu0 %1666
    %1668 = vrot.lane.b32.xlu0 %v1585, 16
    %v1669 = vpop.permute.xlu0 %1668
    %1670 = vrot.lane.b32.xlu0 %v1589, 16
    %v1671 = vpop.permute.xlu0 %1670
    %1672 = vrot.lane.b32.xlu0 %v1578, 16
    %v1673 = vpop.permute.xlu0 %1672
    %1674 = vrot.lane.b32.xlu0 %v1582, 16
    %v1675 = vpop.permute.xlu0 %1674
    %1676 = vrot.lane.b32.xlu0 %v1586, 16
    %v1677 = vpop.permute.xlu0 %1676
    %1678 = vrot.lane.b32.xlu0 %v1590, 16
    %v1679 = vpop.permute.xlu0 %1678
    %1680 = vrot.lane.b32.xlu0 %v1579, 16
    %v1681 = vpop.permute.xlu0 %1680
    %1682 = vrot.lane.b32.xlu0 %v1583, 16
    %v1683 = vpop.permute.xlu0 %1682
    %1684 = vrot.lane.b32.xlu0 %v1587, 16
    %v1685 = vpop.permute.xlu0 %1684
    %1686 = vrot.lane.b32.xlu0 %v1591, 16
    %v1687 = vpop.permute.xlu0 %1686
    %v1688 = vsel %vm785, %v1673, %v1681
    %v1689 = vsel %vm785, %v1675, %v1683
    %v1690 = vsel %vm785, %v1677, %v1685
    %v1691 = vsel %vm785, %v1679, %v1687
    %v1692 = vsel %vm785, %v1665, %v1673
    %v1693 = vsel %vm785, %v1667, %v1675
    %v1694 = vsel %vm785, %v1669, %v1677
    %v1695 = vsel %vm785, %v1671, %v1679
    %v1696 = vsel %vm785, %v1657, %v1665
    %v1697 = vsel %vm785, %v1659, %v1667
    %v1698 = vsel %vm785, %v1661, %v1669
    %v1699 = vsel %vm785, %v1663, %v1671
    %v1700 = vsel %vm785, %v1681, %v1657
    %v1701 = vsel %vm785, %v1683, %v1659
    %v1702 = vsel %vm785, %v1685, %v1661
    %v1703 = vsel %vm785, %v1687, %v1663
    %v1704 = vmul.f32 %v1700, %v200
    %v1705 = vmul.f32 %v1696, %v204
    %v1706 = vmul.f32 %v1692, %v208
    %v1707 = vmul.f32 %v1688, %v212
    %v1708 = vmul.f32 %v1701, %v200
    %v1709 = vmul.f32 %v1697, %v204
    %v1710 = vmul.f32 %v1693, %v208
    %v1711 = vmul.f32 %v1689, %v212
    %v1712 = vmul.f32 %v1702, %v200
    %v1713 = vmul.f32 %v1698, %v204
    %v1714 = vmul.f32 %v1694, %v208
    %v1715 = vmul.f32 %v1690, %v212
    %v1716 = vmul.f32 %v1703, %v200
    %v1717 = vmul.f32 %v1699, %v204
    %v1718 = vmul.f32 %v1695, %v208
    %v1719 = vmul.f32 %v1691, %v212
    %1720 = vrot.lane.b32.xlu0 %v1576, 15
    %v1721 = vpop.permute.xlu0 %1720
    %1722 = vrot.lane.b32.xlu0 %v1580, 15
    %v1723 = vpop.permute.xlu0 %1722
    %1724 = vrot.lane.b32.xlu0 %v1584, 15
    %v1725 = vpop.permute.xlu0 %1724
    %1726 = vrot.lane.b32.xlu0 %v1588, 15
    %v1727 = vpop.permute.xlu0 %1726
    %1728 = vrot.lane.b32.xlu0 %v1577, 15
    %v1729 = vpop.permute.xlu0 %1728
    %1730 = vrot.lane.b32.xlu0 %v1581, 15
    %v1731 = vpop.permute.xlu0 %1730
    %1732 = vrot.lane.b32.xlu0 %v1585, 15
    %v1733 = vpop.permute.xlu0 %1732
    %1734 = vrot.lane.b32.xlu0 %v1589, 15
    %v1735 = vpop.permute.xlu0 %1734
    %1736 = vrot.lane.b32.xlu0 %v1578, 15
    %v1737 = vpop.permute.xlu0 %1736
    %1738 = vrot.lane.b32.xlu0 %v1582, 15
    %v1739 = vpop.permute.xlu0 %1738
    %1740 = vrot.lane.b32.xlu0 %v1586, 15
    %v1741 = vpop.permute.xlu0 %1740
    %1742 = vrot.lane.b32.xlu0 %v1590, 15
    %v1743 = vpop.permute.xlu0 %1742
    %1744 = vrot.lane.b32.xlu0 %v1579, 15
    %v1745 = vpop.permute.xlu0 %1744
    %1746 = vrot.lane.b32.xlu0 %v1583, 15
    %v1747 = vpop.permute.xlu0 %1746
    %1748 = vrot.lane.b32.xlu0 %v1587, 15
    %v1749 = vpop.permute.xlu0 %1748
    %1750 = vrot.lane.b32.xlu0 %v1591, 15
    %v1751 = vpop.permute.xlu0 %1750
    %v1752 = vsel %vm850, %v1737, %v1745
    %v1753 = vsel %vm850, %v1739, %v1747
    %v1754 = vsel %vm850, %v1741, %v1749
    %v1755 = vsel %vm850, %v1743, %v1751
    %v1756 = vsel %vm850, %v1729, %v1737
    %v1757 = vsel %vm850, %v1731, %v1739
    %v1758 = vsel %vm850, %v1733, %v1741
    %v1759 = vsel %vm850, %v1735, %v1743
    %v1760 = vsel %vm850, %v1721, %v1729
    %v1761 = vsel %vm850, %v1723, %v1731
    %v1762 = vsel %vm850, %v1725, %v1733
    %v1763 = vsel %vm850, %v1727, %v1735
    %v1764 = vsel %vm850, %v1745, %v1721
    %v1765 = vsel %vm850, %v1747, %v1723
    %v1766 = vsel %vm850, %v1749, %v1725
    %v1767 = vsel %vm850, %v1751, %v1727
    %v1768 = vmul.f32 %v1764, %v216
    %v1769 = vmul.f32 %v1760, %v220
    %v1770 = vmul.f32 %v1756, %v224
    %v1771 = vmul.f32 %v1752, %v228
    %v1772 = vmul.f32 %v1765, %v216
    %v1773 = vmul.f32 %v1761, %v220
    %v1774 = vmul.f32 %v1757, %v224
    %v1775 = vmul.f32 %v1753, %v228
    %v1776 = vmul.f32 %v1766, %v216
    %v1777 = vmul.f32 %v1762, %v220
    %v1778 = vmul.f32 %v1758, %v224
    %v1779 = vmul.f32 %v1754, %v228
    %v1780 = vmul.f32 %v1767, %v216
    %v1781 = vmul.f32 %v1763, %v220
    %v1782 = vmul.f32 %v1759, %v224
    %v1783 = vmul.f32 %v1755, %v228
    %1784 = vrot.lane.b32.xlu0 %v1576, 1
    %v1785 = vpop.permute.xlu0 %1784
    %1786 = vrot.lane.b32.xlu0 %v1580, 1
    %v1787 = vpop.permute.xlu0 %1786
    %1788 = vrot.lane.b32.xlu0 %v1584, 1
    %v1789 = vpop.permute.xlu0 %1788
    %1790 = vrot.lane.b32.xlu0 %v1588, 1
    %v1791 = vpop.permute.xlu0 %1790
    %1792 = vrot.lane.b32.xlu0 %v1577, 1
    %v1793 = vpop.permute.xlu0 %1792
    %1794 = vrot.lane.b32.xlu0 %v1581, 1
    %v1795 = vpop.permute.xlu0 %1794
    %1796 = vrot.lane.b32.xlu0 %v1585, 1
    %v1797 = vpop.permute.xlu0 %1796
    %1798 = vrot.lane.b32.xlu0 %v1589, 1
    %v1799 = vpop.permute.xlu0 %1798
    %1800 = vrot.lane.b32.xlu0 %v1578, 1
    %v1801 = vpop.permute.xlu0 %1800
    %1802 = vrot.lane.b32.xlu0 %v1582, 1
    %v1803 = vpop.permute.xlu0 %1802
    %1804 = vrot.lane.b32.xlu0 %v1586, 1
    %v1805 = vpop.permute.xlu0 %1804
    %1806 = vrot.lane.b32.xlu0 %v1590, 1
    %v1807 = vpop.permute.xlu0 %1806
    %1808 = vrot.lane.b32.xlu0 %v1579, 1
    %v1809 = vpop.permute.xlu0 %1808
    %1810 = vrot.lane.b32.xlu0 %v1583, 1
    %v1811 = vpop.permute.xlu0 %1810
    %1812 = vrot.lane.b32.xlu0 %v1587, 1
    %v1813 = vpop.permute.xlu0 %1812
    %1814 = vrot.lane.b32.xlu0 %v1591, 1
    %v1815 = vpop.permute.xlu0 %1814
    %v1816 = vsel %vm915, %v1801, %v1809
    %v1817 = vsel %vm915, %v1803, %v1811
    %v1818 = vsel %vm915, %v1805, %v1813
    %v1819 = vsel %vm915, %v1807, %v1815
    %v1820 = vsel %vm915, %v1793, %v1801
    %v1821 = vsel %vm915, %v1795, %v1803
    %v1822 = vsel %vm915, %v1797, %v1805
    %v1823 = vsel %vm915, %v1799, %v1807
    %v1824 = vsel %vm915, %v1785, %v1793
    %v1825 = vsel %vm915, %v1787, %v1795
    %v1826 = vsel %vm915, %v1789, %v1797
    %v1827 = vsel %vm915, %v1791, %v1799
    %v1828 = vsel %vm915, %v1809, %v1785
    %v1829 = vsel %vm915, %v1811, %v1787
    %v1830 = vsel %vm915, %v1813, %v1789
    %v1831 = vsel %vm915, %v1815, %v1791
    %v1832 = vmul.f32 %v1828, %v232
    %v1833 = vmul.f32 %v1824, %v236
    %v1834 = vmul.f32 %v1820, %v240
    %v1835 = vmul.f32 %v1816, %v244
    %v1836 = vmul.f32 %v1829, %v232
    %v1837 = vmul.f32 %v1825, %v236
    %v1838 = vmul.f32 %v1821, %v240
    %v1839 = vmul.f32 %v1817, %v244
    %v1840 = vmul.f32 %v1830, %v232
    %v1841 = vmul.f32 %v1826, %v236
    %v1842 = vmul.f32 %v1822, %v240
    %v1843 = vmul.f32 %v1818, %v244
    %v1844 = vmul.f32 %v1831, %v232
    %v1845 = vmul.f32 %v1827, %v236
    %v1846 = vmul.f32 %v1823, %v240
    %v1847 = vmul.f32 %v1819, %v244
    %v1848 = vmul.f32 %v1576, %v248
    %v1849 = vmul.f32 %v1577, %v252
    %v1850 = vmul.f32 %v1578, %v256
    %v1851 = vmul.f32 %v1579, %v260
    %v1852 = vmul.f32 %v1580, %v248
    %v1853 = vmul.f32 %v1581, %v252
    %v1854 = vmul.f32 %v1582, %v256
    %v1855 = vmul.f32 %v1583, %v260
    %v1856 = vmul.f32 %v1584, %v248
    %v1857 = vmul.f32 %v1585, %v252
    %v1858 = vmul.f32 %v1586, %v256
    %v1859 = vmul.f32 %v1587, %v260
    %v1860 = vmul.f32 %v1588, %v248
    %v1861 = vmul.f32 %v1589, %v252
    %v1862 = vmul.f32 %v1590, %v256
    %v1863 = vmul.f32 %v1591, %v260
    %1864 = vrot.lane.b32.xlu0 %v1576, 127
    %v1865 = vpop.permute.xlu0 %1864
    %1866 = vrot.lane.b32.xlu0 %v1580, 127
    %v1867 = vpop.permute.xlu0 %1866
    %1868 = vrot.lane.b32.xlu0 %v1584, 127
    %v1869 = vpop.permute.xlu0 %1868
    %1870 = vrot.lane.b32.xlu0 %v1588, 127
    %v1871 = vpop.permute.xlu0 %1870
    %1872 = vrot.lane.b32.xlu0 %v1577, 127
    %v1873 = vpop.permute.xlu0 %1872
    %1874 = vrot.lane.b32.xlu0 %v1581, 127
    %v1875 = vpop.permute.xlu0 %1874
    %1876 = vrot.lane.b32.xlu0 %v1585, 127
    %v1877 = vpop.permute.xlu0 %1876
    %1878 = vrot.lane.b32.xlu0 %v1589, 127
    %v1879 = vpop.permute.xlu0 %1878
    %1880 = vrot.lane.b32.xlu0 %v1578, 127
    %v1881 = vpop.permute.xlu0 %1880
    %1882 = vrot.lane.b32.xlu0 %v1582, 127
    %v1883 = vpop.permute.xlu0 %1882
    %1884 = vrot.lane.b32.xlu0 %v1586, 127
    %v1885 = vpop.permute.xlu0 %1884
    %1886 = vrot.lane.b32.xlu0 %v1590, 127
    %v1887 = vpop.permute.xlu0 %1886
    %1888 = vrot.lane.b32.xlu0 %v1579, 127
    %v1889 = vpop.permute.xlu0 %1888
    %1890 = vrot.lane.b32.xlu0 %v1583, 127
    %v1891 = vpop.permute.xlu0 %1890
    %1892 = vrot.lane.b32.xlu0 %v1587, 127
    %v1893 = vpop.permute.xlu0 %1892
    %1894 = vrot.lane.b32.xlu0 %v1591, 127
    %v1895 = vpop.permute.xlu0 %1894
    %v1896 = vsel %vm996, %v1881, %v1889
    %v1897 = vsel %vm996, %v1883, %v1891
    %v1898 = vsel %vm996, %v1885, %v1893
    %v1899 = vsel %vm996, %v1887, %v1895
    %v1900 = vsel %vm996, %v1873, %v1881
    %v1901 = vsel %vm996, %v1875, %v1883
    %v1902 = vsel %vm996, %v1877, %v1885
    %v1903 = vsel %vm996, %v1879, %v1887
    %v1904 = vsel %vm996, %v1865, %v1873
    %v1905 = vsel %vm996, %v1867, %v1875
    %v1906 = vsel %vm996, %v1869, %v1877
    %v1907 = vsel %vm996, %v1871, %v1879
    %v1908 = vsel %vm996, %v1889, %v1865
    %v1909 = vsel %vm996, %v1891, %v1867
    %v1910 = vsel %vm996, %v1893, %v1869
    %v1911 = vsel %vm996, %v1895, %v1871
    %v1912 = vmul.f32 %v1904, %v264
    %v1913 = vmul.f32 %v1900, %v268
    %v1914 = vmul.f32 %v1896, %v272
    %v1915 = vmul.f32 %v1908, %v276
    %v1916 = vmul.f32 %v1905, %v264
    %v1917 = vmul.f32 %v1901, %v268
    %v1918 = vmul.f32 %v1897, %v272
    %v1919 = vmul.f32 %v1909, %v276
    %v1920 = vmul.f32 %v1906, %v264
    %v1921 = vmul.f32 %v1902, %v268
    %v1922 = vmul.f32 %v1898, %v272
    %v1923 = vmul.f32 %v1910, %v276
    %v1924 = vmul.f32 %v1907, %v264
    %v1925 = vmul.f32 %v1903, %v268
    %v1926 = vmul.f32 %v1899, %v272
    %v1927 = vmul.f32 %v1911, %v276
    %1928 = vrot.lane.b32.xlu0 %v1576, 113
    %v1929 = vpop.permute.xlu0 %1928
    %1930 = vrot.lane.b32.xlu0 %v1580, 113
    %v1931 = vpop.permute.xlu0 %1930
    %1932 = vrot.lane.b32.xlu0 %v1584, 113
    %v1933 = vpop.permute.xlu0 %1932
    %1934 = vrot.lane.b32.xlu0 %v1588, 113
    %v1935 = vpop.permute.xlu0 %1934
    %1936 = vrot.lane.b32.xlu0 %v1577, 113
    %v1937 = vpop.permute.xlu0 %1936
    %1938 = vrot.lane.b32.xlu0 %v1581, 113
    %v1939 = vpop.permute.xlu0 %1938
    %1940 = vrot.lane.b32.xlu0 %v1585, 113
    %v1941 = vpop.permute.xlu0 %1940
    %1942 = vrot.lane.b32.xlu0 %v1589, 113
    %v1943 = vpop.permute.xlu0 %1942
    %1944 = vrot.lane.b32.xlu0 %v1578, 113
    %v1945 = vpop.permute.xlu0 %1944
    %1946 = vrot.lane.b32.xlu0 %v1582, 113
    %v1947 = vpop.permute.xlu0 %1946
    %1948 = vrot.lane.b32.xlu0 %v1586, 113
    %v1949 = vpop.permute.xlu0 %1948
    %1950 = vrot.lane.b32.xlu0 %v1590, 113
    %v1951 = vpop.permute.xlu0 %1950
    %1952 = vrot.lane.b32.xlu0 %v1579, 113
    %v1953 = vpop.permute.xlu0 %1952
    %1954 = vrot.lane.b32.xlu0 %v1583, 113
    %v1955 = vpop.permute.xlu0 %1954
    %1956 = vrot.lane.b32.xlu0 %v1587, 113
    %v1957 = vpop.permute.xlu0 %1956
    %1958 = vrot.lane.b32.xlu0 %v1591, 113
    %v1959 = vpop.permute.xlu0 %1958
    %v1960 = vsel %vm1061, %v1945, %v1953
    %v1961 = vsel %vm1061, %v1947, %v1955
    %v1962 = vsel %vm1061, %v1949, %v1957
    %v1963 = vsel %vm1061, %v1951, %v1959
    %v1964 = vsel %vm1061, %v1937, %v1945
    %v1965 = vsel %vm1061, %v1939, %v1947
    %v1966 = vsel %vm1061, %v1941, %v1949
    %v1967 = vsel %vm1061, %v1943, %v1951
    %v1968 = vsel %vm1061, %v1929, %v1937
    %v1969 = vsel %vm1061, %v1931, %v1939
    %v1970 = vsel %vm1061, %v1933, %v1941
    %v1971 = vsel %vm1061, %v1935, %v1943
    %v1972 = vsel %vm1061, %v1953, %v1929
    %v1973 = vsel %vm1061, %v1955, %v1931
    %v1974 = vsel %vm1061, %v1957, %v1933
    %v1975 = vsel %vm1061, %v1959, %v1935
    %v1976 = vmul.f32 %v1968, %v280
    %v1977 = vmul.f32 %v1964, %v284
    %v1978 = vmul.f32 %v1960, %v288
    %v1979 = vmul.f32 %v1972, %v292
    %v1980 = vmul.f32 %v1969, %v280
    %v1981 = vmul.f32 %v1965, %v284
    %v1982 = vmul.f32 %v1961, %v288
    %v1983 = vmul.f32 %v1973, %v292
    %v1984 = vmul.f32 %v1970, %v280
    %v1985 = vmul.f32 %v1966, %v284
    %v1986 = vmul.f32 %v1962, %v288
    %v1987 = vmul.f32 %v1974, %v292
    %v1988 = vmul.f32 %v1971, %v280
    %v1989 = vmul.f32 %v1967, %v284
    %v1990 = vmul.f32 %v1963, %v288
    %v1991 = vmul.f32 %v1975, %v292
    %1992 = vrot.lane.b32.xlu0 %v1576, 112
    %v1993 = vpop.permute.xlu0 %1992
    %1994 = vrot.lane.b32.xlu0 %v1580, 112
    %v1995 = vpop.permute.xlu0 %1994
    %1996 = vrot.lane.b32.xlu0 %v1584, 112
    %v1997 = vpop.permute.xlu0 %1996
    %1998 = vrot.lane.b32.xlu0 %v1588, 112
    %v1999 = vpop.permute.xlu0 %1998
    %2000 = vrot.lane.b32.xlu0 %v1577, 112
    %v2001 = vpop.permute.xlu0 %2000
    %2002 = vrot.lane.b32.xlu0 %v1581, 112
    %v2003 = vpop.permute.xlu0 %2002
    %2004 = vrot.lane.b32.xlu0 %v1585, 112
    %v2005 = vpop.permute.xlu0 %2004
    %2006 = vrot.lane.b32.xlu0 %v1589, 112
    %v2007 = vpop.permute.xlu0 %2006
    %2008 = vrot.lane.b32.xlu0 %v1578, 112
    %v2009 = vpop.permute.xlu0 %2008
    %2010 = vrot.lane.b32.xlu0 %v1582, 112
    %v2011 = vpop.permute.xlu0 %2010
    %2012 = vrot.lane.b32.xlu0 %v1586, 112
    %v2013 = vpop.permute.xlu0 %2012
    %2014 = vrot.lane.b32.xlu0 %v1590, 112
    %v2015 = vpop.permute.xlu0 %2014
    %2016 = vrot.lane.b32.xlu0 %v1579, 112
    %v2017 = vpop.permute.xlu0 %2016
    %2018 = vrot.lane.b32.xlu0 %v1583, 112
    %v2019 = vpop.permute.xlu0 %2018
    %2020 = vrot.lane.b32.xlu0 %v1587, 112
    %v2021 = vpop.permute.xlu0 %2020
    %2022 = vrot.lane.b32.xlu0 %v1591, 112
    %v2023 = vpop.permute.xlu0 %2022
    %v2024 = vsel %vm1126, %v2009, %v2017
    %v2025 = vsel %vm1126, %v2011, %v2019
    %v2026 = vsel %vm1126, %v2013, %v2021
    %v2027 = vsel %vm1126, %v2015, %v2023
    %v2028 = vsel %vm1126, %v2001, %v2009
    %v2029 = vsel %vm1126, %v2003, %v2011
    %v2030 = vsel %vm1126, %v2005, %v2013
    %v2031 = vsel %vm1126, %v2007, %v2015
    %v2032 = vsel %vm1126, %v1993, %v2001
    %v2033 = vsel %vm1126, %v1995, %v2003
    %v2034 = vsel %vm1126, %v1997, %v2005
    %v2035 = vsel %vm1126, %v1999, %v2007
    %v2036 = vsel %vm1126, %v2017, %v1993
    %v2037 = vsel %vm1126, %v2019, %v1995
    %v2038 = vsel %vm1126, %v2021, %v1997
    %v2039 = vsel %vm1126, %v2023, %v1999
    %v2040 = vmul.f32 %v2032, %v296
    %v2041 = vmul.f32 %v2028, %v300
    %v2042 = vmul.f32 %v2024, %v304
    %v2043 = vmul.f32 %v2036, %v308
    %v2044 = vmul.f32 %v2033, %v296
    %v2045 = vmul.f32 %v2029, %v300
    %v2046 = vmul.f32 %v2025, %v304
    %v2047 = vmul.f32 %v2037, %v308
    %v2048 = vmul.f32 %v2034, %v296
    %v2049 = vmul.f32 %v2030, %v300
    %v2050 = vmul.f32 %v2026, %v304
    %v2051 = vmul.f32 %v2038, %v308
    %v2052 = vmul.f32 %v2035, %v296
    %v2053 = vmul.f32 %v2031, %v300
    %v2054 = vmul.f32 %v2027, %v304
    %v2055 = vmul.f32 %v2039, %v308
    %2056 = vrot.lane.b32.xlu0 %v1576, 111
    %v2057 = vpop.permute.xlu0 %2056
    %2058 = vrot.lane.b32.xlu0 %v1580, 111
    %v2059 = vpop.permute.xlu0 %2058
    %2060 = vrot.lane.b32.xlu0 %v1584, 111
    %v2061 = vpop.permute.xlu0 %2060
    %2062 = vrot.lane.b32.xlu0 %v1588, 111
    %v2063 = vpop.permute.xlu0 %2062
    %2064 = vrot.lane.b32.xlu0 %v1577, 111
    %v2065 = vpop.permute.xlu0 %2064
    %2066 = vrot.lane.b32.xlu0 %v1581, 111
    %v2067 = vpop.permute.xlu0 %2066
    %2068 = vrot.lane.b32.xlu0 %v1585, 111
    %v2069 = vpop.permute.xlu0 %2068
    %2070 = vrot.lane.b32.xlu0 %v1589, 111
    %v2071 = vpop.permute.xlu0 %2070
    %2072 = vrot.lane.b32.xlu0 %v1578, 111
    %v2073 = vpop.permute.xlu0 %2072
    %2074 = vrot.lane.b32.xlu0 %v1582, 111
    %v2075 = vpop.permute.xlu0 %2074
    %2076 = vrot.lane.b32.xlu0 %v1586, 111
    %v2077 = vpop.permute.xlu0 %2076
    %2078 = vrot.lane.b32.xlu0 %v1590, 111
    %v2079 = vpop.permute.xlu0 %2078
    %2080 = vrot.lane.b32.xlu0 %v1579, 111
    %v2081 = vpop.permute.xlu0 %2080
    %2082 = vrot.lane.b32.xlu0 %v1583, 111
    %v2083 = vpop.permute.xlu0 %2082
    %2084 = vrot.lane.b32.xlu0 %v1587, 111
    %v2085 = vpop.permute.xlu0 %2084
    %2086 = vrot.lane.b32.xlu0 %v1591, 111
    %v2087 = vpop.permute.xlu0 %2086
    %v2088 = vsel %vm1191, %v2073, %v2081
    %v2089 = vsel %vm1191, %v2075, %v2083
    %v2090 = vsel %vm1191, %v2077, %v2085
    %v2091 = vsel %vm1191, %v2079, %v2087
    %v2092 = vsel %vm1191, %v2065, %v2073
    %v2093 = vsel %vm1191, %v2067, %v2075
    %v2094 = vsel %vm1191, %v2069, %v2077
    %v2095 = vsel %vm1191, %v2071, %v2079
    %v2096 = vsel %vm1191, %v2057, %v2065
    %v2097 = vsel %vm1191, %v2059, %v2067
    %v2098 = vsel %vm1191, %v2061, %v2069
    %v2099 = vsel %vm1191, %v2063, %v2071
    %v2100 = vsel %vm1191, %v2081, %v2057
    %v2101 = vsel %vm1191, %v2083, %v2059
    %v2102 = vsel %vm1191, %v2085, %v2061
    %v2103 = vsel %vm1191, %v2087, %v2063
    %v2104 = vmul.f32 %v2096, %v312
    %v2105 = vmul.f32 %v2092, %v316
    %v2106 = vmul.f32 %v2088, %v320
    %v2107 = vmul.f32 %v2100, %v324
    %v2108 = vmul.f32 %v2097, %v312
    %v2109 = vmul.f32 %v2093, %v316
    %v2110 = vmul.f32 %v2089, %v320
    %v2111 = vmul.f32 %v2101, %v324
    %v2112 = vmul.f32 %v2098, %v312
    %v2113 = vmul.f32 %v2094, %v316
    %v2114 = vmul.f32 %v2090, %v320
    %v2115 = vmul.f32 %v2102, %v324
    %v2116 = vmul.f32 %v2099, %v312
    %v2117 = vmul.f32 %v2095, %v316
    %v2118 = vmul.f32 %v2091, %v320
    %v2119 = vmul.f32 %v2103, %v324
    %v2120 = vpack.c.bf16 %v1644, %v1640
    %v2121 = vpack.c.bf16 %v1645, %v1641
    %v2122 = vpack.c.bf16 %v1646, %v1642
    %v2123 = vpack.c.bf16 %v1647, %v1643
    %v2124 = vpack.c.bf16 %v1652, %v1648
    %v2125 = vpack.c.bf16 %v1653, %v1649
    %v2126 = vpack.c.bf16 %v1654, %v1650
    %v2127 = vpack.c.bf16 %v1655, %v1651
    %v2128 = vpack.c.bf16 %v1708, %v1704
    %v2129 = vpack.c.bf16 %v1709, %v1705
    %v2130 = vpack.c.bf16 %v1710, %v1706
    %v2131 = vpack.c.bf16 %v1711, %v1707
    %v2132 = vpack.c.bf16 %v1716, %v1712
    %v2133 = vpack.c.bf16 %v1717, %v1713
    %v2134 = vpack.c.bf16 %v1718, %v1714
    %v2135 = vpack.c.bf16 %v1719, %v1715
    %v2136 = vpack.c.bf16 %v1772, %v1768
    %v2137 = vpack.c.bf16 %v1773, %v1769
    %v2138 = vpack.c.bf16 %v1774, %v1770
    %v2139 = vpack.c.bf16 %v1775, %v1771
    %v2140 = vpack.c.bf16 %v1780, %v1776
    %v2141 = vpack.c.bf16 %v1781, %v1777
    %v2142 = vpack.c.bf16 %v1782, %v1778
    %v2143 = vpack.c.bf16 %v1783, %v1779
    %v2144 = vpack.c.bf16 %v1836, %v1832
    %v2145 = vpack.c.bf16 %v1837, %v1833
    %v2146 = vpack.c.bf16 %v1838, %v1834
    %v2147 = vpack.c.bf16 %v1839, %v1835
    %v2148 = vpack.c.bf16 %v1844, %v1840
    %v2149 = vpack.c.bf16 %v1845, %v1841
    %v2150 = vpack.c.bf16 %v1846, %v1842
    %v2151 = vpack.c.bf16 %v1847, %v1843
    %v2152 = vpack.c.bf16 %v1852, %v1848
    %v2153 = vpack.c.bf16 %v1853, %v1849
    %v2154 = vpack.c.bf16 %v1854, %v1850
    %v2155 = vpack.c.bf16 %v1855, %v1851
    %v2156 = vpack.c.bf16 %v1860, %v1856
    %v2157 = vpack.c.bf16 %v1861, %v1857
    %v2158 = vpack.c.bf16 %v1862, %v1858
    %v2159 = vpack.c.bf16 %v1863, %v1859
    %v2160 = vpack.c.bf16 %v1916, %v1912
    %v2161 = vpack.c.bf16 %v1917, %v1913
    %v2162 = vpack.c.bf16 %v1918, %v1914
    %v2163 = vpack.c.bf16 %v1919, %v1915
    %v2164 = vpack.c.bf16 %v1924, %v1920
    %v2165 = vpack.c.bf16 %v1925, %v1921
    %v2166 = vpack.c.bf16 %v1926, %v1922
    %v2167 = vpack.c.bf16 %v1927, %v1923
    %v2168 = vpack.c.bf16 %v1980, %v1976
    %v2169 = vpack.c.bf16 %v1981, %v1977
    %v2170 = vpack.c.bf16 %v1982, %v1978
    %v2171 = vpack.c.bf16 %v1983, %v1979
    %v2172 = vpack.c.bf16 %v1988, %v1984
    %v2173 = vpack.c.bf16 %v1989, %v1985
    %v2174 = vpack.c.bf16 %v1990, %v1986
    %v2175 = vpack.c.bf16 %v1991, %v1987
    %v2176 = vpack.c.bf16 %v2044, %v2040
    %v2177 = vpack.c.bf16 %v2045, %v2041
    %v2178 = vpack.c.bf16 %v2046, %v2042
    %v2179 = vpack.c.bf16 %v2047, %v2043
    %v2180 = vpack.c.bf16 %v2052, %v2048
    %v2181 = vpack.c.bf16 %v2053, %v2049
    %v2182 = vpack.c.bf16 %v2054, %v2050
    %v2183 = vpack.c.bf16 %v2055, %v2051
    %v2184 = vpack.c.bf16 %v2108, %v2104
    %v2185 = vpack.c.bf16 %v2109, %v2105
    %v2186 = vpack.c.bf16 %v2110, %v2106
    %v2187 = vpack.c.bf16 %v2111, %v2107
    %v2188 = vpack.c.bf16 %v2116, %v2112
    %v2189 = vpack.c.bf16 %v2117, %v2113
    %v2190 = vpack.c.bf16 %v2118, %v2114
    %v2191 = vpack.c.bf16 %v2119, %v2115
    %v2192 = vld [vmem:[%s8] sm:$0xff]
    %v2193 = vld [vmem:[%s8 + $0x8] sm:$0xf]
    %v2194 = vld [vmem:[%s8 + $0xc] sm:$0xff]
    %v2195 = vld [vmem:[%s8 + $0x14] sm:$0xf]
    %v2196 = vld [vmem:[%s8 + $0x18] sm:$0xff]
    %v2197 = vld [vmem:[%s8 + $0x20] sm:$0xf]
    %v2198 = vld [vmem:[%s8 + $0x24] sm:$0xff]
    %v2199 = vld [vmem:[%s8 + $0x2c] sm:$0xf]
    %v2200 = vld [vmem:[%s9] sm:$0xff]
    %v2201 = vld [vmem:[%s9 + $0x8] sm:$0xff]
    %v2202 = vld [vmem:[%s9 + $0x10] sm:$0xff]
    %v2203 = vld [vmem:[%s9 + $0x18] sm:$0xff]
    %2205 = vset.pattern.permute.xlu0 0
    %2206 = vperm.xlu0 %2205, %v2200
    %v2207 = vpop.permute.xlu0 %2206
    %2210 = vset.pattern.permute.xlu0 0
    %2211 = vperm.xlu0 %2210, %v2201
    %v2212 = vpop.permute.xlu0 %2211
    %2215 = vset.pattern.permute.xlu0 0
    %2216 = vperm.xlu0 %2215, %v2202
    %v2217 = vpop.permute.xlu0 %2216
    %2220 = vset.pattern.permute.xlu0 0
    %2221 = vperm.xlu0 %2220, %v2203
    %v2222 = vpop.permute.xlu0 %2221
    %v2232 = vunpack.c.l.b16 %v2192
    %v2233 = vunpack.c.h.b16 %v2192
    %v2234 = vunpack.c.l.b16 %v2193
    %v2235 = vunpack.c.l.b16 %v2194
    %v2236 = vunpack.c.h.b16 %v2194
    %v2237 = vunpack.c.l.b16 %v2195
    %v2238 = vunpack.c.l.b16 %v2196
    %v2239 = vunpack.c.h.b16 %v2196
    %v2240 = vunpack.c.l.b16 %v2197
    %v2241 = vunpack.c.l.b16 %v2198
    %v2242 = vunpack.c.h.b16 %v2198
    %v2243 = vunpack.c.l.b16 %v2199
    %v2244 = vpack.c.b16 %v2235, %v2232
    %v2245 = vpack.c.b16 %v2236, %v2233
    %v2246 = vpack.c.b16 %v2237, %v2234
    %v2247 = vpack.c.b16 %v2241, %v2238
    %v2248 = vpack.c.b16 %v2242, %v2239
    %v2249 = vpack.c.b16 %v2243, %v2240
    %v2255 = vsel %vm347, %v2246, 0
    %v2258 = vsel %vm347, %v2249, 0
    %2260 = vmatprep.subr.bf16.mxu0 %v2121
    %2261 = vmatpush1.bf16.msra.mxu0 %v2120
    %2262 = vmatprep.subr.bf16.mxu0 %v2125
    %2263 = vmatpush1.bf16.msra.mxu0 %v2124
    %2264 = vmatprep.subr.bf16.mxu0 %v2129
    %2265 = vmatpush1.bf16.msra.mxu0 %v2128
    %2266 = vmatprep.subr.bf16.mxu0 %v2133
    %2267 = vmatpush1.bf16.msra.mxu0 %v2132
    %2268 = vmatprep.subr.bf16.mxu0 %v2137
    %2269 = vmatpush1.bf16.msra.mxu0 %v2136
    %2270 = vmatprep.subr.bf16.mxu0 %v2141
    %2271 = vmatpush1.bf16.msra.mxu0 %v2140
    %2272 = vmatprep.subr.bf16.mxu0 %v2145
    %2273 = vmatpush1.bf16.msra.mxu0 %v2144
    %2274 = vmatprep.subr.bf16.mxu0 %v2149
    %2275 = vmatpush1.bf16.msra.mxu0 %v2148
    %2276 = vmatprep.subr.bf16.mxu0 %v2153
    %2277 = vmatpush1.bf16.msra.mxu0 %v2152
    %2278 = vmatprep.subr.bf16.mxu0 %v2157
    %2279 = vmatpush1.bf16.msra.mxu0 %v2156
    %2280 = vmatprep.subr.bf16.mxu0 %v2161
    %2281 = vmatpush1.bf16.msra.mxu0 %v2160
    %2282 = vmatprep.subr.bf16.mxu0 %v2165
    %2283 = vmatpush1.bf16.msra.mxu0 %v2164
    %2284 = vmatprep.subr.bf16.mxu0 %v2169
    %2285 = vmatpush1.bf16.msra.mxu0 %v2168
    %2286 = vmatprep.subr.bf16.mxu0 %v2173
    %2287 = vmatpush1.bf16.msra.mxu0 %v2172
    %2288 = vmatprep.subr.bf16.mxu0 %v2177
    %2289 = vmatpush1.bf16.msra.mxu0 %v2176
    %2290 = vmatprep.subr.bf16.mxu0 %v2181
    %2291 = vmatpush1.bf16.msra.mxu0 %v2180
    %2292 = vmatprep.mubr.bf16.mxu0 %v2245
    %2293 = vmatmul.mubr.bf16.gmra.mrb[0].mxu0 %v2244
    %v2294 = vpop.f32.mrb[0].mxu0
    %v2295 = vadd.f32 %v2207, %v2294
    %v2296 = vpop.f32.mrb[0].mxu0
    %v2297 = vadd.f32 %v2207, %v2296
    %v2298 = vpop.f32.mrb[0].mxu0
    %v2299 = vadd.f32 %v2212, %v2298
    %v2300 = vpop.f32.mrb[0].mxu0
    %v2301 = vadd.f32 %v2212, %v2300
    %2302 = vmatprep.mubr.bf16.mxu0 %v2248
    %2303 = vmatmul.mubr.bf16.gmra.mrb[0].mxu0 %v2247
    %v2304 = vpop.f32.mrb[0].mxu0
    %v2305 = vadd.f32 %v2217, %v2304
    %v2306 = vpop.f32.mrb[0].mxu0
    %v2307 = vadd.f32 %v2217, %v2306
    %v2308 = vpop.f32.mrb[0].mxu0
    %v2309 = vadd.f32 %v2222, %v2308
    %v2310 = vpop.f32.mrb[0].mxu0
    %v2311 = vadd.f32 %v2222, %v2310
    %2312 = vdwg.mxu0
    %2313 = vmatprep.subr.bf16.mxu0 %v2185
    %2314 = vmatpush1.bf16.msra.mxu0 %v2184
    %2315 = vmatprep.subr.bf16.mxu0 %v2189
    %2316 = vmatpush1.bf16.msra.mxu0 %v2188
    %2317 = vmatprep.subr.bf16.mxu0 0
    %2318 = vmatpush1.bf16.msra.mxu0 0
    %2319 = vmatprep.subr.bf16.mxu0 0
    %2320 = vmatpush1.bf16.msra.mxu0 0
    %2321 = vmatprep.subr.bf16.mxu0 0
    %2322 = vmatpush1.bf16.msra.mxu0 0
    %2323 = vmatprep.subr.bf16.mxu0 0
    %2324 = vmatpush1.bf16.msra.mxu0 0
    %2325 = vmatprep.subr.bf16.mxu0 0
    %2326 = vmatpush1.bf16.msra.mxu0 0
    %2327 = vmatprep.subr.bf16.mxu0 0
    %2328 = vmatpush1.bf16.msra.mxu0 0
    %2329 = vmatprep.subr.bf16.mxu0 0
    %2330 = vmatpush1.bf16.msra.mxu0 0
    %2331 = vmatprep.subr.bf16.mxu0 0
    %2332 = vmatpush1.bf16.msra.mxu0 0
    %2333 = vmatprep.subr.bf16.mxu0 0
    %2334 = vmatpush1.bf16.msra.mxu0 0
    %2335 = vmatprep.subr.bf16.mxu0 0
    %2336 = vmatpush1.bf16.msra.mxu0 0
    %2337 = vmatprep.subr.bf16.mxu0 0
    %2338 = vmatpush1.bf16.msra.mxu0 0
    %2339 = vmatprep.subr.bf16.mxu0 0
    %2340 = vmatpush1.bf16.msra.mxu0 0
    %2341 = vmatprep.subr.bf16.mxu0 0
    %2342 = vmatpush1.bf16.msra.mxu0 0
    %2343 = vmatprep.subr.bf16.mxu0 0
    %2344 = vmatpush1.bf16.msra.mxu0 0
    %2345 = vmatprep.mubr.bf16.mxu0 0
    %2346 = vmatmul.mubr.bf16.gmra.mrb[0].mxu0 %v2255
    %v2347 = vpop.f32.mrb[0].mxu0
    %v2348 = vadd.f32 %v2295, %v2347
    %v2349 = vpop.f32.mrb[0].mxu0
    %v2350 = vadd.f32 %v2297, %v2349
    %v2351 = vpop.f32.mrb[0].mxu0
    %v2352 = vadd.f32 %v2299, %v2351
    %v2353 = vpop.f32.mrb[0].mxu0
    %v2354 = vadd.f32 %v2301, %v2353
    %2355 = vmatprep.mubr.bf16.mxu0 0
    %2356 = vmatmul.mubr.bf16.gmra.mrb[0].mxu0 %v2258
    %v2357 = vpop.f32.mrb[0].mxu0
    %v2358 = vadd.f32 %v2305, %v2357
    %v2359 = vpop.f32.mrb[0].mxu0
    %v2360 = vadd.f32 %v2307, %v2359
    %v2361 = vpop.f32.mrb[0].mxu0
    %v2362 = vadd.f32 %v2309, %v2361
    %v2363 = vpop.f32.mrb[0].mxu0
    %v2364 = vadd.f32 %v2311, %v2363
    %2365 = vdwg.mxu0
    %2366 = vmatprep.subr.bf16.mxu0 %v2123
    %2367 = vmatpush1.bf16.msra.mxu0 %v2122
    %2368 = vmatprep.subr.bf16.mxu0 %v2127
    %2369 = vmatpush1.bf16.msra.mxu0 %v2126
    %2370 = vmatprep.subr.bf16.mxu0 %v2131
    %2371 = vmatpush1.bf16.msra.mxu0 %v2130
    %2372 = vmatprep.subr.bf16.mxu0 %v2135
    %2373 = vmatpush1.bf16.msra.mxu0 %v2134
    %2374 = vmatprep.subr.bf16.mxu0 %v2139
    %2375 = vmatpush1.bf16.msra.mxu0 %v2138
    %2376 = vmatprep.subr.bf16.mxu0 %v2143
    %2377 = vmatpush1.bf16.msra.mxu0 %v2142
    %2378 = vmatprep.subr.bf16.mxu0 %v2147
    %2379 = vmatpush1.bf16.msra.mxu0 %v2146
    %2380 = vmatprep.subr.bf16.mxu0 %v2151
    %2381 = vmatpush1.bf16.msra.mxu0 %v2150
    %2382 = vmatprep.subr.bf16.mxu0 %v2155
    %2383 = vmatpush1.bf16.msra.mxu0 %v2154
    %2384 = vmatprep.subr.bf16.mxu0 %v2159
    %2385 = vmatpush1.bf16.msra.mxu0 %v2158
    %2386 = vmatprep.subr.bf16.mxu0 %v2163
    %2387 = vmatpush1.bf16.msra.mxu0 %v2162
    %2388 = vmatprep.subr.bf16.mxu0 %v2167
    %2389 = vmatpush1.bf16.msra.mxu0 %v2166
    %2390 = vmatprep.subr.bf16.mxu0 %v2171
    %2391 = vmatpush1.bf16.msra.mxu0 %v2170
    %2392 = vmatprep.subr.bf16.mxu0 %v2175
    %2393 = vmatpush1.bf16.msra.mxu0 %v2174
    %2394 = vmatprep.subr.bf16.mxu0 %v2179
    %2395 = vmatpush1.bf16.msra.mxu0 %v2178
    %2396 = vmatprep.subr.bf16.mxu0 %v2183
    %2397 = vmatpush1.bf16.msra.mxu0 %v2182
    %2398 = vmatprep.mubr.bf16.mxu0 %v2245
    %2399 = vmatmul.mubr.bf16.gmra.mrb[0].mxu0 %v2244
    %v2400 = vpop.f32.mrb[0].mxu0
    %v2401 = vadd.f32 %v2207, %v2400
    %v2402 = vpop.f32.mrb[0].mxu0
    %v2403 = vadd.f32 %v2207, %v2402
    %v2404 = vpop.f32.mrb[0].mxu0
    %v2405 = vadd.f32 %v2212, %v2404
    %v2406 = vpop.f32.mrb[0].mxu0
    %v2407 = vadd.f32 %v2212, %v2406
    %2408 = vmatprep.mubr.bf16.mxu0 %v2248
    %2409 = vmatmul.mubr.bf16.gmra.mrb[0].mxu0 %v2247
    %v2410 = vpop.f32.mrb[0].mxu0
    %v2411 = vadd.f32 %v2217, %v2410
    %v2412 = vpop.f32.mrb[0].mxu0
    %v2413 = vadd.f32 %v2217, %v2412
    %v2414 = vpop.f32.mrb[0].mxu0
    %v2415 = vadd.f32 %v2222, %v2414
    %v2416 = vpop.f32.mrb[0].mxu0
    %v2417 = vadd.f32 %v2222, %v2416
    %2418 = vdwg.mxu0
    %2419 = vmatprep.subr.bf16.mxu0 %v2187
    %2420 = vmatpush1.bf16.msra.mxu0 %v2186
    %2421 = vmatprep.subr.bf16.mxu0 %v2191
    %2422 = vmatpush1.bf16.msra.mxu0 %v2190
    %2423 = vmatprep.subr.bf16.mxu0 0
    %2424 = vmatpush1.bf16.msra.mxu0 0
    %2425 = vmatprep.subr.bf16.mxu0 0
    %2426 = vmatpush1.bf16.msra.mxu0 0
    %2427 = vmatprep.subr.bf16.mxu0 0
    %2428 = vmatpush1.bf16.msra.mxu0 0
    %2429 = vmatprep.subr.bf16.mxu0 0
    %2430 = vmatpush1.bf16.msra.mxu0 0
    %2431 = vmatprep.subr.bf16.mxu0 0
    %2432 = vmatpush1.bf16.msra.mxu0 0
    %2433 = vmatprep.subr.bf16.mxu0 0
    %2434 = vmatpush1.bf16.msra.mxu0 0
    %2435 = vmatprep.subr.bf16.mxu0 0
    %2436 = vmatpush1.bf16.msra.mxu0 0
    %2437 = vmatprep.subr.bf16.mxu0 0
    %2438 = vmatpush1.bf16.msra.mxu0 0
    %2439 = vmatprep.subr.bf16.mxu0 0
    %2440 = vmatpush1.bf16.msra.mxu0 0
    %2441 = vmatprep.subr.bf16.mxu0 0
    %2442 = vmatpush1.bf16.msra.mxu0 0
    %2443 = vmatprep.subr.bf16.mxu0 0
    %2444 = vmatpush1.bf16.msra.mxu0 0
    %2445 = vmatprep.subr.bf16.mxu0 0
    %2446 = vmatpush1.bf16.msra.mxu0 0
    %2447 = vmatprep.subr.bf16.mxu0 0
    %2448 = vmatpush1.bf16.msra.mxu0 0
    %2449 = vmatprep.subr.bf16.mxu0 0
    %2450 = vmatpush1.bf16.msra.mxu0 0
    %2451 = vmatprep.mubr.bf16.mxu0 0
    %2452 = vmatmul.mubr.bf16.gmra.mrb[0].mxu0 %v2255
    %v2453 = vpop.f32.mrb[0].mxu0
    %v2454 = vadd.f32 %v2401, %v2453
    %v2455 = vpop.f32.mrb[0].mxu0
    %v2456 = vadd.f32 %v2403, %v2455
    %v2457 = vpop.f32.mrb[0].mxu0
    %v2458 = vadd.f32 %v2405, %v2457
    %v2459 = vpop.f32.mrb[0].mxu0
    %v2460 = vadd.f32 %v2407, %v2459
    %2461 = vmatprep.mubr.bf16.mxu0 0
    %2462 = vmatmul.mubr.bf16.gmra.mrb[0].mxu0 %v2258
    %v2463 = vpop.f32.mrb[0].mxu0
    %v2464 = vadd.f32 %v2411, %v2463
    %v2465 = vpop.f32.mrb[0].mxu0
    %v2466 = vadd.f32 %v2413, %v2465
    %v2467 = vpop.f32.mrb[0].mxu0
    %v2468 = vadd.f32 %v2415, %v2467
    %v2469 = vpop.f32.mrb[0].mxu0
    %v2470 = vadd.f32 %v2417, %v2469
    %2471 = vdwg.mxu0
    %v2472 = vmax.f32 %v2348, %v2350
    %2473 = vmax.xlane.f32.xlu0 %v2472
    %v2474 = vpop.xlane.xlu0 %2473
    %v2475 = vmax.f32 %v2352, %v2354
    %2476 = vmax.xlane.f32.xlu0 %v2475
    %v2477 = vpop.xlane.xlu0 %2476
    %v2478 = vmax.f32 %v2358, %v2360
    %2479 = vmax.xlane.f32.xlu0 %v2478
    %v2480 = vpop.xlane.xlu0 %2479
    %v2481 = vmax.f32 %v2362, %v2364
    %2482 = vmax.xlane.f32.xlu0 %v2481
    %v2483 = vpop.xlane.xlu0 %2482
    %v2484 = vsub.f32 %v2348, %v2474
    %v2485 = vsub.f32 %v2350, %v2474
    %v2486 = vsub.f32 %v2352, %v2477
    %v2487 = vsub.f32 %v2354, %v2477
    %v2488 = vsub.f32 %v2358, %v2480
    %v2489 = vsub.f32 %v2360, %v2480
    %v2490 = vsub.f32 %v2362, %v2483
    %v2491 = vsub.f32 %v2364, %v2483
    %v2492 = vmul.f32 %v2484, 1.442695
    %v2493 = vpow.pop %v2492
    %v2494 = vmul.f32 %v2485, 1.442695
    %v2495 = vpow.pop %v2494
    %v2496 = vmul.f32 %v2486, 1.442695
    %v2497 = vpow.pop %v2496
    %v2498 = vmul.f32 %v2487, 1.442695
    %v2499 = vpow.pop %v2498
    %v2500 = vmul.f32 %v2488, 1.442695
    %v2501 = vpow.pop %v2500
    %v2502 = vmul.f32 %v2489, 1.442695
    %v2503 = vpow.pop %v2502
    %v2504 = vmul.f32 %v2490, 1.442695
    %v2505 = vpow.pop %v2504
    %v2506 = vmul.f32 %v2491, 1.442695
    %v2507 = vpow.pop %v2506
    %v2508 = vadd.f32 %v2493, %v2495
    %2509 = vadd.xlane.f32.xlu0 %v2508
    %v2510 = vpop.xlane.xlu0 %2509
    %v2511 = vadd.f32 %v2497, %v2499
    %2512 = vadd.xlane.f32.xlu0 %v2511
    %v2513 = vpop.xlane.xlu0 %2512
    %v2514 = vadd.f32 %v2501, %v2503
    %2515 = vadd.xlane.f32.xlu0 %v2514
    %v2516 = vpop.xlane.xlu0 %2515
    %v2517 = vadd.f32 %v2505, %v2507
    %2518 = vadd.xlane.f32.xlu0 %v2517
    %v2519 = vpop.xlane.xlu0 %2518
    %v2520 = vrcp.pop %v2510
    %v2521 = vrcp.pop %v2513
    %v2522 = vrcp.pop %v2516
    %v2523 = vrcp.pop %v2519
    %v2524 = vmul.f32 %v2493, %v2520
    %v2525 = vmul.f32 %v2495, %v2520
    %v2526 = vmul.f32 %v2497, %v2521
    %v2527 = vmul.f32 %v2499, %v2521
    %v2528 = vmul.f32 %v2501, %v2522
    %v2529 = vmul.f32 %v2503, %v2522
    %v2530 = vmul.f32 %v2505, %v2523
    %v2531 = vmul.f32 %v2507, %v2523
    %v2532 = vmax.f32 %v2454, %v2456
    %2533 = vmax.xlane.f32.xlu0 %v2532
    %v2534 = vpop.xlane.xlu0 %2533
    %v2535 = vmax.f32 %v2458, %v2460
    %2536 = vmax.xlane.f32.xlu0 %v2535
    %v2537 = vpop.xlane.xlu0 %2536
    %v2538 = vmax.f32 %v2464, %v2466
    %2539 = vmax.xlane.f32.xlu0 %v2538
    %v2540 = vpop.xlane.xlu0 %2539
    %v2541 = vmax.f32 %v2468, %v2470
    %2542 = vmax.xlane.f32.xlu0 %v2541
    %v2543 = vpop.xlane.xlu0 %2542
    %v2544 = vsub.f32 %v2454, %v2534
    %v2545 = vsub.f32 %v2456, %v2534
    %v2546 = vsub.f32 %v2458, %v2537
    %v2547 = vsub.f32 %v2460, %v2537
    %v2548 = vsub.f32 %v2464, %v2540
    %v2549 = vsub.f32 %v2466, %v2540
    %v2550 = vsub.f32 %v2468, %v2543
    %v2551 = vsub.f32 %v2470, %v2543
    %v2552 = vmul.f32 %v2544, 1.442695
    %v2553 = vpow.pop %v2552
    %v2554 = vmul.f32 %v2545, 1.442695
    %v2555 = vpow.pop %v2554
    %v2556 = vmul.f32 %v2546, 1.442695
    %v2557 = vpow.pop %v2556
    %v2558 = vmul.f32 %v2547, 1.442695
    %v2559 = vpow.pop %v2558
    %v2560 = vmul.f32 %v2548, 1.442695
    %v2561 = vpow.pop %v2560
    %v2562 = vmul.f32 %v2549, 1.442695
    %v2563 = vpow.pop %v2562
    %v2564 = vmul.f32 %v2550, 1.442695
    %v2565 = vpow.pop %v2564
    %v2566 = vmul.f32 %v2551, 1.442695
    %v2567 = vpow.pop %v2566
    %v2568 = vadd.f32 %v2553, %v2555
    %2569 = vadd.xlane.f32.xlu0 %v2568
    %v2570 = vpop.xlane.xlu0 %2569
    %v2571 = vadd.f32 %v2557, %v2559
    %2572 = vadd.xlane.f32.xlu0 %v2571
    %v2573 = vpop.xlane.xlu0 %2572
    %v2574 = vadd.f32 %v2561, %v2563
    %2575 = vadd.xlane.f32.xlu0 %v2574
    %v2576 = vpop.xlane.xlu0 %2575
    %v2577 = vadd.f32 %v2565, %v2567
    %2578 = vadd.xlane.f32.xlu0 %v2577
    %v2579 = vpop.xlane.xlu0 %2578
    %v2580 = vrcp.pop %v2570
    %v2581 = vrcp.pop %v2573
    %v2582 = vrcp.pop %v2576
    %v2583 = vrcp.pop %v2579
    %v2584 = vmul.f32 %v2553, %v2580
    %v2585 = vmul.f32 %v2555, %v2580
    %v2586 = vmul.f32 %v2557, %v2581
    %v2587 = vmul.f32 %v2559, %v2581
    %v2588 = vmul.f32 %v2561, %v2582
    %v2589 = vmul.f32 %v2563, %v2582
    %v2590 = vmul.f32 %v2565, %v2583
    %v2591 = vmul.f32 %v2567, %v2583
    %v2592 = vadd.f32 %v563, %v157
    %v2593 = vadd.f32 %v565, %v158
    %v2594 = vadd.f32 %v636, %v159
    %v2595 = vadd.f32 %v638, %v160
    %v2596 = vadd.f32 %v567, %v161
    %v2597 = vadd.f32 %v569, %v162
    %v2598 = vadd.f32 %v640, %v163
    %v2599 = vadd.f32 %v642, %v164
    %v2600 = vadd.f32 %v573, %v165
    %v2601 = vadd.f32 %v575, %v166
    %v2602 = vadd.f32 %v646, %v167
    %v2603 = vadd.f32 %v648, %v168
    %v2604 = vadd.f32 %v577, %v169
    %v2605 = vadd.f32 %v579, %v170
    %v2606 = vadd.f32 %v650, %v171
    %v2607 = vadd.f32 %v652, %v172
    %v2608 = vmul.f32 %v2592, %v2524
    %v2609 = vmul.f32 %v2593, %v2525
    %v2610 = vmul.f32 %v2594, %v2584
    %v2611 = vmul.f32 %v2595, %v2585
    %v2612 = vmul.f32 %v2596, %v2526
    %v2613 = vmul.f32 %v2597, %v2527
    %v2614 = vmul.f32 %v2598, %v2586
    %v2615 = vmul.f32 %v2599, %v2587
    %v2616 = vmul.f32 %v2600, %v2528
    %v2617 = vmul.f32 %v2601, %v2529
    %v2618 = vmul.f32 %v2602, %v2588
    %v2619 = vmul.f32 %v2603, %v2589
    %v2620 = vmul.f32 %v2604, %v2530
    %v2621 = vmul.f32 %v2605, %v2531
    %v2622 = vmul.f32 %v2606, %v2590
    %v2623 = vmul.f32 %v2607, %v2591
    %2624 = vrot.lane.b32.xlu0 %v2608, 17
    %v2625 = vpop.permute.xlu0 %2624
    %2626 = vrot.lane.b32.xlu0 %v2612, 17
    %v2627 = vpop.permute.xlu0 %2626
    %2628 = vrot.lane.b32.xlu0 %v2616, 17
    %v2629 = vpop.permute.xlu0 %2628
    %2630 = vrot.lane.b32.xlu0 %v2620, 17
    %v2631 = vpop.permute.xlu0 %2630
    %2632 = vrot.lane.b32.xlu0 %v2609, 17
    %v2633 = vpop.permute.xlu0 %2632
    %2634 = vrot.lane.b32.xlu0 %v2613, 17
    %v2635 = vpop.permute.xlu0 %2634
    %2636 = vrot.lane.b32.xlu0 %v2617, 17
    %v2637 = vpop.permute.xlu0 %2636
    %2638 = vrot.lane.b32.xlu0 %v2621, 17
    %v2639 = vpop.permute.xlu0 %2638
    %2640 = vrot.lane.b32.xlu0 %v2610, 17
    %v2641 = vpop.permute.xlu0 %2640
    %2642 = vrot.lane.b32.xlu0 %v2614, 17
    %v2643 = vpop.permute.xlu0 %2642
    %2644 = vrot.lane.b32.xlu0 %v2618, 17
    %v2645 = vpop.permute.xlu0 %2644
    %2646 = vrot.lane.b32.xlu0 %v2622, 17
    %v2647 = vpop.permute.xlu0 %2646
    %2648 = vrot.lane.b32.xlu0 %v2611, 17
    %v2649 = vpop.permute.xlu0 %2648
    %2650 = vrot.lane.b32.xlu0 %v2615, 17
    %v2651 = vpop.permute.xlu0 %2650
    %2652 = vrot.lane.b32.xlu0 %v2619, 17
    %v2653 = vpop.permute.xlu0 %2652
    %2654 = vrot.lane.b32.xlu0 %v2623, 17
    %v2655 = vpop.permute.xlu0 %2654
    %v2656 = vsel %vm720, %v2641, %v2649
    %v2657 = vsel %vm720, %v2643, %v2651
    %v2658 = vsel %vm720, %v2645, %v2653
    %v2659 = vsel %vm720, %v2647, %v2655
    %v2660 = vsel %vm720, %v2633, %v2641
    %v2661 = vsel %vm720, %v2635, %v2643
    %v2662 = vsel %vm720, %v2637, %v2645
    %v2663 = vsel %vm720, %v2639, %v2647
    %v2664 = vsel %vm720, %v2625, %v2633
    %v2665 = vsel %vm720, %v2627, %v2635
    %v2666 = vsel %vm720, %v2629, %v2637
    %v2667 = vsel %vm720, %v2631, %v2639
    %v2668 = vsel %vm720, %v2649, %v2625
    %v2669 = vsel %vm720, %v2651, %v2627
    %v2670 = vsel %vm720, %v2653, %v2629
    %v2671 = vsel %vm720, %v2655, %v2631
    %v2672 = vmul.f32 %v2668, %v184
    %v2673 = vmul.f32 %v2664, %v188
    %v2674 = vmul.f32 %v2660, %v192
    %v2675 = vmul.f32 %v2656, %v196
    %v2676 = vmul.f32 %v2669, %v184
    %v2677 = vmul.f32 %v2665, %v188
    %v2678 = vmul.f32 %v2661, %v192
    %v2679 = vmul.f32 %v2657, %v196
    %v2680 = vmul.f32 %v2670, %v184
    %v2681 = vmul.f32 %v2666, %v188
    %v2682 = vmul.f32 %v2662, %v192
    %v2683 = vmul.f32 %v2658, %v196
    %v2684 = vmul.f32 %v2671, %v184
    %v2685 = vmul.f32 %v2667, %v188
    %v2686 = vmul.f32 %v2663, %v192
    %v2687 = vmul.f32 %v2659, %v196
    %2688 = vrot.lane.b32.xlu0 %v2608, 16
    %v2689 = vpop.permute.xlu0 %2688
    %2690 = vrot.lane.b32.xlu0 %v2612, 16
    %v2691 = vpop.permute.xlu0 %2690
    %2692 = vrot.lane.b32.xlu0 %v2616, 16
    %v2693 = vpop.permute.xlu0 %2692
    %2694 = vrot.lane.b32.xlu0 %v2620, 16
    %v2695 = vpop.permute.xlu0 %2694
    %2696 = vrot.lane.b32.xlu0 %v2609, 16
    %v2697 = vpop.permute.xlu0 %2696
    %2698 = vrot.lane.b32.xlu0 %v2613, 16
    %v2699 = vpop.permute.xlu0 %2698
    %2700 = vrot.lane.b32.xlu0 %v2617, 16
    %v2701 = vpop.permute.xlu0 %2700
    %2702 = vrot.lane.b32.xlu0 %v2621, 16
    %v2703 = vpop.permute.xlu0 %2702
    %2704 = vrot.lane.b32.xlu0 %v2610, 16
    %v2705 = vpop.permute.xlu0 %2704
    %2706 = vrot.lane.b32.xlu0 %v2614, 16
    %v2707 = vpop.permute.xlu0 %2706
    %2708 = vrot.lane.b32.xlu0 %v2618, 16
    %v2709 = vpop.permute.xlu0 %2708
    %2710 = vrot.lane.b32.xlu0 %v2622, 16
    %v2711 = vpop.permute.xlu0 %2710
    %2712 = vrot.lane.b32.xlu0 %v2611, 16
    %v2713 = vpop.permute.xlu0 %2712
    %2714 = vrot.lane.b32.xlu0 %v2615, 16
    %v2715 = vpop.permute.xlu0 %2714
    %2716 = vrot.lane.b32.xlu0 %v2619, 16
    %v2717 = vpop.permute.xlu0 %2716
    %2718 = vrot.lane.b32.xlu0 %v2623, 16
    %v2719 = vpop.permute.xlu0 %2718
    %v2720 = vsel %vm785, %v2705, %v2713
    %v2721 = vsel %vm785, %v2707, %v2715
    %v2722 = vsel %vm785, %v2709, %v2717
    %v2723 = vsel %vm785, %v2711, %v2719
    %v2724 = vsel %vm785, %v2697, %v2705
    %v2725 = vsel %vm785, %v2699, %v2707
    %v2726 = vsel %vm785, %v2701, %v2709
    %v2727 = vsel %vm785, %v2703, %v2711
    %v2728 = vsel %vm785, %v2689, %v2697
    %v2729 = vsel %vm785, %v2691, %v2699
    %v2730 = vsel %vm785, %v2693, %v2701
    %v2731 = vsel %vm785, %v2695, %v2703
    %v2732 = vsel %vm785, %v2713, %v2689
    %v2733 = vsel %vm785, %v2715, %v2691
    %v2734 = vsel %vm785, %v2717, %v2693
    %v2735 = vsel %vm785, %v2719, %v2695
    %v2736 = vmul.f32 %v2732, %v200
    %v2737 = vmul.f32 %v2728, %v204
    %v2738 = vmul.f32 %v2724, %v208
    %v2739 = vmul.f32 %v2720, %v212
    %v2740 = vmul.f32 %v2733, %v200
    %v2741 = vmul.f32 %v2729, %v204
    %v2742 = vmul.f32 %v2725, %v208
    %v2743 = vmul.f32 %v2721, %v212
    %v2744 = vmul.f32 %v2734, %v200
    %v2745 = vmul.f32 %v2730, %v204
    %v2746 = vmul.f32 %v2726, %v208
    %v2747 = vmul.f32 %v2722, %v212
    %v2748 = vmul.f32 %v2735, %v200
    %v2749 = vmul.f32 %v2731, %v204
    %v2750 = vmul.f32 %v2727, %v208
    %v2751 = vmul.f32 %v2723, %v212
    %2752 = vrot.lane.b32.xlu0 %v2608, 15
    %v2753 = vpop.permute.xlu0 %2752
    %2754 = vrot.lane.b32.xlu0 %v2612, 15
    %v2755 = vpop.permute.xlu0 %2754
    %2756 = vrot.lane.b32.xlu0 %v2616, 15
    %v2757 = vpop.permute.xlu0 %2756
    %2758 = vrot.lane.b32.xlu0 %v2620, 15
    %v2759 = vpop.permute.xlu0 %2758
    %2760 = vrot.lane.b32.xlu0 %v2609, 15
    %v2761 = vpop.permute.xlu0 %2760
    %2762 = vrot.lane.b32.xlu0 %v2613, 15
    %v2763 = vpop.permute.xlu0 %2762
    %2764 = vrot.lane.b32.xlu0 %v2617, 15
    %v2765 = vpop.permute.xlu0 %2764
    %2766 = vrot.lane.b32.xlu0 %v2621, 15
    %v2767 = vpop.permute.xlu0 %2766
    %2768 = vrot.lane.b32.xlu0 %v2610, 15
    %v2769 = vpop.permute.xlu0 %2768
    %2770 = vrot.lane.b32.xlu0 %v2614, 15
    %v2771 = vpop.permute.xlu0 %2770
    %2772 = vrot.lane.b32.xlu0 %v2618, 15
    %v2773 = vpop.permute.xlu0 %2772
    %2774 = vrot.lane.b32.xlu0 %v2622, 15
    %v2775 = vpop.permute.xlu0 %2774
    %2776 = vrot.lane.b32.xlu0 %v2611, 15
    %v2777 = vpop.permute.xlu0 %2776
    %2778 = vrot.lane.b32.xlu0 %v2615, 15
    %v2779 = vpop.permute.xlu0 %2778
    %2780 = vrot.lane.b32.xlu0 %v2619, 15
    %v2781 = vpop.permute.xlu0 %2780
    %2782 = vrot.lane.b32.xlu0 %v2623, 15
    %v2783 = vpop.permute.xlu0 %2782
    %v2784 = vsel %vm850, %v2769, %v2777
    %v2785 = vsel %vm850, %v2771, %v2779
    %v2786 = vsel %vm850, %v2773, %v2781
    %v2787 = vsel %vm850, %v2775, %v2783
    %v2788 = vsel %vm850, %v2761, %v2769
    %v2789 = vsel %vm850, %v2763, %v2771
    %v2790 = vsel %vm850, %v2765, %v2773
    %v2791 = vsel %vm850, %v2767, %v2775
    %v2792 = vsel %vm850, %v2753, %v2761
    %v2793 = vsel %vm850, %v2755, %v2763
    %v2794 = vsel %vm850, %v2757, %v2765
    %v2795 = vsel %vm850, %v2759, %v2767
    %v2796 = vsel %vm850, %v2777, %v2753
    %v2797 = vsel %vm850, %v2779, %v2755
    %v2798 = vsel %vm850, %v2781, %v2757
    %v2799 = vsel %vm850, %v2783, %v2759
    %v2800 = vmul.f32 %v2796, %v216
    %v2801 = vmul.f32 %v2792, %v220
    %v2802 = vmul.f32 %v2788, %v224
    %v2803 = vmul.f32 %v2784, %v228
    %v2804 = vmul.f32 %v2797, %v216
    %v2805 = vmul.f32 %v2793, %v220
    %v2806 = vmul.f32 %v2789, %v224
    %v2807 = vmul.f32 %v2785, %v228
    %v2808 = vmul.f32 %v2798, %v216
    %v2809 = vmul.f32 %v2794, %v220
    %v2810 = vmul.f32 %v2790, %v224
    %v2811 = vmul.f32 %v2786, %v228
    %v2812 = vmul.f32 %v2799, %v216
    %v2813 = vmul.f32 %v2795, %v220
    %v2814 = vmul.f32 %v2791, %v224
    %v2815 = vmul.f32 %v2787, %v228
    %2816 = vrot.lane.b32.xlu0 %v2608, 1
    %v2817 = vpop.permute.xlu0 %2816
    %2818 = vrot.lane.b32.xlu0 %v2612, 1
    %v2819 = vpop.permute.xlu0 %2818
    %2820 = vrot.lane.b32.xlu0 %v2616, 1
    %v2821 = vpop.permute.xlu0 %2820
    %2822 = vrot.lane.b32.xlu0 %v2620, 1
    %v2823 = vpop.permute.xlu0 %2822
    %2824 = vrot.lane.b32.xlu0 %v2609, 1
    %v2825 = vpop.permute.xlu0 %2824
    %2826 = vrot.lane.b32.xlu0 %v2613, 1
    %v2827 = vpop.permute.xlu0 %2826
    %2828 = vrot.lane.b32.xlu0 %v2617, 1
    %v2829 = vpop.permute.xlu0 %2828
    %2830 = vrot.lane.b32.xlu0 %v2621, 1
    %v2831 = vpop.permute.xlu0 %2830
    %2832 = vrot.lane.b32.xlu0 %v2610, 1
    %v2833 = vpop.permute.xlu0 %2832
    %2834 = vrot.lane.b32.xlu0 %v2614, 1
    %v2835 = vpop.permute.xlu0 %2834
    %2836 = vrot.lane.b32.xlu0 %v2618, 1
    %v2837 = vpop.permute.xlu0 %2836
    %2838 = vrot.lane.b32.xlu0 %v2622, 1
    %v2839 = vpop.permute.xlu0 %2838
    %2840 = vrot.lane.b32.xlu0 %v2611, 1
    %v2841 = vpop.permute.xlu0 %2840
    %2842 = vrot.lane.b32.xlu0 %v2615, 1
    %v2843 = vpop.permute.xlu0 %2842
    %2844 = vrot.lane.b32.xlu0 %v2619, 1
    %v2845 = vpop.permute.xlu0 %2844
    %2846 = vrot.lane.b32.xlu0 %v2623, 1
    %v2847 = vpop.permute.xlu0 %2846
    %v2848 = vsel %vm915, %v2833, %v2841
    %v2849 = vsel %vm915, %v2835, %v2843
    %v2850 = vsel %vm915, %v2837, %v2845
    %v2851 = vsel %vm915, %v2839, %v2847
    %v2852 = vsel %vm915, %v2825, %v2833
    %v2853 = vsel %vm915, %v2827, %v2835
    %v2854 = vsel %vm915, %v2829, %v2837
    %v2855 = vsel %vm915, %v2831, %v2839
    %v2856 = vsel %vm915, %v2817, %v2825
    %v2857 = vsel %vm915, %v2819, %v2827
    %v2858 = vsel %vm915, %v2821, %v2829
    %v2859 = vsel %vm915, %v2823, %v2831
    %v2860 = vsel %vm915, %v2841, %v2817
    %v2861 = vsel %vm915, %v2843, %v2819
    %v2862 = vsel %vm915, %v2845, %v2821
    %v2863 = vsel %vm915, %v2847, %v2823
    %v2864 = vmul.f32 %v2860, %v232
    %v2865 = vmul.f32 %v2856, %v236
    %v2866 = vmul.f32 %v2852, %v240
    %v2867 = vmul.f32 %v2848, %v244
    %v2868 = vmul.f32 %v2861, %v232
    %v2869 = vmul.f32 %v2857, %v236
    %v2870 = vmul.f32 %v2853, %v240
    %v2871 = vmul.f32 %v2849, %v244
    %v2872 = vmul.f32 %v2862, %v232
    %v2873 = vmul.f32 %v2858, %v236
    %v2874 = vmul.f32 %v2854, %v240
    %v2875 = vmul.f32 %v2850, %v244
    %v2876 = vmul.f32 %v2863, %v232
    %v2877 = vmul.f32 %v2859, %v236
    %v2878 = vmul.f32 %v2855, %v240
    %v2879 = vmul.f32 %v2851, %v244
    %v2880 = vmul.f32 %v2608, %v248
    %v2881 = vmul.f32 %v2609, %v252
    %v2882 = vmul.f32 %v2610, %v256
    %v2883 = vmul.f32 %v2611, %v260
    %v2884 = vmul.f32 %v2612, %v248
    %v2885 = vmul.f32 %v2613, %v252
    %v2886 = vmul.f32 %v2614, %v256
    %v2887 = vmul.f32 %v2615, %v260
    %v2888 = vmul.f32 %v2616, %v248
    %v2889 = vmul.f32 %v2617, %v252
    %v2890 = vmul.f32 %v2618, %v256
    %v2891 = vmul.f32 %v2619, %v260
    %v2892 = vmul.f32 %v2620, %v248
    %v2893 = vmul.f32 %v2621, %v252
    %v2894 = vmul.f32 %v2622, %v256
    %v2895 = vmul.f32 %v2623, %v260
    %2896 = vrot.lane.b32.xlu0 %v2608, 127
    %v2897 = vpop.permute.xlu0 %2896
    %2898 = vrot.lane.b32.xlu0 %v2612, 127
    %v2899 = vpop.permute.xlu0 %2898
    %2900 = vrot.lane.b32.xlu0 %v2616, 127
    %v2901 = vpop.permute.xlu0 %2900
    %2902 = vrot.lane.b32.xlu0 %v2620, 127
    %v2903 = vpop.permute.xlu0 %2902
    %2904 = vrot.lane.b32.xlu0 %v2609, 127
    %v2905 = vpop.permute.xlu0 %2904
    %2906 = vrot.lane.b32.xlu0 %v2613, 127
    %v2907 = vpop.permute.xlu0 %2906
    %2908 = vrot.lane.b32.xlu0 %v2617, 127
    %v2909 = vpop.permute.xlu0 %2908
    %2910 = vrot.lane.b32.xlu0 %v2621, 127
    %v2911 = vpop.permute.xlu0 %2910
    %2912 = vrot.lane.b32.xlu0 %v2610, 127
    %v2913 = vpop.permute.xlu0 %2912
    %2914 = vrot.lane.b32.xlu0 %v2614, 127
    %v2915 = vpop.permute.xlu0 %2914
    %2916 = vrot.lane.b32.xlu0 %v2618, 127
    %v2917 = vpop.permute.xlu0 %2916
    %2918 = vrot.lane.b32.xlu0 %v2622, 127
    %v2919 = vpop.permute.xlu0 %2918
    %2920 = vrot.lane.b32.xlu0 %v2611, 127
    %v2921 = vpop.permute.xlu0 %2920
    %2922 = vrot.lane.b32.xlu0 %v2615, 127
    %v2923 = vpop.permute.xlu0 %2922
    %2924 = vrot.lane.b32.xlu0 %v2619, 127
    %v2925 = vpop.permute.xlu0 %2924
    %2926 = vrot.lane.b32.xlu0 %v2623, 127
    %v2927 = vpop.permute.xlu0 %2926
    %v2928 = vsel %vm996, %v2913, %v2921
    %v2929 = vsel %vm996, %v2915, %v2923
    %v2930 = vsel %vm996, %v2917, %v2925
    %v2931 = vsel %vm996, %v2919, %v2927
    %v2932 = vsel %vm996, %v2905, %v2913
    %v2933 = vsel %vm996, %v2907, %v2915
    %v2934 = vsel %vm996, %v2909, %v2917
    %v2935 = vsel %vm996, %v2911, %v2919
    %v2936 = vsel %vm996, %v2897, %v2905
    %v2937 = vsel %vm996, %v2899, %v2907
    %v2938 = vsel %vm996, %v2901, %v2909
    %v2939 = vsel %vm996, %v2903, %v2911
    %v2940 = vsel %vm996, %v2921, %v2897
    %v2941 = vsel %vm996, %v2923, %v2899
    %v2942 = vsel %vm996, %v2925, %v2901
    %v2943 = vsel %vm996, %v2927, %v2903
    %v2944 = vmul.f32 %v2936, %v264
    %v2945 = vmul.f32 %v2932, %v268
    %v2946 = vmul.f32 %v2928, %v272
    %v2947 = vmul.f32 %v2940, %v276
    %v2948 = vmul.f32 %v2937, %v264
    %v2949 = vmul.f32 %v2933, %v268
    %v2950 = vmul.f32 %v2929, %v272
    %v2951 = vmul.f32 %v2941, %v276
    %v2952 = vmul.f32 %v2938, %v264
    %v2953 = vmul.f32 %v2934, %v268
    %v2954 = vmul.f32 %v2930, %v272
    %v2955 = vmul.f32 %v2942, %v276
    %v2956 = vmul.f32 %v2939, %v264
    %v2957 = vmul.f32 %v2935, %v268
    %v2958 = vmul.f32 %v2931, %v272
    %v2959 = vmul.f32 %v2943, %v276
    %2960 = vrot.lane.b32.xlu0 %v2608, 113
    %v2961 = vpop.permute.xlu0 %2960
    %2962 = vrot.lane.b32.xlu0 %v2612, 113
    %v2963 = vpop.permute.xlu0 %2962
    %2964 = vrot.lane.b32.xlu0 %v2616, 113
    %v2965 = vpop.permute.xlu0 %2964
    %2966 = vrot.lane.b32.xlu0 %v2620, 113
    %v2967 = vpop.permute.xlu0 %2966
    %2968 = vrot.lane.b32.xlu0 %v2609, 113
    %v2969 = vpop.permute.xlu0 %2968
    %2970 = vrot.lane.b32.xlu0 %v2613, 113
    %v2971 = vpop.permute.xlu0 %2970
    %2972 = vrot.lane.b32.xlu0 %v2617, 113
    %v2973 = vpop.permute.xlu0 %2972
    %2974 = vrot.lane.b32.xlu0 %v2621, 113
    %v2975 = vpop.permute.xlu0 %2974
    %2976 = vrot.lane.b32.xlu0 %v2610, 113
    %v2977 = vpop.permute.xlu0 %2976
    %2978 = vrot.lane.b32.xlu0 %v2614, 113
    %v2979 = vpop.permute.xlu0 %2978
    %2980 = vrot.lane.b32.xlu0 %v2618, 113
    %v2981 = vpop.permute.xlu0 %2980
    %2982 = vrot.lane.b32.xlu0 %v2622, 113
    %v2983 = vpop.permute.xlu0 %2982
    %2984 = vrot.lane.b32.xlu0 %v2611, 113
    %v2985 = vpop.permute.xlu0 %2984
    %2986 = vrot.lane.b32.xlu0 %v2615, 113
    %v2987 = vpop.permute.xlu0 %2986
    %2988 = vrot.lane.b32.xlu0 %v2619, 113
    %v2989 = vpop.permute.xlu0 %2988
    %2990 = vrot.lane.b32.xlu0 %v2623, 113
    %v2991 = vpop.permute.xlu0 %2990
    %v2992 = vsel %vm1061, %v2977, %v2985
    %v2993 = vsel %vm1061, %v2979, %v2987
    %v2994 = vsel %vm1061, %v2981, %v2989
    %v2995 = vsel %vm1061, %v2983, %v2991
    %v2996 = vsel %vm1061, %v2969, %v2977
    %v2997 = vsel %vm1061, %v2971, %v2979
    %v2998 = vsel %vm1061, %v2973, %v2981
    %v2999 = vsel %vm1061, %v2975, %v2983
    %v3000 = vsel %vm1061, %v2961, %v2969
    %v3001 = vsel %vm1061, %v2963, %v2971
    %v3002 = vsel %vm1061, %v2965, %v2973
    %v3003 = vsel %vm1061, %v2967, %v2975
    %v3004 = vsel %vm1061, %v2985, %v2961
    %v3005 = vsel %vm1061, %v2987, %v2963
    %v3006 = vsel %vm1061, %v2989, %v2965
    %v3007 = vsel %vm1061, %v2991, %v2967
    %v3008 = vmul.f32 %v3000, %v280
    %v3009 = vmul.f32 %v2996, %v284
    %v3010 = vmul.f32 %v2992, %v288
    %v3011 = vmul.f32 %v3004, %v292
    %v3012 = vmul.f32 %v3001, %v280
    %v3013 = vmul.f32 %v2997, %v284
    %v3014 = vmul.f32 %v2993, %v288
    %v3015 = vmul.f32 %v3005, %v292
    %v3016 = vmul.f32 %v3002, %v280
    %v3017 = vmul.f32 %v2998, %v284
    %v3018 = vmul.f32 %v2994, %v288
    %v3019 = vmul.f32 %v3006, %v292
    %v3020 = vmul.f32 %v3003, %v280
    %v3021 = vmul.f32 %v2999, %v284
    %v3022 = vmul.f32 %v2995, %v288
    %v3023 = vmul.f32 %v3007, %v292
    %3024 = vrot.lane.b32.xlu0 %v2608, 112
    %v3025 = vpop.permute.xlu0 %3024
    %3026 = vrot.lane.b32.xlu0 %v2612, 112
    %v3027 = vpop.permute.xlu0 %3026
    %3028 = vrot.lane.b32.xlu0 %v2616, 112
    %v3029 = vpop.permute.xlu0 %3028
    %3030 = vrot.lane.b32.xlu0 %v2620, 112
    %v3031 = vpop.permute.xlu0 %3030
    %3032 = vrot.lane.b32.xlu0 %v2609, 112
    %v3033 = vpop.permute.xlu0 %3032
    %3034 = vrot.lane.b32.xlu0 %v2613, 112
    %v3035 = vpop.permute.xlu0 %3034
    %3036 = vrot.lane.b32.xlu0 %v2617, 112
    %v3037 = vpop.permute.xlu0 %3036
    %3038 = vrot.lane.b32.xlu0 %v2621, 112
    %v3039 = vpop.permute.xlu0 %3038
    %3040 = vrot.lane.b32.xlu0 %v2610, 112
    %v3041 = vpop.permute.xlu0 %3040
    %3042 = vrot.lane.b32.xlu0 %v2614, 112
    %v3043 = vpop.permute.xlu0 %3042
    %3044 = vrot.lane.b32.xlu0 %v2618, 112
    %v3045 = vpop.permute.xlu0 %3044
    %3046 = vrot.lane.b32.xlu0 %v2622, 112
    %v3047 = vpop.permute.xlu0 %3046
    %3048 = vrot.lane.b32.xlu0 %v2611, 112
    %v3049 = vpop.permute.xlu0 %3048
    %3050 = vrot.lane.b32.xlu0 %v2615, 112
    %v3051 = vpop.permute.xlu0 %3050
    %3052 = vrot.lane.b32.xlu0 %v2619, 112
    %v3053 = vpop.permute.xlu0 %3052
    %3054 = vrot.lane.b32.xlu0 %v2623, 112
    %v3055 = vpop.permute.xlu0 %3054
    %v3056 = vsel %vm1126, %v3041, %v3049
    %v3057 = vsel %vm1126, %v3043, %v3051
    %v3058 = vsel %vm1126, %v3045, %v3053
    %v3059 = vsel %vm1126, %v3047, %v3055
    %v3060 = vsel %vm1126, %v3033, %v3041
    %v3061 = vsel %vm1126, %v3035, %v3043
    %v3062 = vsel %vm1126, %v3037, %v3045
    %v3063 = vsel %vm1126, %v3039, %v3047
    %v3064 = vsel %vm1126, %v3025, %v3033
    %v3065 = vsel %vm1126, %v3027, %v3035
    %v3066 = vsel %vm1126, %v3029, %v3037
    %v3067 = vsel %vm1126, %v3031, %v3039
    %v3068 = vsel %vm1126, %v3049, %v3025
    %v3069 = vsel %vm1126, %v3051, %v3027
    %v3070 = vsel %vm1126, %v3053, %v3029
    %v3071 = vsel %vm1126, %v3055, %v3031
    %v3072 = vmul.f32 %v3064, %v296
    %v3073 = vmul.f32 %v3060, %v300
    %v3074 = vmul.f32 %v3056, %v304
    %v3075 = vmul.f32 %v3068, %v308
    %v3076 = vmul.f32 %v3065, %v296
    %v3077 = vmul.f32 %v3061, %v300
    %v3078 = vmul.f32 %v3057, %v304
    %v3079 = vmul.f32 %v3069, %v308
    %v3080 = vmul.f32 %v3066, %v296
    %v3081 = vmul.f32 %v3062, %v300
    %v3082 = vmul.f32 %v3058, %v304
    %v3083 = vmul.f32 %v3070, %v308
    %v3084 = vmul.f32 %v3067, %v296
    %v3085 = vmul.f32 %v3063, %v300
    %v3086 = vmul.f32 %v3059, %v304
    %v3087 = vmul.f32 %v3071, %v308
    %3088 = vrot.lane.b32.xlu0 %v2608, 111
    %v3089 = vpop.permute.xlu0 %3088
    %3090 = vrot.lane.b32.xlu0 %v2612, 111
    %v3091 = vpop.permute.xlu0 %3090
    %3092 = vrot.lane.b32.xlu0 %v2616, 111
    %v3093 = vpop.permute.xlu0 %3092
    %3094 = vrot.lane.b32.xlu0 %v2620, 111
    %v3095 = vpop.permute.xlu0 %3094
    %3096 = vrot.lane.b32.xlu0 %v2609, 111
    %v3097 = vpop.permute.xlu0 %3096
    %3098 = vrot.lane.b32.xlu0 %v2613, 111
    %v3099 = vpop.permute.xlu0 %3098
    %3100 = vrot.lane.b32.xlu0 %v2617, 111
    %v3101 = vpop.permute.xlu0 %3100
    %3102 = vrot.lane.b32.xlu0 %v2621, 111
    %v3103 = vpop.permute.xlu0 %3102
    %3104 = vrot.lane.b32.xlu0 %v2610, 111
    %v3105 = vpop.permute.xlu0 %3104
    %3106 = vrot.lane.b32.xlu0 %v2614, 111
    %v3107 = vpop.permute.xlu0 %3106
    %3108 = vrot.lane.b32.xlu0 %v2618, 111
    %v3109 = vpop.permute.xlu0 %3108
    %3110 = vrot.lane.b32.xlu0 %v2622, 111
    %v3111 = vpop.permute.xlu0 %3110
    %3112 = vrot.lane.b32.xlu0 %v2611, 111
    %v3113 = vpop.permute.xlu0 %3112
    %3114 = vrot.lane.b32.xlu0 %v2615, 111
    %v3115 = vpop.permute.xlu0 %3114
    %3116 = vrot.lane.b32.xlu0 %v2619, 111
    %v3117 = vpop.permute.xlu0 %3116
    %3118 = vrot.lane.b32.xlu0 %v2623, 111
    %v3119 = vpop.permute.xlu0 %3118
    %v3120 = vsel %vm1191, %v3105, %v3113
    %v3121 = vsel %vm1191, %v3107, %v3115
    %v3122 = vsel %vm1191, %v3109, %v3117
    %v3123 = vsel %vm1191, %v3111, %v3119
    %v3124 = vsel %vm1191, %v3097, %v3105
    %v3125 = vsel %vm1191, %v3099, %v3107
    %v3126 = vsel %vm1191, %v3101, %v3109
    %v3127 = vsel %vm1191, %v3103, %v3111
    %v3128 = vsel %vm1191, %v3089, %v3097
    %v3129 = vsel %vm1191, %v3091, %v3099
    %v3130 = vsel %vm1191, %v3093, %v3101
    %v3131 = vsel %vm1191, %v3095, %v3103
    %v3132 = vsel %vm1191, %v3113, %v3089
    %v3133 = vsel %vm1191, %v3115, %v3091
    %v3134 = vsel %vm1191, %v3117, %v3093
    %v3135 = vsel %vm1191, %v3119, %v3095
    %v3136 = vmul.f32 %v3128, %v312
    %v3137 = vmul.f32 %v3124, %v316
    %v3138 = vmul.f32 %v3120, %v320
    %v3139 = vmul.f32 %v3132, %v324
    %v3140 = vmul.f32 %v3129, %v312
    %v3141 = vmul.f32 %v3125, %v316
    %v3142 = vmul.f32 %v3121, %v320
    %v3143 = vmul.f32 %v3133, %v324
    %v3144 = vmul.f32 %v3130, %v312
    %v3145 = vmul.f32 %v3126, %v316
    %v3146 = vmul.f32 %v3122, %v320
    %v3147 = vmul.f32 %v3134, %v324
    %v3148 = vmul.f32 %v3131, %v312
    %v3149 = vmul.f32 %v3127, %v316
    %v3150 = vmul.f32 %v3123, %v320
    %v3151 = vmul.f32 %v3135, %v324
    %v3152 = vpack.c.bf16 %v2676, %v2672
    %v3153 = vpack.c.bf16 %v2677, %v2673
    %v3154 = vpack.c.bf16 %v2678, %v2674
    %v3155 = vpack.c.bf16 %v2679, %v2675
    %v3156 = vpack.c.bf16 %v2684, %v2680
    %v3157 = vpack.c.bf16 %v2685, %v2681
    %v3158 = vpack.c.bf16 %v2686, %v2682
    %v3159 = vpack.c.bf16 %v2687, %v2683
    %v3160 = vpack.c.bf16 %v2740, %v2736
    %v3161 = vpack.c.bf16 %v2741, %v2737
    %v3162 = vpack.c.bf16 %v2742, %v2738
    %v3163 = vpack.c.bf16 %v2743, %v2739
    %v3164 = vpack.c.bf16 %v2748, %v2744
    %v3165 = vpack.c.bf16 %v2749, %v2745
    %v3166 = vpack.c.bf16 %v2750, %v2746
    %v3167 = vpack.c.bf16 %v2751, %v2747
    %v3168 = vpack.c.bf16 %v2804, %v2800
    %v3169 = vpack.c.bf16 %v2805, %v2801
    %v3170 = vpack.c.bf16 %v2806, %v2802
    %v3171 = vpack.c.bf16 %v2807, %v2803
    %v3172 = vpack.c.bf16 %v2812, %v2808
    %v3173 = vpack.c.bf16 %v2813, %v2809
    %v3174 = vpack.c.bf16 %v2814, %v2810
    %v3175 = vpack.c.bf16 %v2815, %v2811
    %v3176 = vpack.c.bf16 %v2868, %v2864
    %v3177 = vpack.c.bf16 %v2869, %v2865
    %v3178 = vpack.c.bf16 %v2870, %v2866
    %v3179 = vpack.c.bf16 %v2871, %v2867
    %v3180 = vpack.c.bf16 %v2876, %v2872
    %v3181 = vpack.c.bf16 %v2877, %v2873
    %v3182 = vpack.c.bf16 %v2878, %v2874
    %v3183 = vpack.c.bf16 %v2879, %v2875
    %v3184 = vpack.c.bf16 %v2884, %v2880
    %v3185 = vpack.c.bf16 %v2885, %v2881
    %v3186 = vpack.c.bf16 %v2886, %v2882
    %v3187 = vpack.c.bf16 %v2887, %v2883
    %v3188 = vpack.c.bf16 %v2892, %v2888
    %v3189 = vpack.c.bf16 %v2893, %v2889
    %v3190 = vpack.c.bf16 %v2894, %v2890
    %v3191 = vpack.c.bf16 %v2895, %v2891
    %v3192 = vpack.c.bf16 %v2948, %v2944
    %v3193 = vpack.c.bf16 %v2949, %v2945
    %v3194 = vpack.c.bf16 %v2950, %v2946
    %v3195 = vpack.c.bf16 %v2951, %v2947
    %v3196 = vpack.c.bf16 %v2956, %v2952
    %v3197 = vpack.c.bf16 %v2957, %v2953
    %v3198 = vpack.c.bf16 %v2958, %v2954
    %v3199 = vpack.c.bf16 %v2959, %v2955
    %v3200 = vpack.c.bf16 %v3012, %v3008
    %v3201 = vpack.c.bf16 %v3013, %v3009
    %v3202 = vpack.c.bf16 %v3014, %v3010
    %v3203 = vpack.c.bf16 %v3015, %v3011
    %v3204 = vpack.c.bf16 %v3020, %v3016
    %v3205 = vpack.c.bf16 %v3021, %v3017
    %v3206 = vpack.c.bf16 %v3022, %v3018
    %v3207 = vpack.c.bf16 %v3023, %v3019
    %v3208 = vpack.c.bf16 %v3076, %v3072
    %v3209 = vpack.c.bf16 %v3077, %v3073
    %v3210 = vpack.c.bf16 %v3078, %v3074
    %v3211 = vpack.c.bf16 %v3079, %v3075
    %v3212 = vpack.c.bf16 %v3084, %v3080
    %v3213 = vpack.c.bf16 %v3085, %v3081
    %v3214 = vpack.c.bf16 %v3086, %v3082
    %v3215 = vpack.c.bf16 %v3087, %v3083
    %v3216 = vpack.c.bf16 %v3140, %v3136
    %v3217 = vpack.c.bf16 %v3141, %v3137
    %v3218 = vpack.c.bf16 %v3142, %v3138
    %v3219 = vpack.c.bf16 %v3143, %v3139
    %v3220 = vpack.c.bf16 %v3148, %v3144
    %v3221 = vpack.c.bf16 %v3149, %v3145
    %v3222 = vpack.c.bf16 %v3150, %v3146
    %v3223 = vpack.c.bf16 %v3151, %v3147
    %v3224 = vld [vmem:[#allocation11] sm:$0xff]
    %v3225 = vld [vmem:[#allocation11 + $0x8] sm:$0xf]
    %v3226 = vld [vmem:[#allocation11 + $0xc] sm:$0xff]
    %v3227 = vld [vmem:[#allocation11 + $0x14] sm:$0xf]
    %v3228 = vld [vmem:[#allocation11 + $0x18] sm:$0xff]
    %v3229 = vld [vmem:[#allocation11 + $0x20] sm:$0xf]
    %v3230 = vld [vmem:[#allocation11 + $0x24] sm:$0xff]
    %v3231 = vld [vmem:[#allocation11 + $0x2c] sm:$0xf]
    %v3232 = vld [vmem:[%s11] sm:$0xff]
    %v3233 = vld [vmem:[%s11 + $0x8] sm:$0xff]
    %v3234 = vld [vmem:[%s11 + $0x10] sm:$0xff]
    %v3235 = vld [vmem:[%s11 + $0x18] sm:$0xff]
    %3237 = vset.pattern.permute.xlu0 0
    %3238 = vperm.xlu0 %3237, %v3232
    %v3239 = vpop.permute.xlu0 %3238
    %3242 = vset.pattern.permute.xlu0 0
    %3243 = vperm.xlu0 %3242, %v3233
    %v3244 = vpop.permute.xlu0 %3243
    %3247 = vset.pattern.permute.xlu0 0
    %3248 = vperm.xlu0 %3247, %v3234
    %v3249 = vpop.permute.xlu0 %3248
    %3252 = vset.pattern.permute.xlu0 0
    %3253 = vperm.xlu0 %3252, %v3235
    %v3254 = vpop.permute.xlu0 %3253
    %v3264 = vunpack.c.l.b16 %v3224
    %v3265 = vunpack.c.h.b16 %v3224
    %v3266 = vunpack.c.l.b16 %v3225
    %v3267 = vunpack.c.l.b16 %v3226
    %v3268 = vunpack.c.h.b16 %v3226
    %v3269 = vunpack.c.l.b16 %v3227
    %v3270 = vunpack.c.l.b16 %v3228
    %v3271 = vunpack.c.h.b16 %v3228
    %v3272 = vunpack.c.l.b16 %v3229
    %v3273 = vunpack.c.l.b16 %v3230
    %v3274 = vunpack.c.h.b16 %v3230
    %v3275 = vunpack.c.l.b16 %v3231
    %v3276 = vpack.c.b16 %v3267, %v3264
    %v3277 = vpack.c.b16 %v3268, %v3265
    %v3278 = vpack.c.b16 %v3269, %v3266
    %v3279 = vpack.c.b16 %v3273, %v3270
    %v3280 = vpack.c.b16 %v3274, %v3271
    %v3281 = vpack.c.b16 %v3275, %v3272
    %v3287 = vsel %vm347, %v3278, 0
    %v3290 = vsel %vm347, %v3281, 0
    %3292 = vmatprep.subr.bf16.mxu0 %v3153
    %3293 = vmatpush1.bf16.msra.mxu0 %v3152
    %3294 = vmatprep.subr.bf16.mxu0 %v3157
    %3295 = vmatpush1.bf16.msra.mxu0 %v3156
    %3296 = vmatprep.subr.bf16.mxu0 %v3161
    %3297 = vmatpush1.bf16.msra.mxu0 %v3160
    %3298 = vmatprep.subr.bf16.mxu0 %v3165
    %3299 = vmatpush1.bf16.msra.mxu0 %v3164
    %3300 = vmatprep.subr.bf16.mxu0 %v3169
    %3301 = vmatpush1.bf16.msra.mxu0 %v3168
    %3302 = vmatprep.subr.bf16.mxu0 %v3173
    %3303 = vmatpush1.bf16.msra.mxu0 %v3172
    %3304 = vmatprep.subr.bf16.mxu0 %v3177
    %3305 = vmatpush1.bf16.msra.mxu0 %v3176
    %3306 = vmatprep.subr.bf16.mxu0 %v3181
    %3307 = vmatpush1.bf16.msra.mxu0 %v3180
    %3308 = vmatprep.subr.bf16.mxu0 %v3185
    %3309 = vmatpush1.bf16.msra.mxu0 %v3184
    %3310 = vmatprep.subr.bf16.mxu0 %v3189
    %3311 = vmatpush1.bf16.msra.mxu0 %v3188
    %3312 = vmatprep.subr.bf16.mxu0 %v3193
    %3313 = vmatpush1.bf16.msra.mxu0 %v3192
    %3314 = vmatprep.subr.bf16.mxu0 %v3197
    %3315 = vmatpush1.bf16.msra.mxu0 %v3196
    %3316 = vmatprep.subr.bf16.mxu0 %v3201
    %3317 = vmatpush1.bf16.msra.mxu0 %v3200
    %3318 = vmatprep.subr.bf16.mxu0 %v3205
    %3319 = vmatpush1.bf16.msra.mxu0 %v3204
    %3320 = vmatprep.subr.bf16.mxu0 %v3209
    %3321 = vmatpush1.bf16.msra.mxu0 %v3208
    %3322 = vmatprep.subr.bf16.mxu0 %v3213
    %3323 = vmatpush1.bf16.msra.mxu0 %v3212
    %3324 = vmatprep.mubr.bf16.mxu0 %v3277
    %3325 = vmatmul.mubr.bf16.gmra.mrb[0].mxu0 %v3276
    %v3326 = vpop.f32.mrb[0].mxu0
    %v3327 = vadd.f32 %v3239, %v3326
    %v3328 = vpop.f32.mrb[0].mxu0
    %v3329 = vadd.f32 %v3239, %v3328
    %v3330 = vpop.f32.mrb[0].mxu0
    %v3331 = vadd.f32 %v3244, %v3330
    %v3332 = vpop.f32.mrb[0].mxu0
    %v3333 = vadd.f32 %v3244, %v3332
    %3334 = vmatprep.mubr.bf16.mxu0 %v3280
    %3335 = vmatmul.mubr.bf16.gmra.mrb[0].mxu0 %v3279
    %v3336 = vpop.f32.mrb[0].mxu0
    %v3337 = vadd.f32 %v3249, %v3336
    %v3338 = vpop.f32.mrb[0].mxu0
    %v3339 = vadd.f32 %v3249, %v3338
    %v3340 = vpop.f32.mrb[0].mxu0
    %v3341 = vadd.f32 %v3254, %v3340
    %v3342 = vpop.f32.mrb[0].mxu0
    %v3343 = vadd.f32 %v3254, %v3342
    %3344 = vdwg.mxu0
    %3345 = vmatprep.subr.bf16.mxu0 %v3217
    %3346 = vmatpush1.bf16.msra.mxu0 %v3216
    %3347 = vmatprep.subr.bf16.mxu0 %v3221
    %3348 = vmatpush1.bf16.msra.mxu0 %v3220
    %3349 = vmatprep.subr.bf16.mxu0 0
    %3350 = vmatpush1.bf16.msra.mxu0 0
    %3351 = vmatprep.subr.bf16.mxu0 0
    %3352 = vmatpush1.bf16.msra.mxu0 0
    %3353 = vmatprep.subr.bf16.mxu0 0
    %3354 = vmatpush1.bf16.msra.mxu0 0
    %3355 = vmatprep.subr.bf16.mxu0 0
    %3356 = vmatpush1.bf16.msra.mxu0 0
    %3357 = vmatprep.subr.bf16.mxu0 0
    %3358 = vmatpush1.bf16.msra.mxu0 0
    %3359 = vmatprep.subr.bf16.mxu0 0
    %3360 = vmatpush1.bf16.msra.mxu0 0
    %3361 = vmatprep.subr.bf16.mxu0 0
    %3362 = vmatpush1.bf16.msra.mxu0 0
    %3363 = vmatprep.subr.bf16.mxu0 0
    %3364 = vmatpush1.bf16.msra.mxu0 0
    %3365 = vmatprep.subr.bf16.mxu0 0
    %3366 = vmatpush1.bf16.msra.mxu0 0
    %3367 = vmatprep.subr.bf16.mxu0 0
    %3368 = vmatpush1.bf16.msra.mxu0 0
    %3369 = vmatprep.subr.bf16.mxu0 0
    %3370 = vmatpush1.bf16.msra.mxu0 0
    %3371 = vmatprep.subr.bf16.mxu0 0
    %3372 = vmatpush1.bf16.msra.mxu0 0
    %3373 = vmatprep.subr.bf16.mxu0 0
    %3374 = vmatpush1.bf16.msra.mxu0 0
    %3375 = vmatprep.subr.bf16.mxu0 0
    %3376 = vmatpush1.bf16.msra.mxu0 0
    %3377 = vmatprep.mubr.bf16.mxu0 0
    %3378 = vmatmul.mubr.bf16.gmra.mrb[0].mxu0 %v3287
    %v3379 = vpop.f32.mrb[0].mxu0
    %v3380 = vadd.f32 %v3327, %v3379
    %v3381 = vpop.f32.mrb[0].mxu0
    %v3382 = vadd.f32 %v3329, %v3381
    %v3383 = vpop.f32.mrb[0].mxu0
    %v3384 = vadd.f32 %v3331, %v3383
    %v3385 = vpop.f32.mrb[0].mxu0
    %v3386 = vadd.f32 %v3333, %v3385
    %3387 = vmatprep.mubr.bf16.mxu0 0
    %3388 = vmatmul.mubr.bf16.gmra.mrb[0].mxu0 %v3290
    %v3389 = vpop.f32.mrb[0].mxu0
    %v3390 = vadd.f32 %v3337, %v3389
    %v3391 = vpop.f32.mrb[0].mxu0
    %v3392 = vadd.f32 %v3339, %v3391
    %v3393 = vpop.f32.mrb[0].mxu0
    %v3394 = vadd.f32 %v3341, %v3393
    %v3395 = vpop.f32.mrb[0].mxu0
    %v3396 = vadd.f32 %v3343, %v3395
    %3397 = vdwg.mxu0
    %3398 = vmatprep.subr.bf16.mxu0 %v3155
    %3399 = vmatpush1.bf16.msra.mxu0 %v3154
    %3400 = vmatprep.subr.bf16.mxu0 %v3159
    %3401 = vmatpush1.bf16.msra.mxu0 %v3158
    %3402 = vmatprep.subr.bf16.mxu0 %v3163
    %3403 = vmatpush1.bf16.msra.mxu0 %v3162
    %3404 = vmatprep.subr.bf16.mxu0 %v3167
    %3405 = vmatpush1.bf16.msra.mxu0 %v3166
    %3406 = vmatprep.subr.bf16.mxu0 %v3171
    %3407 = vmatpush1.bf16.msra.mxu0 %v3170
    %3408 = vmatprep.subr.bf16.mxu0 %v3175
    %3409 = vmatpush1.bf16.msra.mxu0 %v3174
    %3410 = vmatprep.subr.bf16.mxu0 %v3179
    %3411 = vmatpush1.bf16.msra.mxu0 %v3178
    %3412 = vmatprep.subr.bf16.mxu0 %v3183
    %3413 = vmatpush1.bf16.msra.mxu0 %v3182
    %3414 = vmatprep.subr.bf16.mxu0 %v3187
    %3415 = vmatpush1.bf16.msra.mxu0 %v3186
    %3416 = vmatprep.subr.bf16.mxu0 %v3191
    %3417 = vmatpush1.bf16.msra.mxu0 %v3190
    %3418 = vmatprep.subr.bf16.mxu0 %v3195
    %3419 = vmatpush1.bf16.msra.mxu0 %v3194
    %3420 = vmatprep.subr.bf16.mxu0 %v3199
    %3421 = vmatpush1.bf16.msra.mxu0 %v3198
    %3422 = vmatprep.subr.bf16.mxu0 %v3203
    %3423 = vmatpush1.bf16.msra.mxu0 %v3202
    %3424 = vmatprep.subr.bf16.mxu0 %v3207
    %3425 = vmatpush1.bf16.msra.mxu0 %v3206
    %3426 = vmatprep.subr.bf16.mxu0 %v3211
    %3427 = vmatpush1.bf16.msra.mxu0 %v3210
    %3428 = vmatprep.subr.bf16.mxu0 %v3215
    %3429 = vmatpush1.bf16.msra.mxu0 %v3214
    %3430 = vmatprep.mubr.bf16.mxu0 %v3277
    %3431 = vmatmul.mubr.bf16.gmra.mrb[0].mxu0 %v3276
    %v3432 = vpop.f32.mrb[0].mxu0
    %v3433 = vadd.f32 %v3239, %v3432
    %v3434 = vpop.f32.mrb[0].mxu0
    %v3435 = vadd.f32 %v3239, %v3434
    %v3436 = vpop.f32.mrb[0].mxu0
    %v3437 = vadd.f32 %v3244, %v3436
    %v3438 = vpop.f32.mrb[0].mxu0
    %v3439 = vadd.f32 %v3244, %v3438
    %3440 = vmatprep.mubr.bf16.mxu0 %v3280
    %3441 = vmatmul.mubr.bf16.gmra.mrb[0].mxu0 %v3279
    %v3442 = vpop.f32.mrb[0].mxu0
    %v3443 = vadd.f32 %v3249, %v3442
    %v3444 = vpop.f32.mrb[0].mxu0
    %v3445 = vadd.f32 %v3249, %v3444
    %v3446 = vpop.f32.mrb[0].mxu0
    %v3447 = vadd.f32 %v3254, %v3446
    %v3448 = vpop.f32.mrb[0].mxu0
    %v3449 = vadd.f32 %v3254, %v3448
    %3450 = vdwg.mxu0
    %3451 = vmatprep.subr.bf16.mxu0 %v3219
    %3452 = vmatpush1.bf16.msra.mxu0 %v3218
    %3453 = vmatprep.subr.bf16.mxu0 %v3223
    %3454 = vmatpush1.bf16.msra.mxu0 %v3222
    %3455 = vmatprep.subr.bf16.mxu0 0
    %3456 = vmatpush1.bf16.msra.mxu0 0
    %3457 = vmatprep.subr.bf16.mxu0 0
    %3458 = vmatpush1.bf16.msra.mxu0 0
    %3459 = vmatprep.subr.bf16.mxu0 0
    %3460 = vmatpush1.bf16.msra.mxu0 0
    %3461 = vmatprep.subr.bf16.mxu0 0
    %3462 = vmatpush1.bf16.msra.mxu0 0
    %3463 = vmatprep.subr.bf16.mxu0 0
    %3464 = vmatpush1.bf16.msra.mxu0 0
    %3465 = vmatprep.subr.bf16.mxu0 0
    %3466 = vmatpush1.bf16.msra.mxu0 0
    %3467 = vmatprep.subr.bf16.mxu0 0
    %3468 = vmatpush1.bf16.msra.mxu0 0
    %3469 = vmatprep.subr.bf16.mxu0 0
    %3470 = vmatpush1.bf16.msra.mxu0 0
    %3471 = vmatprep.subr.bf16.mxu0 0
    %3472 = vmatpush1.bf16.msra.mxu0 0
    %3473 = vmatprep.subr.bf16.mxu0 0
    %3474 = vmatpush1.bf16.msra.mxu0 0
    %3475 = vmatprep.subr.bf16.mxu0 0
    %3476 = vmatpush1.bf16.msra.mxu0 0
    %3477 = vmatprep.subr.bf16.mxu0 0
    %3478 = vmatpush1.bf16.msra.mxu0 0
    %3479 = vmatprep.subr.bf16.mxu0 0
    %3480 = vmatpush1.bf16.msra.mxu0 0
    %3481 = vmatprep.subr.bf16.mxu0 0
    %3482 = vmatpush1.bf16.msra.mxu0 0
    %3483 = vmatprep.mubr.bf16.mxu0 0
    %3484 = vmatmul.mubr.bf16.gmra.mrb[0].mxu0 %v3287
    %v3485 = vpop.f32.mrb[0].mxu0
    %v3486 = vadd.f32 %v3433, %v3485
    %v3487 = vpop.f32.mrb[0].mxu0
    %v3488 = vadd.f32 %v3435, %v3487
    %v3489 = vpop.f32.mrb[0].mxu0
    %v3490 = vadd.f32 %v3437, %v3489
    %v3491 = vpop.f32.mrb[0].mxu0
    %v3492 = vadd.f32 %v3439, %v3491
    %3493 = vmatprep.mubr.bf16.mxu0 0
    %3494 = vmatmul.mubr.bf16.gmra.mrb[0].mxu0 %v3290
    %v3495 = vpop.f32.mrb[0].mxu0
    %v3496 = vadd.f32 %v3443, %v3495
    %v3497 = vpop.f32.mrb[0].mxu0
    %v3498 = vadd.f32 %v3445, %v3497
    %v3499 = vpop.f32.mrb[0].mxu0
    %v3500 = vadd.f32 %v3447, %v3499
    %v3501 = vpop.f32.mrb[0].mxu0
    %v3502 = vadd.f32 %v3449, %v3501
    %3503 = vdwg.mxu0
    %3504 = vst [vmem:[#allocation13] sm:$0xff] %v3380
    %3505 = vst [vmem:[#allocation13 + $0x8] sm:$0xff] %v3382
    %3506 = vst [vmem:[#allocation13 + $0x10] sm:$0xff] %v3486
    %3507 = vst [vmem:[#allocation13 + $0x18] sm:$0xff] %v3488
    %3508 = vst [vmem:[#allocation13 + $0x20] sm:$0xff] %v3384
    %3509 = vst [vmem:[#allocation13 + $0x28] sm:$0xff] %v3386
    %3510 = vst [vmem:[#allocation13 + $0x30] sm:$0xff] %v3490
    %3511 = vst [vmem:[#allocation13 + $0x38] sm:$0xff] %v3492
    %3512 = vst [vmem:[#allocation13 + $0x40] sm:$0xff] %v3390
    %3513 = vst [vmem:[#allocation13 + $0x48] sm:$0xff] %v3392
    %3514 = vst [vmem:[#allocation13 + $0x50] sm:$0xff] %v3496
    %3515 = vst [vmem:[#allocation13 + $0x58] sm:$0xff] %v3498
    %3516 = vst [vmem:[#allocation13 + $0x60] sm:$0xff] %v3394
    %3517 = vst [vmem:[#allocation13 + $0x68] sm:$0xff] %v3396
    %3518 = vst [vmem:[#allocation13 + $0x70] sm:$0xff] %v3500
    %3519 = vst [vmem:[#allocation13 + $0x78] sm:$0xff] %v3502
    // Predicated region
    $region74: #{tpu_custom_call.1} parent=1 // pred_check
      _
    $region75: #{tpu_custom_call.1} parent=1 // pred_check_branch
      %3521 = sbr.rel (0) target = $region77
    $region76: #{tpu_custom_call.1} parent=1 // pred_region
      %s3523 = ssub.s32 2048, 2048
      %3524 = vsyncadd [#allocation4], %s3523
      %s3525 = sshll.u32 [#allocation13], 4
      %s3526 = int_to_ptr.vmem [resolvable:$true] %s3525
      %3531 = dma.vmem_to_hbm [thread:$0]  %s3526, 2048, %s12, [#allocation4], 512, 512, 32
    $region77: #{tpu_custom_call.1} parent=1 // pred_fallthru
      _
    // Predicated region
    $region78: #{tpu_custom_call.1} parent=1 // pred_check
      _
    $region79: #{tpu_custom_call.1} parent=1 // pred_check_branch
      %3533 = sbr.rel (0) target = $region81
    $region80: #{tpu_custom_call.1} parent=1 // pred_region
      %3534 = dma.done [#allocation4], 2048
    $region81: #{tpu_custom_call.1} parent=1 // pred_fallthru
      _
    %3535 = vsyncpa [#allocation3], 1
    %3536 = vsyncpa [#allocation6], 1
    %3537 = vsyncpa [#allocation9], 1
    %3538 = vsyncpa [#allocation12], 1
    %3539 = vsyncpa [#allocation4], 1

</llo_original>
